<compile_context>
chip_gen: v7x
topology: tpu7x:2x2x1
jax: 0.10.0
libtpu: 0.0.40
codegen_flags: <defaults>
</compile_context>

<pallas_src>
import math

import jax
import jax.numpy as jnp
from jax.experimental import pallas as pl
from jax.experimental.pallas import tpu as pltpu
from jax.scipy.linalg import block_diag

# ------------------------- static configuration -------------------------
SB = 2          # batch of objects (scenes)
NV = 2          # number of input views
B = 64          # points per scene
H_IMG = 16      # feature-map height
W_IMG = 16      # feature-map width
C_LAT = 32      # encoder latent size  (d_latent)

NUM_FREQS = 4
FREQ_FACTOR = math.pi
D_POS = 3 * (2 * NUM_FREQS + 1)      # 27  (poscode.d_out, include_input=True)
D_DEPTH = 1 * (2 * NUM_FREQS + 1)    # 9   (depthcode.d_out)
D_IN = D_POS + D_DEPTH + 3           # 39  (== self.d_in)
D_LATENT = C_LAT                     # 32

D_HIDDEN = 64
N_BLOCKS = 3
COMBINE_LAYER = 2                    # mean over NV views before this block
D_OUT = 4
D_OUT_PAD = 128                      # lane-dense padded output width

G = SB * NV                          # (scene, view) groups
HW = H_IMG * W_IMG


def _use_view_packing() -> bool:
    """Lane-pack the two views on v6e/v7x (256-wide MXU, bf16 VALU); not on v5e."""
    try:
        kind = jax.devices()[0].device_kind.lower()
    except Exception:
        return True
    return "v5" not in kind


# ------------------------------ Pallas kernel ------------------------------
def make_pixelnerf_kernel(pack_views: bool):
    """pack_views=True : activations are (SB*B, NV*64) with block-diag weights.
       pack_views=False: activations are (SB*NV*B, 64) (v5e-friendly)."""

    def kernel(
        onehot_ref,                # packed: (SB, B, NV*HW) ; else (G, B, HW)   bf16
        latmap_ref,                # packed: (SB, NV*HW, NV*32) ; else (G, HW, 32) bf16
        feat_ref,                  # packed: (SB*B, NV*39) ; else (G*B, 39)     bf16
        w_feat_ref,                # (FW, HID) bf16   lin_in        (block-diag if packed)
        w_lat0_ref,                # (LW, HID) bf16   lin_z[0]      (block-diag if packed)
        b_h_ref,                   # (1, HID)  f32    b_in + b_z[0] (fused, tiled if packed)
        w_z1_ref, b_z1_ref,        # (LW, HID) bf16, (1, HID) f32
        w0_ref, b0_ref,            # (2, HID, HID) bf16, (2, 1, HID) f32  blocks 0,1 fc0
        w1_ref, b1_ref,            # (2, HID, HID) bf16, (2, 1, HID) f32  blocks 0,1 fc1
        w2a_ref, b2a_ref,          # (64, 64) bf16, (1, 64) f32           block 2 fc0
        w2b_ref, b2b_ref,          # (64, 64) bf16, (1, 64) f32           block 2 fc1
        w_out_ref, b_out_ref,      # (64, 128) bf16 (zero padded), (1, 128) f32
        mask_ref,                  # (1, 128) int32   1 on rgb lanes, 0 elsewhere
        o_ref,                     # (SB*B, 128) f32
    ):
        f32 = jnp.float32
        bf16 = jnp.bfloat16

        # ---- bilinear latent gather as a (batched) one-hot matmul on the MXU ----
        lat = jnp.einsum("gbk,gkc->gbc", onehot_ref[...], latmap_ref[...],
                         preferred_element_type=f32)
        g, b, lw = lat.shape
        lat_b = lat.reshape(g * b, lw).astype(bf16)

        # ---- fused lin_in + lin_z[0] (single bias, aligned operands) ----
        h = (jnp.dot(feat_ref[...], w_feat_ref[...], preferred_element_type=f32)
             + jnp.dot(lat_b, w_lat0_ref[...], preferred_element_type=f32)
             + b_h_ref[...])

        # ---- ResnetFC trunk: x + fc_1(relu(fc_0(relu(x)))) ----
        def res_block(x, w_a, b_a, w_b, b_b):
            net = jnp.maximum(x, 0.0)
            net = jnp.dot(net.astype(bf16), w_a, preferred_element_type=f32) + b_a
            net = jnp.maximum(net, 0.0)
            net = jnp.dot(net.astype(bf16), w_b, preferred_element_type=f32) + b_b
            return x + net

        h = res_block(h, w0_ref[0], b0_ref[0], w1_ref[0], b1_ref[0])
        # latent injection before block 1 (blk < combine_layer)
        h = h + jnp.dot(lat_b, w_z1_ref[...], preferred_element_type=f32) + b_z1_ref[...]
        h = res_block(h, w0_ref[1], b0_ref[1], w1_ref[1], b1_ref[1])

        # ---- combine over views (mean) before block 2 ----
        if pack_views:
            # lanes [0:64] = view0, [64:128] = view1 -> mean on the XLU roll slot
            h = 0.5 * (h + pltpu.roll(h, shift=D_HIDDEN, axis=1))
            h = h[:, :D_HIDDEN]                                   # (SB*B, 64)
        else:
            h = h.reshape(SB, NV * B, D_HIDDEN)
            h = sum(h[:, i * B:(i + 1) * B, :] for i in range(NV)) * (1.0 / NV)
            h = h.reshape(SB * B, D_HIDDEN)

        h = res_block(h, w2a_ref[...], b2a_ref[...], w2b_ref[...], b2b_ref[...])

        out = jnp.dot(jnp.maximum(h, 0.0).astype(bf16), w_out_ref[...],
                      preferred_element_type=f32) + b_out_ref[...]  # (SB*B, 128)

        # sigmoid on rgb lanes, relu on sigma (and zero padding) lanes
        m = jnp.broadcast_to(mask_ref[...], out.shape) > 0
        o_ref[...] = jnp.where(m, jax.nn.sigmoid(out), jnp.maximum(out, 0.0))

    return kernel


KPARAM_ORDER = ("w_feat", "w_lat0", "b_h", "w_z1", "b_z1",
                "w0", "b0", "w1", "b1",
                "w2a", "b2a", "w2b", "b2b",
                "w_out", "b_out", "head_mask")


def pixelnerf_mlp_call(onehot, latmap, feat, kparams, pack_views):
    """Single grid-less invocation; all operands live in VMEM for its duration."""
    args = [onehot, latmap, feat] + [kparams[k] for k in KPARAM_ORDER]
    vmem = pltpu.MemorySpace.VMEM

    hid = kparams["b_h"].shape[1]
    n_rows = feat.shape[0]
    gather = onehot.shape[0] * onehot.shape[1] * onehot.shape[2] * latmap.shape[2]
    first = n_rows * (feat.shape[1] + 2 * latmap.shape[2]) * hid
    trunk01 = 4 * n_rows * hid * hid
    tail = 2 * SB * B * D_HIDDEN * D_HIDDEN + SB * B * D_HIDDEN * D_OUT_PAD
    cost = pl.CostEstimate(
        flops=2 * (gather + first + trunk01 + tail),
        transcendentals=SB * B * D_OUT_PAD,
        bytes_accessed=int(sum(a.size * a.dtype.itemsize for a in args)
                           + SB * B * D_OUT_PAD * 4),
    )

    return pl.pallas_call(
        make_pixelnerf_kernel(pack_views),
        out_shape=jax.ShapeDtypeStruct((SB * B, D_OUT_PAD), jnp.float32),
        in_specs=[pl.BlockSpec(memory_space=vmem)] * len(args),
        out_specs=pl.BlockSpec(memory_space=vmem),
        cost_estimate=cost,
    )(*args)


# ------------------------------ JAX glue ------------------------------
def positional_encoding(x, num_freqs=NUM_FREQS, freq_factor=FREQ_FACTOR):
    """NeRF-style code with include_input=True: d_out = d_in * (2*num_freqs + 1)."""
    freqs = freq_factor * (2.0 ** jnp.arange(num_freqs, dtype=jnp.float32))
    xb = x[..., None, :] * freqs[:, None]                       # (..., F, d)
    enc = jnp.concatenate([jnp.sin(xb), jnp.cos(xb)], axis=-2)  # (..., 2F, d)
    enc = enc.reshape(x.shape[:-1] + (2 * num_freqs * x.shape[-1],))
    return jnp.concatenate([x, enc], axis=-1)


def _features_and_corners(xyz, viewdirs, state):
    """Pose transform, projection, posenc, bilinear corner math (plain XLA)."""
    poses = state["poses"]              # (SB, NV, 4, 4)
    focal = state["focal"]              # (SB, NV, 2)
    c = state["c"]                      # (SB, NV, 2)
    image_shape = state["image_shape"]  # (2,) = (W, H)
    dep_flat = state["dep_flat"]        # (G, HW) f32

    R = poses[:, :, :3, :3]
    t = poses[:, :, :3, 3]

    xyz_e = jnp.broadcast_to(xyz[:, None], (SB, NV, B, 3))
    xyz_cam = jnp.einsum("svij,svbj->svbi", R, xyz_e) + t[:, :, None, :]
    vd_e = jnp.broadcast_to(viewdirs[:, None], (SB, NV, B, 3))
    vd_cam = jnp.einsum("svij,svbj->svbi", R, vd_e)
    z_feature = jnp.concatenate([positional_encoding(xyz_cam), vd_cam], axis=-1)  # (SB,NV,B,30)

    # pinhole projection -> pixel coords (align_corners=True convention)
    uv = xyz_cam[..., :2] / xyz_cam[..., 2:]
    uv = uv * focal[:, :, None, :] + c[:, :, None, :]
    uv = uv / image_shape * 2.0 - 1.0
    u = (uv[..., 0] + 1.0) * 0.5 * (W_IMG - 1)
    v = (uv[..., 1] + 1.0) * 0.5 * (H_IMG - 1)

    # bilinear corner indices / weights (border padding == clip)
    x0 = jnp.floor(u)
    y0 = jnp.floor(v)
    wx, wy = u - x0, v - y0
    x0i = jnp.clip(x0, 0, W_IMG - 1).astype(jnp.int32)
    x1i = jnp.clip(x0 + 1.0, 0, W_IMG - 1).astype(jnp.int32)
    y0i = jnp.clip(y0, 0, H_IMG - 1).astype(jnp.int32)
    y1i = jnp.clip(y0 + 1.0, 0, H_IMG - 1).astype(jnp.int32)
    corner_idx = jnp.stack([y0i * W_IMG + x0i, y0i * W_IMG + x1i,
                            y1i * W_IMG + x0i, y1i * W_IMG + x1i], axis=-1)  # (SB,NV,B,4)
    corner_wgt = jnp.stack([(1.0 - wx) * (1.0 - wy), wx * (1.0 - wy),
                            (1.0 - wx) * wy, wx * wy], axis=-1)              # (SB,NV,B,4)

    # depth gather stays in XLA (single channel); its positional code feeds `feat`
    dep_corners = jnp.take_along_axis(dep_flat, corner_idx.reshape(G, B * 4), axis=1)
    ref_depth = jnp.sum(dep_corners.reshape(SB, NV, B, 4) * corner_wgt, axis=-1)
    depth_feature = positional_encoding(ref_depth[..., None] - xyz_cam[..., 2:])  # (SB,NV,B,9)

    feat = jnp.concatenate([z_feature, depth_feature], axis=-1)                   # (SB,NV,B,39)
    return feat, corner_idx, corner_wgt


def pixelnerf_forward(xyz, viewdirs, state, kparams, pack_views):
    """xyz, viewdirs: (SB, B, 3) -> (SB, B, 4) = (sigmoid(rgb), relu(sigma))."""
    feat, corner_idx, corner_wgt = _features_and_corners(xyz, viewdirs, state)

    # Bilinear one-hot weights built XLA-side (fuses with the corner math), so
    # the kernel has no compare/select chain and starts with the MXU einsum.
    onehot = jnp.sum(jax.nn.one_hot(corner_idx, HW, dtype=jnp.float32)
                     * corner_wgt[..., None], axis=-2)            # (SB, NV, B, HW)

    if pack_views:
        onehot_k = onehot.transpose(0, 2, 1, 3).reshape(SB, B, NV * HW).astype(jnp.bfloat16)
        feat_k = feat.transpose(0, 2, 1, 3).reshape(SB * B, NV * D_IN).astype(jnp.bfloat16)
    else:
        onehot_k = onehot.reshape(G, B, HW).astype(jnp.bfloat16)
        feat_k = feat.reshape(G * B, D_IN).astype(jnp.bfloat16)

    out = pixelnerf_mlp_call(onehot_k, state["latmap_k"], feat_k, kparams, pack_views)
    return out[:, :D_OUT].reshape(SB, B, D_OUT)


def pixelnerf_reference(xyz, viewdirs, state, params):
    """Pure-JAX reference (same bf16 matmul precision, exact bilinear gather)."""
    feat, corner_idx, corner_wgt = _features_and_corners(xyz, viewdirs, state)
    bf16, f32 = jnp.bfloat16, jnp.float32

    lat_flat = state["lat_flat_ref"]                              # (G, HW, C) f32
    idx_g = corner_idx.reshape(G, B, 4)
    w_g = corner_wgt.reshape(G, B, 4).astype(bf16).astype(f32)    # match kernel's bf16 weights
    lat_c = lat_flat[jnp.arange(G)[:, None, None], idx_g, :]      # (G, B, 4, C)
    lat = jnp.sum(lat_c * w_g[..., None], axis=2).reshape(SB, NV, B, C_LAT)

    def mm(x, w):
        return jnp.dot(x.astype(bf16), w.astype(bf16), preferred_element_type=f32)

    def res_block(x, blk):
        net = jnp.maximum(x, 0.0)
        net = mm(net, params["w0"][blk]) + params["b0"][blk]
        net = jnp.maximum(net, 0.0)
        net = mm(net, params["w1"][blk]) + params["b1"][blk]
        return x + net

    h = mm(feat, params["w_in"]) + params["b_in"] + mm(lat, params["w_z"][0]) + params["b_z"][0]
    h = res_block(h, 0)
    h = h + mm(lat, params["w_z"][1]) + params["b_z"][1]
    h = res_block(h, 1)
    h = jnp.mean(h, axis=1)                                       # combine over NV views
    h = res_block(h, 2)
    out = mm(jnp.maximum(h, 0.0), params["w_out"]) + params["b_out"]
    return jnp.concatenate([jax.nn.sigmoid(out[..., :3]),
                            jnp.maximum(out[..., 3:], 0.0)], axis=-1)


# ------------------------------ parameters ------------------------------
def init_mlp_params(key):
    ks = jax.random.split(key, 5)

    def lin(k, d_in, d_out, *lead):
        kw, kb = jax.random.split(k)
        w = jax.random.normal(kw, lead + (d_in, d_out), jnp.float32) / math.sqrt(d_in)
        b = 0.01 * jax.random.normal(kb, lead + (d_out,), jnp.float32)
        return w, b

    w_in, b_in = lin(ks[0], D_IN, D_HIDDEN)
    w_z, b_z = lin(ks[1], D_LATENT, D_HIDDEN, COMBINE_LAYER)
    w0, b0 = lin(ks[2], D_HIDDEN, D_HIDDEN, N_BLOCKS)
    w1, b1 = lin(ks[3], D_HIDDEN, D_HIDDEN, N_BLOCKS)
    w_out, b_out = lin(ks[4], D_HIDDEN, D_OUT)
    return dict(w_in=w_in, b_in=b_in, w_z=w_z, b_z=b_z,
                w0=w0, b0=b0, w1=w1, b1=b1, w_out=w_out, b_out=b_out)


def prepare_kernel_params(p, pack_views):
    """Fuse / cast / pad / (block-diag) the module params into kernel form (done once)."""
    bf16, f32 = jnp.bfloat16, jnp.float32

    def bd(w):                                   # per-view block-diagonal weight
        return block_diag(w, w) if pack_views else w

    def bd_bias(b):                              # tiled bias matching block-diag cols
        b = b.reshape(1, -1)
        return jnp.tile(b, (1, NV)) if pack_views else b

    w0 = jnp.stack([bd(p["w0"][i]) for i in range(2)]).astype(bf16)
    b0 = jnp.stack([bd_bias(p["b0"][i]) for i in range(2)])
    w1 = jnp.stack([bd(p["w1"][i]) for i in range(2)]).astype(bf16)
    b1 = jnp.stack([bd_bias(p["b1"][i]) for i in range(2)])

    w_out = jnp.zeros((D_HIDDEN, D_OUT_PAD), f32).at[:, :D_OUT].set(p["w_out"]).astype(bf16)
    b_out = jnp.zeros((1, D_OUT_PAD), f32).at[0, :D_OUT].set(p["b_out"])
    head_mask = (jnp.arange(D_OUT_PAD) < 3).astype(jnp.int32).reshape(1, D_OUT_PAD)

    return dict(
        w_feat=bd(p["w_in"]).astype(bf16),
        w_lat0=bd(p["w_z"][0]).astype(bf16),
        b_h=bd_bias(p["b_in"] + p["b_z"][0]),                    # fused lin_in/lin_z[0] bias
        w_z1=bd(p["w_z"][1]).astype(bf16),
        b_z1=bd_bias(p["b_z"][1]),
        w0=w0, b0=b0, w1=w1, b1=b1,
        w2a=p["w0"][2].astype(bf16), b2a=p["b0"][2].reshape(1, D_HIDDEN),
        w2b=p["w1"][2].astype(bf16), b2b=p["b1"][2].reshape(1, D_HIDDEN),
        w_out=w_out, b_out=b_out, head_mask=head_mask,
    )


def prepare_latmap(latent_map, pack_views):
    """latent_map (SB,NV,C,H,W) f32 -> kernel-ready flattened latent map (bf16)."""
    lat_flat = latent_map.reshape(SB, NV, C_LAT, HW).transpose(0, 1, 3, 2)   # (SB,NV,HW,C)
    if pack_views:
        packed = jnp.zeros((SB, NV * HW, NV * C_LAT), jnp.float32)
        for v in range(NV):
            packed = packed.at[:, v * HW:(v + 1) * HW,
                               v * C_LAT:(v + 1) * C_LAT].set(lat_flat[:, v])
        return packed.astype(jnp.bfloat16)
    return lat_flat.reshape(G, HW, C_LAT).astype(jnp.bfloat16)


# ------------------------------ setup / main ------------------------------
if __name__ == "__main__":
    pack_views = _use_view_packing()

    key = jax.random.PRNGKey(0)
    k = jax.random.split(key, 8)

    # Synthetic "post-encode()" state (the conv encoder itself is not part of forward()).
    latent_map = jax.random.normal(k[0], (SB, NV, C_LAT, H_IMG, W_IMG), jnp.float32)
    depth_map = jax.random.uniform(k[1], (SB, NV, 1, H_IMG, W_IMG), jnp.float32, 1.0, 3.0)

    dep_flat = depth_map.reshape(G, HW)
    lat_flat_ref = (latent_map.reshape(SB, NV, C_LAT, HW).transpose(0, 1, 3, 2)
                    .astype(jnp.bfloat16).astype(jnp.float32).reshape(G, HW, C_LAT))

    # Poses: identity rotation + small translation (keeps projection well conditioned).
    R = jnp.tile(jnp.eye(3, dtype=jnp.float32)[None, None], (SB, NV, 1, 1))
    t = 0.1 * jax.random.normal(k[2], (SB, NV, 3), jnp.float32)
    bottom = jnp.tile(jnp.array([[[[0.0, 0.0, 0.0, 1.0]]]], jnp.float32), (SB, NV, 1, 1))
    poses = jnp.concatenate([jnp.concatenate([R, t[..., None]], axis=-1), bottom], axis=-2)

    state = dict(
        poses=poses,
        focal=jnp.full((SB, NV, 2), 8.0, jnp.float32),
        c=jnp.full((SB, NV, 2), 8.0, jnp.float32),
        image_shape=jnp.array([W_IMG, H_IMG], jnp.float32),
        dep_flat=dep_flat,
        lat_flat_ref=lat_flat_ref,
        latmap_k=prepare_latmap(latent_map, pack_views),
    )

    xy = jax.random.uniform(k[3], (SB, B, 2), jnp.float32, -0.5, 0.5)
    zc = jax.random.uniform(k[4], (SB, B, 1), jnp.float32, 1.5, 3.0)
    xyz = jnp.concatenate([xy, zc], axis=-1)
    viewdirs = jax.random.normal(k[5], (SB, B, 3), jnp.float32)
    viewdirs = viewdirs / jnp.linalg.norm(viewdirs, axis=-1, keepdims=True)

    params = init_mlp_params(k[6])
    kparams = prepare_kernel_params(params, pack_views)

    fwd = jax.jit(lambda p, d: pixelnerf_forward(p, d, state, kparams, pack_views))
    out = jax.block_until_ready(fwd(xyz, viewdirs))

    ref = jax.block_until_ready(
        jax.jit(lambda p, d: pixelnerf_reference(p, d, state, params))(xyz, viewdirs))

    assert out.shape == (SB, B, 4), out.shape
    assert bool(jnp.all(jnp.isfinite(out)))
    # rgb in [0,1] after sigmoid, sigma >= 0 after relu (saturation-tolerant)
    assert bool(jnp.all((out[..., :3] >= 0.0) & (out[..., :3] <= 1.0)))
    assert bool(jnp.all(out[..., 3:] >= 0.0))
    max_err = float(jnp.max(jnp.abs(out - ref)))
    assert max_err < 3e-2, f"kernel vs reference mismatch: {max_err}"
    print("KERNEL_OK")
</pallas_src>

<mosaic_0001>
module attributes {stable_mosaic.version = 11 : i64} {
  func.func @kernel(%arg0: memref<2x64x512xbf16, #tpu.memory_space<vmem>>, %arg1: memref<2x512x64xbf16, #tpu.memory_space<vmem>>, %arg2: memref<128x78xbf16, #tpu.memory_space<vmem>>, %arg3: memref<78x128xbf16, #tpu.memory_space<vmem>>, %arg4: memref<64x128xbf16, #tpu.memory_space<vmem>>, %arg5: memref<1x128xf32, #tpu.memory_space<vmem>>, %arg6: memref<64x128xbf16, #tpu.memory_space<vmem>>, %arg7: memref<1x128xf32, #tpu.memory_space<vmem>>, %arg8: memref<2x128x128xbf16, #tpu.memory_space<vmem>>, %arg9: memref<2x1x128xf32, #tpu.memory_space<vmem>>, %arg10: memref<2x128x128xbf16, #tpu.memory_space<vmem>>, %arg11: memref<2x1x128xf32, #tpu.memory_space<vmem>>, %arg12: memref<64x64xbf16, #tpu.memory_space<vmem>>, %arg13: memref<1x64xf32, #tpu.memory_space<vmem>>, %arg14: memref<64x64xbf16, #tpu.memory_space<vmem>>, %arg15: memref<1x64xf32, #tpu.memory_space<vmem>>, %arg16: memref<64x128xbf16, #tpu.memory_space<vmem>>, %arg17: memref<1x128xf32, #tpu.memory_space<vmem>>, %arg18: memref<1x128xi32, #tpu.memory_space<vmem>>, %arg19: memref<128x128xf32, #tpu.memory_space<vmem>>) attributes {dimension_semantics = [], scalar_prefetch = 0 : i64, scratch_operands = 0 : i64, tpu.core_type = #tpu.core_type<tc>} {
    %c0 = arith.constant 0 : index
    %c0_0 = arith.constant 0 : index
    %c0_1 = arith.constant 0 : index
    %0 = vector.load %arg0[%c0, %c0_0, %c0_1] : memref<2x64x512xbf16, #tpu.memory_space<vmem>>, vector<2x64x512xbf16>
    %c0_2 = arith.constant 0 : index
    %c0_3 = arith.constant 0 : index
    %c0_4 = arith.constant 0 : index
    %1 = vector.load %arg1[%c0_2, %c0_3, %c0_4] : memref<2x512x64xbf16, #tpu.memory_space<vmem>>, vector<2x512x64xbf16>
    "tpu.trace_start"() <{level = 10 : i32, message = "gbk,gkc->gbc"}> : () -> ()
    %cst = arith.constant dense<0.000000e+00> : vector<2x64x64xf32>
    %2 = tpu.matmul %0, %1, %cst {dimension_numbers = #tpu.dot_dimension_numbers<[2], [1], [1], [2], [0, 0, 0, 1, 1, 2], [0], [0]>} : vector<2x64x512xbf16>, vector<2x512x64xbf16>, vector<2x64x64xf32> -> vector<2x64x64xf32>
    "tpu.trace_stop"() : () -> ()
    %3 = vector.shape_cast %2 : vector<2x64x64xf32> to vector<128x64xf32>
    %4 = arith.truncf %3 : vector<128x64xf32> to vector<128x64xbf16>
    %c0_5 = arith.constant 0 : index
    %c0_6 = arith.constant 0 : index
    %5 = vector.load %arg2[%c0_5, %c0_6] : memref<128x78xbf16, #tpu.memory_space<vmem>>, vector<128x78xbf16>
    %c0_7 = arith.constant 0 : index
    %c0_8 = arith.constant 0 : index
    %6 = vector.load %arg3[%c0_7, %c0_8] : memref<78x128xbf16, #tpu.memory_space<vmem>>, vector<78x128xbf16>
    %cst_9 = arith.constant dense<0.000000e+00> : vector<128x128xf32>
    %7 = tpu.matmul %5, %6, %cst_9 {dimension_numbers = #tpu.dot_dimension_numbers<[1], [0], [0], [1], [0, 0, 1, 1], [], []>} : vector<128x78xbf16>, vector<78x128xbf16>, vector<128x128xf32> -> vector<128x128xf32>
    %c0_10 = arith.constant 0 : index
    %c0_11 = arith.constant 0 : index
    %8 = vector.load %arg4[%c0_10, %c0_11] : memref<64x128xbf16, #tpu.memory_space<vmem>>, vector<64x128xbf16>
    %cst_12 = arith.constant dense<0.000000e+00> : vector<128x128xf32>
    %9 = tpu.matmul %4, %8, %cst_12 {dimension_numbers = #tpu.dot_dimension_numbers<[1], [0], [0], [1], [0, 0, 1, 1], [], []>} : vector<128x64xbf16>, vector<64x128xbf16>, vector<128x128xf32> -> vector<128x128xf32>
    %10 = arith.addf %7, %9 : vector<128x128xf32>
    %c0_13 = arith.constant 0 : index
    %c0_14 = arith.constant 0 : index
    %11 = vector.load %arg5[%c0_13, %c0_14] : memref<1x128xf32, #tpu.memory_space<vmem>>, vector<1x128xf32>
    %12 = vector.broadcast %11 : vector<1x128xf32> to vector<128x128xf32>
    %13 = arith.addf %10, %12 : vector<128x128xf32>
    %c0_15 = arith.constant 0 : index
    %c0_16 = arith.constant 0 : index
    %c0_17 = arith.constant 0 : index
    %14 = vector.load %arg8[%c0_15, %c0_16, %c0_17] : memref<2x128x128xbf16, #tpu.memory_space<vmem>>, vector<1x128x128xbf16>
    %15 = vector.shape_cast %14 : vector<1x128x128xbf16> to vector<128x128xbf16>
    %c0_18 = arith.constant 0 : index
    %c0_19 = arith.constant 0 : index
    %c0_20 = arith.constant 0 : index
    %16 = vector.load %arg9[%c0_18, %c0_19, %c0_20] : memref<2x1x128xf32, #tpu.memory_space<vmem>>, vector<1x1x128xf32>
    %17 = vector.shape_cast %16 : vector<1x1x128xf32> to vector<1x128xf32>
    %c0_21 = arith.constant 0 : index
    %c0_22 = arith.constant 0 : index
    %c0_23 = arith.constant 0 : index
    %18 = vector.load %arg10[%c0_21, %c0_22, %c0_23] : memref<2x128x128xbf16, #tpu.memory_space<vmem>>, vector<1x128x128xbf16>
    %19 = vector.shape_cast %18 : vector<1x128x128xbf16> to vector<128x128xbf16>
    %c0_24 = arith.constant 0 : index
    %c0_25 = arith.constant 0 : index
    %c0_26 = arith.constant 0 : index
    %20 = vector.load %arg11[%c0_24, %c0_25, %c0_26] : memref<2x1x128xf32, #tpu.memory_space<vmem>>, vector<1x1x128xf32>
    %21 = vector.shape_cast %20 : vector<1x1x128xf32> to vector<1x128xf32>
    %cst_27 = arith.constant 0.000000e+00 : f32
    %22 = vector.broadcast %cst_27 : f32 to vector<128x128xf32>
    %23 = arith.maximumf %13, %22 : vector<128x128xf32>
    %24 = arith.truncf %23 : vector<128x128xf32> to vector<128x128xbf16>
    %cst_28 = arith.constant dense<0.000000e+00> : vector<128x128xf32>
    %25 = tpu.matmul %24, %15, %cst_28 {dimension_numbers = #tpu.dot_dimension_numbers<[1], [0], [0], [1], [0, 0, 1, 1], [], []>} : vector<128x128xbf16>, vector<128x128xbf16>, vector<128x128xf32> -> vector<128x128xf32>
    %26 = vector.broadcast %17 : vector<1x128xf32> to vector<128x128xf32>
    %27 = arith.addf %25, %26 : vector<128x128xf32>
    %cst_29 = arith.constant 0.000000e+00 : f32
    %28 = vector.broadcast %cst_29 : f32 to vector<128x128xf32>
    %29 = arith.maximumf %27, %28 : vector<128x128xf32>
    %30 = arith.truncf %29 : vector<128x128xf32> to vector<128x128xbf16>
    %cst_30 = arith.constant dense<0.000000e+00> : vector<128x128xf32>
    %31 = tpu.matmul %30, %19, %cst_30 {dimension_numbers = #tpu.dot_dimension_numbers<[1], [0], [0], [1], [0, 0, 1, 1], [], []>} : vector<128x128xbf16>, vector<128x128xbf16>, vector<128x128xf32> -> vector<128x128xf32>
    %32 = vector.broadcast %21 : vector<1x128xf32> to vector<128x128xf32>
    %33 = arith.addf %31, %32 : vector<128x128xf32>
    %34 = arith.addf %13, %33 : vector<128x128xf32>
    %c0_31 = arith.constant 0 : index
    %c0_32 = arith.constant 0 : index
    %35 = vector.load %arg6[%c0_31, %c0_32] : memref<64x128xbf16, #tpu.memory_space<vmem>>, vector<64x128xbf16>
    %cst_33 = arith.constant dense<0.000000e+00> : vector<128x128xf32>
    %36 = tpu.matmul %4, %35, %cst_33 {dimension_numbers = #tpu.dot_dimension_numbers<[1], [0], [0], [1], [0, 0, 1, 1], [], []>} : vector<128x64xbf16>, vector<64x128xbf16>, vector<128x128xf32> -> vector<128x128xf32>
    %37 = arith.addf %34, %36 : vector<128x128xf32>
    %c0_34 = arith.constant 0 : index
    %c0_35 = arith.constant 0 : index
    %38 = vector.load %arg7[%c0_34, %c0_35] : memref<1x128xf32, #tpu.memory_space<vmem>>, vector<1x128xf32>
    %39 = vector.broadcast %38 : vector<1x128xf32> to vector<128x128xf32>
    %40 = arith.addf %37, %39 : vector<128x128xf32>
    %c1 = arith.constant 1 : index
    %c0_36 = arith.constant 0 : index
    %c0_37 = arith.constant 0 : index
    %41 = vector.load %arg8[%c1, %c0_36, %c0_37] : memref<2x128x128xbf16, #tpu.memory_space<vmem>>, vector<1x128x128xbf16>
    %42 = vector.shape_cast %41 : vector<1x128x128xbf16> to vector<128x128xbf16>
    %c1_38 = arith.constant 1 : index
    %c0_39 = arith.constant 0 : index
    %c0_40 = arith.constant 0 : index
    %43 = vector.load %arg9[%c1_38, %c0_39, %c0_40] : memref<2x1x128xf32, #tpu.memory_space<vmem>>, vector<1x1x128xf32>
    %44 = vector.shape_cast %43 : vector<1x1x128xf32> to vector<1x128xf32>
    %c1_41 = arith.constant 1 : index
    %c0_42 = arith.constant 0 : index
    %c0_43 = arith.constant 0 : index
    %45 = vector.load %arg10[%c1_41, %c0_42, %c0_43] : memref<2x128x128xbf16, #tpu.memory_space<vmem>>, vector<1x128x128xbf16>
    %46 = vector.shape_cast %45 : vector<1x128x128xbf16> to vector<128x128xbf16>
    %c1_44 = arith.constant 1 : index
    %c0_45 = arith.constant 0 : index
    %c0_46 = arith.constant 0 : index
    %47 = vector.load %arg11[%c1_44, %c0_45, %c0_46] : memref<2x1x128xf32, #tpu.memory_space<vmem>>, vector<1x1x128xf32>
    %48 = vector.shape_cast %47 : vector<1x1x128xf32> to vector<1x128xf32>
    %cst_47 = arith.constant 0.000000e+00 : f32
    %49 = vector.broadcast %cst_47 : f32 to vector<128x128xf32>
    %50 = arith.maximumf %40, %49 : vector<128x128xf32>
    %51 = arith.truncf %50 : vector<128x128xf32> to vector<128x128xbf16>
    %cst_48 = arith.constant dense<0.000000e+00> : vector<128x128xf32>
    %52 = tpu.matmul %51, %42, %cst_48 {dimension_numbers = #tpu.dot_dimension_numbers<[1], [0], [0], [1], [0, 0, 1, 1], [], []>} : vector<128x128xbf16>, vector<128x128xbf16>, vector<128x128xf32> -> vector<128x128xf32>
    %53 = vector.broadcast %44 : vector<1x128xf32> to vector<128x128xf32>
    %54 = arith.addf %52, %53 : vector<128x128xf32>
    %cst_49 = arith.constant 0.000000e+00 : f32
    %55 = vector.broadcast %cst_49 : f32 to vector<128x128xf32>
    %56 = arith.maximumf %54, %55 : vector<128x128xf32>
    %57 = arith.truncf %56 : vector<128x128xf32> to vector<128x128xbf16>
    %cst_50 = arith.constant dense<0.000000e+00> : vector<128x128xf32>
    %58 = tpu.matmul %57, %46, %cst_50 {dimension_numbers = #tpu.dot_dimension_numbers<[1], [0], [0], [1], [0, 0, 1, 1], [], []>} : vector<128x128xbf16>, vector<128x128xbf16>, vector<128x128xf32> -> vector<128x128xf32>
    %59 = vector.broadcast %48 : vector<1x128xf32> to vector<128x128xf32>
    %60 = arith.addf %58, %59 : vector<128x128xf32>
    %61 = arith.addf %40, %60 : vector<128x128xf32>
    %c64_i32 = arith.constant 64 : i32
    %62 = tpu.dynamic_rotate %61 by %c64_i32 dim 1 : vector<128x128xf32>, i32 -> vector<128x128xf32>
    %63 = arith.addf %61, %62 : vector<128x128xf32>
    %cst_51 = arith.constant 5.000000e-01 : f32
    %64 = vector.broadcast %cst_51 : f32 to vector<128x128xf32>
    %65 = arith.mulf %64, %63 : vector<128x128xf32>
    %66 = vector.extract_strided_slice %65 {offsets = [0, 0], sizes = [128, 64], strides = [1, 1]} : vector<128x128xf32> to vector<128x64xf32>
    %c0_52 = arith.constant 0 : index
    %c0_53 = arith.constant 0 : index
    %67 = vector.load %arg12[%c0_52, %c0_53] : memref<64x64xbf16, #tpu.memory_space<vmem>>, vector<64x64xbf16>
    %c0_54 = arith.constant 0 : index
    %c0_55 = arith.constant 0 : index
    %68 = vector.load %arg13[%c0_54, %c0_55] : memref<1x64xf32, #tpu.memory_space<vmem>>, vector<1x64xf32>
    %c0_56 = arith.constant 0 : index
    %c0_57 = arith.constant 0 : index
    %69 = vector.load %arg14[%c0_56, %c0_57] : memref<64x64xbf16, #tpu.memory_space<vmem>>, vector<64x64xbf16>
    %c0_58 = arith.constant 0 : index
    %c0_59 = arith.constant 0 : index
    %70 = vector.load %arg15[%c0_58, %c0_59] : memref<1x64xf32, #tpu.memory_space<vmem>>, vector<1x64xf32>
    %cst_60 = arith.constant 0.000000e+00 : f32
    %71 = vector.broadcast %cst_60 : f32 to vector<128x64xf32>
    %72 = arith.maximumf %66, %71 : vector<128x64xf32>
    %73 = arith.truncf %72 : vector<128x64xf32> to vector<128x64xbf16>
    %cst_61 = arith.constant dense<0.000000e+00> : vector<128x64xf32>
    %74 = tpu.matmul %73, %67, %cst_61 {dimension_numbers = #tpu.dot_dimension_numbers<[1], [0], [0], [1], [0, 0, 1, 1], [], []>} : vector<128x64xbf16>, vector<64x64xbf16>, vector<128x64xf32> -> vector<128x64xf32>
    %75 = vector.broadcast %68 : vector<1x64xf32> to vector<128x64xf32>
    %76 = arith.addf %74, %75 : vector<128x64xf32>
    %cst_62 = arith.constant 0.000000e+00 : f32
    %77 = vector.broadcast %cst_62 : f32 to vector<128x64xf32>
    %78 = arith.maximumf %76, %77 : vector<128x64xf32>
    %79 = arith.truncf %78 : vector<128x64xf32> to vector<128x64xbf16>
    %cst_63 = arith.constant dense<0.000000e+00> : vector<128x64xf32>
    %80 = tpu.matmul %79, %69, %cst_63 {dimension_numbers = #tpu.dot_dimension_numbers<[1], [0], [0], [1], [0, 0, 1, 1], [], []>} : vector<128x64xbf16>, vector<64x64xbf16>, vector<128x64xf32> -> vector<128x64xf32>
    %81 = vector.broadcast %70 : vector<1x64xf32> to vector<128x64xf32>
    %82 = arith.addf %80, %81 : vector<128x64xf32>
    %83 = arith.addf %66, %82 : vector<128x64xf32>
    %cst_64 = arith.constant 0.000000e+00 : f32
    %84 = vector.broadcast %cst_64 : f32 to vector<128x64xf32>
    %85 = arith.maximumf %83, %84 : vector<128x64xf32>
    %86 = arith.truncf %85 : vector<128x64xf32> to vector<128x64xbf16>
    %c0_65 = arith.constant 0 : index
    %c0_66 = arith.constant 0 : index
    %87 = vector.load %arg16[%c0_65, %c0_66] : memref<64x128xbf16, #tpu.memory_space<vmem>>, vector<64x128xbf16>
    %cst_67 = arith.constant dense<0.000000e+00> : vector<128x128xf32>
    %88 = tpu.matmul %86, %87, %cst_67 {dimension_numbers = #tpu.dot_dimension_numbers<[1], [0], [0], [1], [0, 0, 1, 1], [], []>} : vector<128x64xbf16>, vector<64x128xbf16>, vector<128x128xf32> -> vector<128x128xf32>
    %c0_68 = arith.constant 0 : index
    %c0_69 = arith.constant 0 : index
    %89 = vector.load %arg17[%c0_68, %c0_69] : memref<1x128xf32, #tpu.memory_space<vmem>>, vector<1x128xf32>
    %90 = vector.broadcast %89 : vector<1x128xf32> to vector<128x128xf32>
    %91 = arith.addf %88, %90 : vector<128x128xf32>
    %c0_70 = arith.constant 0 : index
    %c0_71 = arith.constant 0 : index
    %92 = vector.load %arg18[%c0_70, %c0_71] : memref<1x128xi32, #tpu.memory_space<vmem>>, vector<1x128xi32>
    %93 = vector.shape_cast %92 : vector<1x128xi32> to vector<1x128xi32>
    %94 = vector.broadcast %93 : vector<1x128xi32> to vector<128x128xi32>
    %c0_i32 = arith.constant 0 : i32
    %95 = vector.broadcast %c0_i32 : i32 to vector<128x128xi32>
    %96 = arith.cmpi sgt, %94, %95 : vector<128x128xi32>
    %97 = arith.negf %91 : vector<128x128xf32>
    %98 = math.exp %97 : vector<128x128xf32>
    %cst_72 = arith.constant 1.000000e+00 : f32
    %99 = vector.broadcast %cst_72 : f32 to vector<128x128xf32>
    %100 = arith.addf %99, %98 : vector<128x128xf32>
    %101 = arith.divf %99, %100 : vector<128x128xf32>
    %cst_73 = arith.constant 0.000000e+00 : f32
    %102 = vector.broadcast %cst_73 : f32 to vector<128x128xf32>
    %103 = arith.maximumf %91, %102 : vector<128x128xf32>
    %104 = arith.select %96, %101, %103 : vector<128x128xi1>, vector<128x128xf32>
    %c0_74 = arith.constant 0 : index
    %c0_75 = arith.constant 0 : index
    %105 = vector.load %arg19[%c0_74, %c0_75] : memref<128x128xf32, #tpu.memory_space<vmem>>, vector<128x128xf32>
    tpu.vector_store %arg19[%c0_74, %c0_75], %104 {strides = array<i32>} : memref<128x128xf32, #tpu.memory_space<vmem>>, vector<128x128xf32>,
    return
  }
}

</mosaic_0001>

<llo_original>
// kernel: _lambda_.1
$region0: #{_lambda_.1}
  #allocation0 [shape = 'u32[]', space=smem, size = 0x4, offset = 0x4, fixed_abs, tag = 'smem constant byte address 0x4 - core index']
  #allocation1 [shape = 'u32[144,128]{1,0:T(1,128)}', space=vmem, size = 0x12000, scoped, tag = 'internal scratch']
  %s0 = inlined_call_operand.vmem [shape: bf16[2,64,512], index: 0, kind: input, shape index: {}]
  %s1 = inlined_call_operand.vmem [shape: bf16[2,512,64], index: 1, kind: input, shape index: {}]
  %s2 = inlined_call_operand.vmem [shape: bf16[128,78], index: 2, kind: input, shape index: {}]
  %s3 = inlined_call_operand.vmem [shape: bf16[78,128], index: 3, kind: input, shape index: {}]
  %s4 = inlined_call_operand.vmem [shape: bf16[64,128], index: 4, kind: input, shape index: {}]
  %s5 = inlined_call_operand.vmem [shape: f32[1,128], index: 5, kind: input, shape index: {}]
  %s6 = inlined_call_operand.vmem [shape: bf16[64,128], index: 6, kind: input, shape index: {}]
  %s7 = inlined_call_operand.vmem [shape: f32[1,128], index: 7, kind: input, shape index: {}]
  %s8 = inlined_call_operand.vmem [shape: bf16[2,128,128], index: 8, kind: input, shape index: {}]
  %s9 = inlined_call_operand.vmem [shape: f32[2,1,128], index: 9, kind: input, shape index: {}]
  %s10 = inlined_call_operand.vmem [shape: bf16[2,128,128], index: 10, kind: input, shape index: {}]
  %s11 = inlined_call_operand.vmem [shape: f32[2,1,128], index: 11, kind: input, shape index: {}]
  %s12 = inlined_call_operand.vmem [shape: bf16[64,64], index: 12, kind: input, shape index: {}]
  %s13 = inlined_call_operand.vmem [shape: f32[1,64], index: 13, kind: input, shape index: {}]
  %s14 = inlined_call_operand.vmem [shape: bf16[64,64], index: 14, kind: input, shape index: {}]
  %s15 = inlined_call_operand.vmem [shape: f32[1,64], index: 15, kind: input, shape index: {}]
  %s16 = inlined_call_operand.vmem [shape: bf16[64,128], index: 16, kind: input, shape index: {}]
  %s17 = inlined_call_operand.vmem [shape: f32[1,128], index: 17, kind: input, shape index: {}]
  %s18 = inlined_call_operand.vmem [shape: s32[1,128], index: 18, kind: input, shape index: {}]
  %s19 = inlined_call_operand.vmem [shape: f32[128,128], index: 19, kind: output, shape index: {}]
  %s20 = sld [smem:[#allocation0]]
  $region86: #{_lambda_.1} parent=0
    _
  %s22 = ssub.s32 1, %s20
  %s23 = scalar_select 0, %s22, %s20
  // Predicated region
  $region2: #{_lambda_.1} parent=0 // pred_check
    _
  $region3: #{_lambda_.1} parent=0 // pred_check_branch
    %25 = sbr.rel (0) target = $region5
  $region4: #{_lambda_.1} parent=0 // pred_region
    _
  $region5: #{_lambda_.1} parent=0 // pred_fallthru
    _
  // Predicated region
  $region6: #{_lambda_.1} parent=0 // pred_check
    _
  $region7: #{_lambda_.1} parent=0 // pred_check_branch
    %27 = sbr.rel (0) target = $region9
  $region8: #{_lambda_.1} parent=0 // pred_region
    _
  $region9: #{_lambda_.1} parent=0 // pred_fallthru
    _
  // Predicated region
  $region10: #{_lambda_.1} parent=0 // pred_check
    _
  $region11: #{_lambda_.1} parent=0 // pred_check_branch
    %29 = sbr.rel (0) target = $region13
  $region12: #{_lambda_.1} parent=0 // pred_region
    _
  $region13: #{_lambda_.1} parent=0 // pred_fallthru
    _
  // Predicated region
  $region14: #{_lambda_.1} parent=0 // pred_check
    _
  $region15: #{_lambda_.1} parent=0 // pred_check_branch
    %31 = sbr.rel (0) target = $region17
  $region16: #{_lambda_.1} parent=0 // pred_region
    _
  $region17: #{_lambda_.1} parent=0 // pred_fallthru
    _
  // Predicated region
  $region18: #{_lambda_.1} parent=0 // pred_check
    _
  $region19: #{_lambda_.1} parent=0 // pred_check_branch
    %33 = sbr.rel (0) target = $region21
  $region20: #{_lambda_.1} parent=0 // pred_region
    _
  $region21: #{_lambda_.1} parent=0 // pred_fallthru
    _
  // Predicated region
  $region22: #{_lambda_.1} parent=0 // pred_check
    _
  $region23: #{_lambda_.1} parent=0 // pred_check_branch
    %35 = sbr.rel (0) target = $region25
  $region24: #{_lambda_.1} parent=0 // pred_region
    _
  $region25: #{_lambda_.1} parent=0 // pred_fallthru
    _
  // Predicated region
  $region26: #{_lambda_.1} parent=0 // pred_check
    _
  $region27: #{_lambda_.1} parent=0 // pred_check_branch
    %37 = sbr.rel (0) target = $region29
  $region28: #{_lambda_.1} parent=0 // pred_region
    _
  $region29: #{_lambda_.1} parent=0 // pred_fallthru
    _
  // Predicated region
  $region30: #{_lambda_.1} parent=0 // pred_check
    _
  $region31: #{_lambda_.1} parent=0 // pred_check_branch
    %39 = sbr.rel (0) target = $region33
  $region32: #{_lambda_.1} parent=0 // pred_region
    _
  $region33: #{_lambda_.1} parent=0 // pred_fallthru
    _
  // Predicated region
  $region34: #{_lambda_.1} parent=0 // pred_check
    _
  $region35: #{_lambda_.1} parent=0 // pred_check_branch
    %41 = sbr.rel (0) target = $region37
  $region36: #{_lambda_.1} parent=0 // pred_region
    _
  $region37: #{_lambda_.1} parent=0 // pred_fallthru
    _
  // Predicated region
  $region38: #{_lambda_.1} parent=0 // pred_check
    _
  $region39: #{_lambda_.1} parent=0 // pred_check_branch
    %43 = sbr.rel (0) target = $region41
  $region40: #{_lambda_.1} parent=0 // pred_region
    _
  $region41: #{_lambda_.1} parent=0 // pred_fallthru
    _
  // Predicated region
  $region42: #{_lambda_.1} parent=0 // pred_check
    _
  $region43: #{_lambda_.1} parent=0 // pred_check_branch
    %45 = sbr.rel (0) target = $region45
  $region44: #{_lambda_.1} parent=0 // pred_region
    _
  $region45: #{_lambda_.1} parent=0 // pred_fallthru
    _
  // Predicated region
  $region46: #{_lambda_.1} parent=0 // pred_check
    _
  $region47: #{_lambda_.1} parent=0 // pred_check_branch
    %47 = sbr.rel (0) target = $region49
  $region48: #{_lambda_.1} parent=0 // pred_region
    _
  $region49: #{_lambda_.1} parent=0 // pred_fallthru
    _
  // Predicated region
  $region50: #{_lambda_.1} parent=0 // pred_check
    _
  $region51: #{_lambda_.1} parent=0 // pred_check_branch
    %49 = sbr.rel (0) target = $region53
  $region52: #{_lambda_.1} parent=0 // pred_region
    _
  $region53: #{_lambda_.1} parent=0 // pred_fallthru
    _
  // Predicated region
  $region54: #{_lambda_.1} parent=0 // pred_check
    _
  $region55: #{_lambda_.1} parent=0 // pred_check_branch
    %51 = sbr.rel (0) target = $region57
  $region56: #{_lambda_.1} parent=0 // pred_region
    _
  $region57: #{_lambda_.1} parent=0 // pred_fallthru
    _
  // Predicated region
  $region58: #{_lambda_.1} parent=0 // pred_check
    _
  $region59: #{_lambda_.1} parent=0 // pred_check_branch
    %53 = sbr.rel (0) target = $region61
  $region60: #{_lambda_.1} parent=0 // pred_region
    _
  $region61: #{_lambda_.1} parent=0 // pred_fallthru
    _
  // Predicated region
  $region62: #{_lambda_.1} parent=0 // pred_check
    _
  $region63: #{_lambda_.1} parent=0 // pred_check_branch
    %55 = sbr.rel (0) target = $region65
  $region64: #{_lambda_.1} parent=0 // pred_region
    _
  $region65: #{_lambda_.1} parent=0 // pred_fallthru
    _
  // Predicated region
  $region66: #{_lambda_.1} parent=0 // pred_check
    _
  $region67: #{_lambda_.1} parent=0 // pred_check_branch
    %57 = sbr.rel (0) target = $region69
  $region68: #{_lambda_.1} parent=0 // pred_region
    _
  $region69: #{_lambda_.1} parent=0 // pred_fallthru
    _
  // Predicated region
  $region70: #{_lambda_.1} parent=0 // pred_check
    _
  $region71: #{_lambda_.1} parent=0 // pred_check_branch
    %59 = sbr.rel (0) target = $region73
  $region72: #{_lambda_.1} parent=0 // pred_region
    _
  $region73: #{_lambda_.1} parent=0 // pred_fallthru
    _
  // Predicated region
  $region74: #{_lambda_.1} parent=0 // pred_check
    _
  $region75: #{_lambda_.1} parent=0 // pred_check_branch
    %61 = sbr.rel (0) target = $region77
  $region76: #{_lambda_.1} parent=0 // pred_region
    _
  $region77: #{_lambda_.1} parent=0 // pred_fallthru
    _
  %v63 = vld [vmem:[%s0] sm:$0xff]
  %v64 = vld [vmem:[%s0 + $0x8] sm:$0xff]
  %v65 = vld [vmem:[%s0 + $0x10] sm:$0xff]
  %v66 = vld [vmem:[%s0 + $0x18] sm:$0xff]
  %v67 = vld [vmem:[%s0 + $0x20] sm:$0xff]
  %v68 = vld [vmem:[%s0 + $0x28] sm:$0xff]
  %v69 = vld [vmem:[%s0 + $0x30] sm:$0xff]
  %v70 = vld [vmem:[%s0 + $0x38] sm:$0xff]
  %v71 = vld [vmem:[%s0 + $0x40] sm:$0xff]
  %v72 = vld [vmem:[%s0 + $0x48] sm:$0xff]
  %v73 = vld [vmem:[%s0 + $0x50] sm:$0xff]
  %v74 = vld [vmem:[%s0 + $0x58] sm:$0xff]
  %v75 = vld [vmem:[%s0 + $0x60] sm:$0xff]
  %v76 = vld [vmem:[%s0 + $0x68] sm:$0xff]
  %v77 = vld [vmem:[%s0 + $0x70] sm:$0xff]
  %v78 = vld [vmem:[%s0 + $0x78] sm:$0xff]
  %v79 = vld [vmem:[%s0 + $0x80] sm:$0xff]
  %v80 = vld [vmem:[%s0 + $0x88] sm:$0xff]
  %v81 = vld [vmem:[%s0 + $0x90] sm:$0xff]
  %v82 = vld [vmem:[%s0 + $0x98] sm:$0xff]
  %v83 = vld [vmem:[%s0 + $0xa0] sm:$0xff]
  %v84 = vld [vmem:[%s0 + $0xa8] sm:$0xff]
  %v85 = vld [vmem:[%s0 + $0xb0] sm:$0xff]
  %v86 = vld [vmem:[%s0 + $0xb8] sm:$0xff]
  %v87 = vld [vmem:[%s0 + $0xc0] sm:$0xff]
  %v88 = vld [vmem:[%s0 + $0xc8] sm:$0xff]
  %v89 = vld [vmem:[%s0 + $0xd0] sm:$0xff]
  %v90 = vld [vmem:[%s0 + $0xd8] sm:$0xff]
  %v91 = vld [vmem:[%s0 + $0xe0] sm:$0xff]
  %v92 = vld [vmem:[%s0 + $0xe8] sm:$0xff]
  %v93 = vld [vmem:[%s0 + $0xf0] sm:$0xff]
  %v94 = vld [vmem:[%s0 + $0xf8] sm:$0xff]
  %v95 = vld [vmem:[%s1] sm:$0xf]
  %v96 = vld [vmem:[%s1 + $0x4] sm:$0xf]
  %v97 = vld [vmem:[%s1 + $0x8] sm:$0xf]
  %v98 = vld [vmem:[%s1 + $0xc] sm:$0xf]
  %v99 = vld [vmem:[%s1 + $0x10] sm:$0xf]
  %v100 = vld [vmem:[%s1 + $0x14] sm:$0xf]
  %v101 = vld [vmem:[%s1 + $0x18] sm:$0xf]
  %v102 = vld [vmem:[%s1 + $0x1c] sm:$0xf]
  %v103 = vld [vmem:[%s1 + $0x20] sm:$0xf]
  %v104 = vld [vmem:[%s1 + $0x24] sm:$0xf]
  %v105 = vld [vmem:[%s1 + $0x28] sm:$0xf]
  %v106 = vld [vmem:[%s1 + $0x2c] sm:$0xf]
  %v107 = vld [vmem:[%s1 + $0x30] sm:$0xf]
  %v108 = vld [vmem:[%s1 + $0x34] sm:$0xf]
  %v109 = vld [vmem:[%s1 + $0x38] sm:$0xf]
  %v110 = vld [vmem:[%s1 + $0x3c] sm:$0xf]
  %v111 = vld [vmem:[%s1 + $0x40] sm:$0xf]
  %v112 = vld [vmem:[%s1 + $0x44] sm:$0xf]
  %v113 = vld [vmem:[%s1 + $0x48] sm:$0xf]
  %v114 = vld [vmem:[%s1 + $0x4c] sm:$0xf]
  %v115 = vld [vmem:[%s1 + $0x50] sm:$0xf]
  %v116 = vld [vmem:[%s1 + $0x54] sm:$0xf]
  %v117 = vld [vmem:[%s1 + $0x58] sm:$0xf]
  %v118 = vld [vmem:[%s1 + $0x5c] sm:$0xf]
  %v119 = vld [vmem:[%s1 + $0x60] sm:$0xf]
  %v120 = vld [vmem:[%s1 + $0x64] sm:$0xf]
  %v121 = vld [vmem:[%s1 + $0x68] sm:$0xf]
  %v122 = vld [vmem:[%s1 + $0x6c] sm:$0xf]
  %v123 = vld [vmem:[%s1 + $0x70] sm:$0xf]
  %v124 = vld [vmem:[%s1 + $0x74] sm:$0xf]
  %v125 = vld [vmem:[%s1 + $0x78] sm:$0xf]
  %v126 = vld [vmem:[%s1 + $0x7c] sm:$0xf]
  %v127 = vld [vmem:[%s1 + $0x80] sm:$0xf]
  %v128 = vld [vmem:[%s1 + $0x84] sm:$0xf]
  %v129 = vld [vmem:[%s1 + $0x88] sm:$0xf]
  %v130 = vld [vmem:[%s1 + $0x8c] sm:$0xf]
  %v131 = vld [vmem:[%s1 + $0x90] sm:$0xf]
  %v132 = vld [vmem:[%s1 + $0x94] sm:$0xf]
  %v133 = vld [vmem:[%s1 + $0x98] sm:$0xf]
  %v134 = vld [vmem:[%s1 + $0x9c] sm:$0xf]
  %v135 = vld [vmem:[%s1 + $0xa0] sm:$0xf]
  %v136 = vld [vmem:[%s1 + $0xa4] sm:$0xf]
  %v137 = vld [vmem:[%s1 + $0xa8] sm:$0xf]
  %v138 = vld [vmem:[%s1 + $0xac] sm:$0xf]
  %v139 = vld [vmem:[%s1 + $0xb0] sm:$0xf]
  %v140 = vld [vmem:[%s1 + $0xb4] sm:$0xf]
  %v141 = vld [vmem:[%s1 + $0xb8] sm:$0xf]
  %v142 = vld [vmem:[%s1 + $0xbc] sm:$0xf]
  %v143 = vld [vmem:[%s1 + $0xc0] sm:$0xf]
  %v144 = vld [vmem:[%s1 + $0xc4] sm:$0xf]
  %v145 = vld [vmem:[%s1 + $0xc8] sm:$0xf]
  %v146 = vld [vmem:[%s1 + $0xcc] sm:$0xf]
  %v147 = vld [vmem:[%s1 + $0xd0] sm:$0xf]
  %v148 = vld [vmem:[%s1 + $0xd4] sm:$0xf]
  %v149 = vld [vmem:[%s1 + $0xd8] sm:$0xf]
  %v150 = vld [vmem:[%s1 + $0xdc] sm:$0xf]
  %v151 = vld [vmem:[%s1 + $0xe0] sm:$0xf]
  %v152 = vld [vmem:[%s1 + $0xe4] sm:$0xf]
  %v153 = vld [vmem:[%s1 + $0xe8] sm:$0xf]
  %v154 = vld [vmem:[%s1 + $0xec] sm:$0xf]
  %v155 = vld [vmem:[%s1 + $0xf0] sm:$0xf]
  %v156 = vld [vmem:[%s1 + $0xf4] sm:$0xf]
  %v157 = vld [vmem:[%s1 + $0xf8] sm:$0xf]
  %v158 = vld [vmem:[%s1 + $0xfc] sm:$0xf]
  %v159 = vld [vmem:[%s1 + $0x100] sm:$0xf]
  %v160 = vld [vmem:[%s1 + $0x104] sm:$0xf]
  %v161 = vld [vmem:[%s1 + $0x108] sm:$0xf]
  %v162 = vld [vmem:[%s1 + $0x10c] sm:$0xf]
  %v163 = vld [vmem:[%s1 + $0x110] sm:$0xf]
  %v164 = vld [vmem:[%s1 + $0x114] sm:$0xf]
  %v165 = vld [vmem:[%s1 + $0x118] sm:$0xf]
  %v166 = vld [vmem:[%s1 + $0x11c] sm:$0xf]
  %v167 = vld [vmem:[%s1 + $0x120] sm:$0xf]
  %v168 = vld [vmem:[%s1 + $0x124] sm:$0xf]
  %v169 = vld [vmem:[%s1 + $0x128] sm:$0xf]
  %v170 = vld [vmem:[%s1 + $0x12c] sm:$0xf]
  %v171 = vld [vmem:[%s1 + $0x130] sm:$0xf]
  %v172 = vld [vmem:[%s1 + $0x134] sm:$0xf]
  %v173 = vld [vmem:[%s1 + $0x138] sm:$0xf]
  %v174 = vld [vmem:[%s1 + $0x13c] sm:$0xf]
  %v175 = vld [vmem:[%s1 + $0x140] sm:$0xf]
  %v176 = vld [vmem:[%s1 + $0x144] sm:$0xf]
  %v177 = vld [vmem:[%s1 + $0x148] sm:$0xf]
  %v178 = vld [vmem:[%s1 + $0x14c] sm:$0xf]
  %v179 = vld [vmem:[%s1 + $0x150] sm:$0xf]
  %v180 = vld [vmem:[%s1 + $0x154] sm:$0xf]
  %v181 = vld [vmem:[%s1 + $0x158] sm:$0xf]
  %v182 = vld [vmem:[%s1 + $0x15c] sm:$0xf]
  %v183 = vld [vmem:[%s1 + $0x160] sm:$0xf]
  %v184 = vld [vmem:[%s1 + $0x164] sm:$0xf]
  %v185 = vld [vmem:[%s1 + $0x168] sm:$0xf]
  %v186 = vld [vmem:[%s1 + $0x16c] sm:$0xf]
  %v187 = vld [vmem:[%s1 + $0x170] sm:$0xf]
  %v188 = vld [vmem:[%s1 + $0x174] sm:$0xf]
  %v189 = vld [vmem:[%s1 + $0x178] sm:$0xf]
  %v190 = vld [vmem:[%s1 + $0x17c] sm:$0xf]
  %v191 = vld [vmem:[%s1 + $0x180] sm:$0xf]
  %v192 = vld [vmem:[%s1 + $0x184] sm:$0xf]
  %v193 = vld [vmem:[%s1 + $0x188] sm:$0xf]
  %v194 = vld [vmem:[%s1 + $0x18c] sm:$0xf]
  %v195 = vld [vmem:[%s1 + $0x190] sm:$0xf]
  %v196 = vld [vmem:[%s1 + $0x194] sm:$0xf]
  %v197 = vld [vmem:[%s1 + $0x198] sm:$0xf]
  %v198 = vld [vmem:[%s1 + $0x19c] sm:$0xf]
  %v199 = vld [vmem:[%s1 + $0x1a0] sm:$0xf]
  %v200 = vld [vmem:[%s1 + $0x1a4] sm:$0xf]
  %v201 = vld [vmem:[%s1 + $0x1a8] sm:$0xf]
  %v202 = vld [vmem:[%s1 + $0x1ac] sm:$0xf]
  %v203 = vld [vmem:[%s1 + $0x1b0] sm:$0xf]
  %v204 = vld [vmem:[%s1 + $0x1b4] sm:$0xf]
  %v205 = vld [vmem:[%s1 + $0x1b8] sm:$0xf]
  %v206 = vld [vmem:[%s1 + $0x1bc] sm:$0xf]
  %v207 = vld [vmem:[%s1 + $0x1c0] sm:$0xf]
  %v208 = vld [vmem:[%s1 + $0x1c4] sm:$0xf]
  %v209 = vld [vmem:[%s1 + $0x1c8] sm:$0xf]
  %v210 = vld [vmem:[%s1 + $0x1cc] sm:$0xf]
  %v211 = vld [vmem:[%s1 + $0x1d0] sm:$0xf]
  %v212 = vld [vmem:[%s1 + $0x1d4] sm:$0xf]
  %v213 = vld [vmem:[%s1 + $0x1d8] sm:$0xf]
  %v214 = vld [vmem:[%s1 + $0x1dc] sm:$0xf]
  %v215 = vld [vmem:[%s1 + $0x1e0] sm:$0xf]
  %v216 = vld [vmem:[%s1 + $0x1e4] sm:$0xf]
  %v217 = vld [vmem:[%s1 + $0x1e8] sm:$0xf]
  %v218 = vld [vmem:[%s1 + $0x1ec] sm:$0xf]
  %v219 = vld [vmem:[%s1 + $0x1f0] sm:$0xf]
  %v220 = vld [vmem:[%s1 + $0x1f4] sm:$0xf]
  %v221 = vld [vmem:[%s1 + $0x1f8] sm:$0xf]
  %v222 = vld [vmem:[%s1 + $0x1fc] sm:$0xf]
  %v239 = vunpack.c.l.b16 %v63
  %v240 = vunpack.c.h.b16 %v63
  %v241 = vunpack.c.l.b16 %v64
  %v242 = vunpack.c.h.b16 %v64
  %v243 = vunpack.c.l.b16 %v65
  %v244 = vunpack.c.h.b16 %v65
  %v245 = vunpack.c.l.b16 %v66
  %v246 = vunpack.c.h.b16 %v66
  %v247 = vunpack.c.l.b16 %v67
  %v248 = vunpack.c.h.b16 %v67
  %v249 = vunpack.c.l.b16 %v68
  %v250 = vunpack.c.h.b16 %v68
  %v251 = vunpack.c.l.b16 %v69
  %v252 = vunpack.c.h.b16 %v69
  %v253 = vunpack.c.l.b16 %v70
  %v254 = vunpack.c.h.b16 %v70
  %v255 = vunpack.c.l.b16 %v71
  %v256 = vunpack.c.h.b16 %v71
  %v257 = vunpack.c.l.b16 %v72
  %v258 = vunpack.c.h.b16 %v72
  %v259 = vunpack.c.l.b16 %v73
  %v260 = vunpack.c.h.b16 %v73
  %v261 = vunpack.c.l.b16 %v74
  %v262 = vunpack.c.h.b16 %v74
  %v263 = vunpack.c.l.b16 %v75
  %v264 = vunpack.c.h.b16 %v75
  %v265 = vunpack.c.l.b16 %v76
  %v266 = vunpack.c.h.b16 %v76
  %v267 = vunpack.c.l.b16 %v77
  %v268 = vunpack.c.h.b16 %v77
  %v269 = vunpack.c.l.b16 %v78
  %v270 = vunpack.c.h.b16 %v78
  %v271 = vpack.c.b16 %v243, %v239
  %v272 = vpack.c.b16 %v244, %v240
  %v273 = vpack.c.b16 %v245, %v241
  %v274 = vpack.c.b16 %v246, %v242
  %v275 = vpack.c.b16 %v251, %v247
  %v276 = vpack.c.b16 %v252, %v248
  %v277 = vpack.c.b16 %v253, %v249
  %v278 = vpack.c.b16 %v254, %v250
  %v279 = vpack.c.b16 %v259, %v255
  %v280 = vpack.c.b16 %v260, %v256
  %v281 = vpack.c.b16 %v261, %v257
  %v282 = vpack.c.b16 %v262, %v258
  %v283 = vpack.c.b16 %v267, %v263
  %v284 = vpack.c.b16 %v268, %v264
  %v285 = vpack.c.b16 %v269, %v265
  %v286 = vpack.c.b16 %v270, %v266
  %v367 = vunpack.c.l.b16 %v95
  %v368 = vunpack.c.l.b16 %v96
  %v369 = vunpack.c.l.b16 %v97
  %v370 = vunpack.c.l.b16 %v98
  %v371 = vunpack.c.l.b16 %v99
  %v372 = vunpack.c.l.b16 %v100
  %v373 = vunpack.c.l.b16 %v101
  %v374 = vunpack.c.l.b16 %v102
  %v375 = vunpack.c.l.b16 %v103
  %v376 = vunpack.c.l.b16 %v104
  %v377 = vunpack.c.l.b16 %v105
  %v378 = vunpack.c.l.b16 %v106
  %v379 = vunpack.c.l.b16 %v107
  %v380 = vunpack.c.l.b16 %v108
  %v381 = vunpack.c.l.b16 %v109
  %v382 = vunpack.c.l.b16 %v110
  %v383 = vunpack.c.l.b16 %v111
  %v384 = vunpack.c.l.b16 %v112
  %v385 = vunpack.c.l.b16 %v113
  %v386 = vunpack.c.l.b16 %v114
  %v387 = vunpack.c.l.b16 %v115
  %v388 = vunpack.c.l.b16 %v116
  %v389 = vunpack.c.l.b16 %v117
  %v390 = vunpack.c.l.b16 %v118
  %v391 = vunpack.c.l.b16 %v119
  %v392 = vunpack.c.l.b16 %v120
  %v393 = vunpack.c.l.b16 %v121
  %v394 = vunpack.c.l.b16 %v122
  %v395 = vunpack.c.l.b16 %v123
  %v396 = vunpack.c.l.b16 %v124
  %v397 = vunpack.c.l.b16 %v125
  %v398 = vunpack.c.l.b16 %v126
  %v399 = vunpack.c.l.b16 %v127
  %v400 = vunpack.c.l.b16 %v128
  %v401 = vunpack.c.l.b16 %v129
  %v402 = vunpack.c.l.b16 %v130
  %v403 = vunpack.c.l.b16 %v131
  %v404 = vunpack.c.l.b16 %v132
  %v405 = vunpack.c.l.b16 %v133
  %v406 = vunpack.c.l.b16 %v134
  %v407 = vunpack.c.l.b16 %v135
  %v408 = vunpack.c.l.b16 %v136
  %v409 = vunpack.c.l.b16 %v137
  %v410 = vunpack.c.l.b16 %v138
  %v411 = vunpack.c.l.b16 %v139
  %v412 = vunpack.c.l.b16 %v140
  %v413 = vunpack.c.l.b16 %v141
  %v414 = vunpack.c.l.b16 %v142
  %v415 = vunpack.c.l.b16 %v143
  %v416 = vunpack.c.l.b16 %v144
  %v417 = vunpack.c.l.b16 %v145
  %v418 = vunpack.c.l.b16 %v146
  %v419 = vunpack.c.l.b16 %v147
  %v420 = vunpack.c.l.b16 %v148
  %v421 = vunpack.c.l.b16 %v149
  %v422 = vunpack.c.l.b16 %v150
  %v423 = vunpack.c.l.b16 %v151
  %v424 = vunpack.c.l.b16 %v152
  %v425 = vunpack.c.l.b16 %v153
  %v426 = vunpack.c.l.b16 %v154
  %v427 = vunpack.c.l.b16 %v155
  %v428 = vunpack.c.l.b16 %v156
  %v429 = vunpack.c.l.b16 %v157
  %v430 = vunpack.c.l.b16 %v158
  %v431 = vpack.c.b16 %v368, %v367
  %v432 = vpack.c.b16 %v370, %v369
  %v433 = vpack.c.b16 %v372, %v371
  %v434 = vpack.c.b16 %v374, %v373
  %v435 = vpack.c.b16 %v376, %v375
  %v436 = vpack.c.b16 %v378, %v377
  %v437 = vpack.c.b16 %v380, %v379
  %v438 = vpack.c.b16 %v382, %v381
  %v439 = vpack.c.b16 %v384, %v383
  %v440 = vpack.c.b16 %v386, %v385
  %v441 = vpack.c.b16 %v388, %v387
  %v442 = vpack.c.b16 %v390, %v389
  %v443 = vpack.c.b16 %v392, %v391
  %v444 = vpack.c.b16 %v394, %v393
  %v445 = vpack.c.b16 %v396, %v395
  %v446 = vpack.c.b16 %v398, %v397
  %v447 = vpack.c.b16 %v400, %v399
  %v448 = vpack.c.b16 %v402, %v401
  %v449 = vpack.c.b16 %v404, %v403
  %v450 = vpack.c.b16 %v406, %v405
  %v451 = vpack.c.b16 %v408, %v407
  %v452 = vpack.c.b16 %v410, %v409
  %v453 = vpack.c.b16 %v412, %v411
  %v454 = vpack.c.b16 %v414, %v413
  %v455 = vpack.c.b16 %v416, %v415
  %v456 = vpack.c.b16 %v418, %v417
  %v457 = vpack.c.b16 %v420, %v419
  %v458 = vpack.c.b16 %v422, %v421
  %v459 = vpack.c.b16 %v424, %v423
  %v460 = vpack.c.b16 %v426, %v425
  %v461 = vpack.c.b16 %v428, %v427
  %v462 = vpack.c.b16 %v430, %v429
  %495 = vmatprep.subr.bf16.mxu0 0
  %496 = vmatpush1.bf16.msra.mxu0 %v431
  %497 = vmatprep.subr.bf16.mxu0 0
  %498 = vmatpush1.bf16.msra.mxu0 %v432
  %499 = vmatprep.subr.bf16.mxu0 0
  %500 = vmatpush1.bf16.msra.mxu0 %v433
  %501 = vmatprep.subr.bf16.mxu0 0
  %502 = vmatpush1.bf16.msra.mxu0 %v434
  %503 = vmatprep.subr.bf16.mxu0 0
  %504 = vmatpush1.bf16.msra.mxu0 %v435
  %505 = vmatprep.subr.bf16.mxu0 0
  %506 = vmatpush1.bf16.msra.mxu0 %v436
  %507 = vmatprep.subr.bf16.mxu0 0
  %508 = vmatpush1.bf16.msra.mxu0 %v437
  %509 = vmatprep.subr.bf16.mxu0 0
  %510 = vmatpush1.bf16.msra.mxu0 %v438
  %511 = vmatprep.subr.bf16.mxu0 0
  %512 = vmatpush1.bf16.msra.mxu0 %v439
  %513 = vmatprep.subr.bf16.mxu0 0
  %514 = vmatpush1.bf16.msra.mxu0 %v440
  %515 = vmatprep.subr.bf16.mxu0 0
  %516 = vmatpush1.bf16.msra.mxu0 %v441
  %517 = vmatprep.subr.bf16.mxu0 0
  %518 = vmatpush1.bf16.msra.mxu0 %v442
  %519 = vmatprep.subr.bf16.mxu0 0
  %520 = vmatpush1.bf16.msra.mxu0 %v443
  %521 = vmatprep.subr.bf16.mxu0 0
  %522 = vmatpush1.bf16.msra.mxu0 %v444
  %523 = vmatprep.subr.bf16.mxu0 0
  %524 = vmatpush1.bf16.msra.mxu0 %v445
  %525 = vmatprep.subr.bf16.mxu0 0
  %526 = vmatpush1.bf16.msra.mxu0 %v446
  %527 = vmatprep.mubr.bf16.mxu0 %v272
  %528 = vmatmul.mubr.bf16.gmra.mrb[0].mxu0 %v271
  %v529 = vpop.f32.mrb[0].mxu0
  %v530 = vadd.f32 0.0, %v529
  %v531 = vpop.f32.mrb[0].mxu0
  %v532 = vpop.f32.mrb[0].mxu0
  %v533 = vadd.f32 0.0, %v532
  %v534 = vpop.f32.mrb[0].mxu0
  %535 = vmatprep.mubr.bf16.mxu0 %v276
  %536 = vmatmul.mubr.bf16.gmra.mrb[0].mxu0 %v275
  %v537 = vpop.f32.mrb[0].mxu0
  %v538 = vadd.f32 0.0, %v537
  %v539 = vpop.f32.mrb[0].mxu0
  %v540 = vpop.f32.mrb[0].mxu0
  %v541 = vadd.f32 0.0, %v540
  %v542 = vpop.f32.mrb[0].mxu0
  %543 = vmatprep.mubr.bf16.mxu0 %v280
  %544 = vmatmul.mubr.bf16.gmra.mrb[0].mxu0 %v279
  %v545 = vpop.f32.mrb[0].mxu0
  %v546 = vadd.f32 0.0, %v545
  %v547 = vpop.f32.mrb[0].mxu0
  %v548 = vpop.f32.mrb[0].mxu0
  %v549 = vadd.f32 0.0, %v548
  %v550 = vpop.f32.mrb[0].mxu0
  %551 = vmatprep.mubr.bf16.mxu0 %v284
  %552 = vmatmul.mubr.bf16.gmra.mrb[0].mxu0 %v283
  %v553 = vpop.f32.mrb[0].mxu0
  %v554 = vadd.f32 0.0, %v553
  %v555 = vpop.f32.mrb[0].mxu0
  %v556 = vpop.f32.mrb[0].mxu0
  %v557 = vadd.f32 0.0, %v556
  %v558 = vpop.f32.mrb[0].mxu0
  %559 = vdwg.mxu0
  %560 = vmatprep.subr.bf16.mxu0 0
  %561 = vmatpush1.bf16.msra.mxu0 %v447
  %562 = vmatprep.subr.bf16.mxu0 0
  %563 = vmatpush1.bf16.msra.mxu0 %v448
  %564 = vmatprep.subr.bf16.mxu0 0
  %565 = vmatpush1.bf16.msra.mxu0 %v449
  %566 = vmatprep.subr.bf16.mxu0 0
  %567 = vmatpush1.bf16.msra.mxu0 %v450
  %568 = vmatprep.subr.bf16.mxu0 0
  %569 = vmatpush1.bf16.msra.mxu0 %v451
  %570 = vmatprep.subr.bf16.mxu0 0
  %571 = vmatpush1.bf16.msra.mxu0 %v452
  %572 = vmatprep.subr.bf16.mxu0 0
  %573 = vmatpush1.bf16.msra.mxu0 %v453
  %574 = vmatprep.subr.bf16.mxu0 0
  %575 = vmatpush1.bf16.msra.mxu0 %v454
  %576 = vmatprep.subr.bf16.mxu0 0
  %577 = vmatpush1.bf16.msra.mxu0 %v455
  %578 = vmatprep.subr.bf16.mxu0 0
  %579 = vmatpush1.bf16.msra.mxu0 %v456
  %580 = vmatprep.subr.bf16.mxu0 0
  %581 = vmatpush1.bf16.msra.mxu0 %v457
  %582 = vmatprep.subr.bf16.mxu0 0
  %583 = vmatpush1.bf16.msra.mxu0 %v458
  %584 = vmatprep.subr.bf16.mxu0 0
  %585 = vmatpush1.bf16.msra.mxu0 %v459
  %586 = vmatprep.subr.bf16.mxu0 0
  %587 = vmatpush1.bf16.msra.mxu0 %v460
  %588 = vmatprep.subr.bf16.mxu0 0
  %589 = vmatpush1.bf16.msra.mxu0 %v461
  %590 = vmatprep.subr.bf16.mxu0 0
  %591 = vmatpush1.bf16.msra.mxu0 %v462
  %592 = vmatprep.mubr.bf16.mxu0 %v274
  %593 = vmatmul.mubr.bf16.gmra.mrb[0].mxu0 %v273
  %v594 = vpop.f32.mrb[0].mxu0
  %v595 = vadd.f32 %v530, %v594
  %v596 = vpop.f32.mrb[0].mxu0
  %v597 = vpop.f32.mrb[0].mxu0
  %v598 = vadd.f32 %v533, %v597
  %v599 = vpop.f32.mrb[0].mxu0
  %600 = vmatprep.mubr.bf16.mxu0 %v278
  %601 = vmatmul.mubr.bf16.gmra.mrb[0].mxu0 %v277
  %v602 = vpop.f32.mrb[0].mxu0
  %v603 = vadd.f32 %v538, %v602
  %v604 = vpop.f32.mrb[0].mxu0
  %v605 = vpop.f32.mrb[0].mxu0
  %v606 = vadd.f32 %v541, %v605
  %v607 = vpop.f32.mrb[0].mxu0
  %608 = vmatprep.mubr.bf16.mxu0 %v282
  %609 = vmatmul.mubr.bf16.gmra.mrb[0].mxu0 %v281
  %v610 = vpop.f32.mrb[0].mxu0
  %v611 = vadd.f32 %v546, %v610
  %v612 = vpop.f32.mrb[0].mxu0
  %v613 = vpop.f32.mrb[0].mxu0
  %v614 = vadd.f32 %v549, %v613
  %v615 = vpop.f32.mrb[0].mxu0
  %616 = vmatprep.mubr.bf16.mxu0 %v286
  %617 = vmatmul.mubr.bf16.gmra.mrb[0].mxu0 %v285
  %v618 = vpop.f32.mrb[0].mxu0
  %v619 = vadd.f32 %v554, %v618
  %v620 = vpop.f32.mrb[0].mxu0
  %v621 = vpop.f32.mrb[0].mxu0
  %v622 = vadd.f32 %v557, %v621
  %v623 = vpop.f32.mrb[0].mxu0
  %624 = vdwg.mxu0
  %v641 = vunpack.c.l.b16 %v79
  %v642 = vunpack.c.h.b16 %v79
  %v643 = vunpack.c.l.b16 %v80
  %v644 = vunpack.c.h.b16 %v80
  %v645 = vunpack.c.l.b16 %v81
  %v646 = vunpack.c.h.b16 %v81
  %v647 = vunpack.c.l.b16 %v82
  %v648 = vunpack.c.h.b16 %v82
  %v649 = vunpack.c.l.b16 %v83
  %v650 = vunpack.c.h.b16 %v83
  %v651 = vunpack.c.l.b16 %v84
  %v652 = vunpack.c.h.b16 %v84
  %v653 = vunpack.c.l.b16 %v85
  %v654 = vunpack.c.h.b16 %v85
  %v655 = vunpack.c.l.b16 %v86
  %v656 = vunpack.c.h.b16 %v86
  %v657 = vunpack.c.l.b16 %v87
  %v658 = vunpack.c.h.b16 %v87
  %v659 = vunpack.c.l.b16 %v88
  %v660 = vunpack.c.h.b16 %v88
  %v661 = vunpack.c.l.b16 %v89
  %v662 = vunpack.c.h.b16 %v89
  %v663 = vunpack.c.l.b16 %v90
  %v664 = vunpack.c.h.b16 %v90
  %v665 = vunpack.c.l.b16 %v91
  %v666 = vunpack.c.h.b16 %v91
  %v667 = vunpack.c.l.b16 %v92
  %v668 = vunpack.c.h.b16 %v92
  %v669 = vunpack.c.l.b16 %v93
  %v670 = vunpack.c.h.b16 %v93
  %v671 = vunpack.c.l.b16 %v94
  %v672 = vunpack.c.h.b16 %v94
  %v673 = vpack.c.b16 %v645, %v641
  %v674 = vpack.c.b16 %v646, %v642
  %v675 = vpack.c.b16 %v647, %v643
  %v676 = vpack.c.b16 %v648, %v644
  %v677 = vpack.c.b16 %v653, %v649
  %v678 = vpack.c.b16 %v654, %v650
  %v679 = vpack.c.b16 %v655, %v651
  %v680 = vpack.c.b16 %v656, %v652
  %v681 = vpack.c.b16 %v661, %v657
  %v682 = vpack.c.b16 %v662, %v658
  %v683 = vpack.c.b16 %v663, %v659
  %v684 = vpack.c.b16 %v664, %v660
  %v685 = vpack.c.b16 %v669, %v665
  %v686 = vpack.c.b16 %v670, %v666
  %v687 = vpack.c.b16 %v671, %v667
  %v688 = vpack.c.b16 %v672, %v668
  %v769 = vunpack.c.l.b16 %v159
  %v770 = vunpack.c.l.b16 %v160
  %v771 = vunpack.c.l.b16 %v161
  %v772 = vunpack.c.l.b16 %v162
  %v773 = vunpack.c.l.b16 %v163
  %v774 = vunpack.c.l.b16 %v164
  %v775 = vunpack.c.l.b16 %v165
  %v776 = vunpack.c.l.b16 %v166
  %v777 = vunpack.c.l.b16 %v167
  %v778 = vunpack.c.l.b16 %v168
  %v779 = vunpack.c.l.b16 %v169
  %v780 = vunpack.c.l.b16 %v170
  %v781 = vunpack.c.l.b16 %v171
  %v782 = vunpack.c.l.b16 %v172
  %v783 = vunpack.c.l.b16 %v173
  %v784 = vunpack.c.l.b16 %v174
  %v785 = vunpack.c.l.b16 %v175
  %v786 = vunpack.c.l.b16 %v176
  %v787 = vunpack.c.l.b16 %v177
  %v788 = vunpack.c.l.b16 %v178
  %v789 = vunpack.c.l.b16 %v179
  %v790 = vunpack.c.l.b16 %v180
  %v791 = vunpack.c.l.b16 %v181
  %v792 = vunpack.c.l.b16 %v182
  %v793 = vunpack.c.l.b16 %v183
  %v794 = vunpack.c.l.b16 %v184
  %v795 = vunpack.c.l.b16 %v185
  %v796 = vunpack.c.l.b16 %v186
  %v797 = vunpack.c.l.b16 %v187
  %v798 = vunpack.c.l.b16 %v188
  %v799 = vunpack.c.l.b16 %v189
  %v800 = vunpack.c.l.b16 %v190
  %v801 = vunpack.c.l.b16 %v191
  %v802 = vunpack.c.l.b16 %v192
  %v803 = vunpack.c.l.b16 %v193
  %v804 = vunpack.c.l.b16 %v194
  %v805 = vunpack.c.l.b16 %v195
  %v806 = vunpack.c.l.b16 %v196
  %v807 = vunpack.c.l.b16 %v197
  %v808 = vunpack.c.l.b16 %v198
  %v809 = vunpack.c.l.b16 %v199
  %v810 = vunpack.c.l.b16 %v200
  %v811 = vunpack.c.l.b16 %v201
  %v812 = vunpack.c.l.b16 %v202
  %v813 = vunpack.c.l.b16 %v203
  %v814 = vunpack.c.l.b16 %v204
  %v815 = vunpack.c.l.b16 %v205
  %v816 = vunpack.c.l.b16 %v206
  %v817 = vunpack.c.l.b16 %v207
  %v818 = vunpack.c.l.b16 %v208
  %v819 = vunpack.c.l.b16 %v209
  %v820 = vunpack.c.l.b16 %v210
  %v821 = vunpack.c.l.b16 %v211
  %v822 = vunpack.c.l.b16 %v212
  %v823 = vunpack.c.l.b16 %v213
  %v824 = vunpack.c.l.b16 %v214
  %v825 = vunpack.c.l.b16 %v215
  %v826 = vunpack.c.l.b16 %v216
  %v827 = vunpack.c.l.b16 %v217
  %v828 = vunpack.c.l.b16 %v218
  %v829 = vunpack.c.l.b16 %v219
  %v830 = vunpack.c.l.b16 %v220
  %v831 = vunpack.c.l.b16 %v221
  %v832 = vunpack.c.l.b16 %v222
  %v833 = vpack.c.b16 %v770, %v769
  %v834 = vpack.c.b16 %v772, %v771
  %v835 = vpack.c.b16 %v774, %v773
  %v836 = vpack.c.b16 %v776, %v775
  %v837 = vpack.c.b16 %v778, %v777
  %v838 = vpack.c.b16 %v780, %v779
  %v839 = vpack.c.b16 %v782, %v781
  %v840 = vpack.c.b16 %v784, %v783
  %v841 = vpack.c.b16 %v786, %v785
  %v842 = vpack.c.b16 %v788, %v787
  %v843 = vpack.c.b16 %v790, %v789
  %v844 = vpack.c.b16 %v792, %v791
  %v845 = vpack.c.b16 %v794, %v793
  %v846 = vpack.c.b16 %v796, %v795
  %v847 = vpack.c.b16 %v798, %v797
  %v848 = vpack.c.b16 %v800, %v799
  %v849 = vpack.c.b16 %v802, %v801
  %v850 = vpack.c.b16 %v804, %v803
  %v851 = vpack.c.b16 %v806, %v805
  %v852 = vpack.c.b16 %v808, %v807
  %v853 = vpack.c.b16 %v810, %v809
  %v854 = vpack.c.b16 %v812, %v811
  %v855 = vpack.c.b16 %v814, %v813
  %v856 = vpack.c.b16 %v816, %v815
  %v857 = vpack.c.b16 %v818, %v817
  %v858 = vpack.c.b16 %v820, %v819
  %v859 = vpack.c.b16 %v822, %v821
  %v860 = vpack.c.b16 %v824, %v823
  %v861 = vpack.c.b16 %v826, %v825
  %v862 = vpack.c.b16 %v828, %v827
  %v863 = vpack.c.b16 %v830, %v829
  %v864 = vpack.c.b16 %v832, %v831
  %897 = vmatprep.subr.bf16.mxu0 0
  %898 = vmatpush1.bf16.msra.mxu0 %v833
  %899 = vmatprep.subr.bf16.mxu0 0
  %900 = vmatpush1.bf16.msra.mxu0 %v834
  %901 = vmatprep.subr.bf16.mxu0 0
  %902 = vmatpush1.bf16.msra.mxu0 %v835
  %903 = vmatprep.subr.bf16.mxu0 0
  %904 = vmatpush1.bf16.msra.mxu0 %v836
  %905 = vmatprep.subr.bf16.mxu0 0
  %906 = vmatpush1.bf16.msra.mxu0 %v837
  %907 = vmatprep.subr.bf16.mxu0 0
  %908 = vmatpush1.bf16.msra.mxu0 %v838
  %909 = vmatprep.subr.bf16.mxu0 0
  %910 = vmatpush1.bf16.msra.mxu0 %v839
  %911 = vmatprep.subr.bf16.mxu0 0
  %912 = vmatpush1.bf16.msra.mxu0 %v840
  %913 = vmatprep.subr.bf16.mxu0 0
  %914 = vmatpush1.bf16.msra.mxu0 %v841
  %915 = vmatprep.subr.bf16.mxu0 0
  %916 = vmatpush1.bf16.msra.mxu0 %v842
  %917 = vmatprep.subr.bf16.mxu0 0
  %918 = vmatpush1.bf16.msra.mxu0 %v843
  %919 = vmatprep.subr.bf16.mxu0 0
  %920 = vmatpush1.bf16.msra.mxu0 %v844
  %921 = vmatprep.subr.bf16.mxu0 0
  %922 = vmatpush1.bf16.msra.mxu0 %v845
  %923 = vmatprep.subr.bf16.mxu0 0
  %924 = vmatpush1.bf16.msra.mxu0 %v846
  %925 = vmatprep.subr.bf16.mxu0 0
  %926 = vmatpush1.bf16.msra.mxu0 %v847
  %927 = vmatprep.subr.bf16.mxu0 0
  %928 = vmatpush1.bf16.msra.mxu0 %v848
  %929 = vmatprep.mubr.bf16.mxu0 %v674
  %930 = vmatmul.mubr.bf16.gmra.mrb[0].mxu0 %v673
  %v931 = vpop.f32.mrb[0].mxu0
  %v932 = vadd.f32 0.0, %v931
  %v933 = vpop.f32.mrb[0].mxu0
  %v934 = vpop.f32.mrb[0].mxu0
  %v935 = vadd.f32 0.0, %v934
  %v936 = vpop.f32.mrb[0].mxu0
  %937 = vmatprep.mubr.bf16.mxu0 %v678
  %938 = vmatmul.mubr.bf16.gmra.mrb[0].mxu0 %v677
  %v939 = vpop.f32.mrb[0].mxu0
  %v940 = vadd.f32 0.0, %v939
  %v941 = vpop.f32.mrb[0].mxu0
  %v942 = vpop.f32.mrb[0].mxu0
  %v943 = vadd.f32 0.0, %v942
  %v944 = vpop.f32.mrb[0].mxu0
  %945 = vmatprep.mubr.bf16.mxu0 %v682
  %946 = vmatmul.mubr.bf16.gmra.mrb[0].mxu0 %v681
  %v947 = vpop.f32.mrb[0].mxu0
  %v948 = vadd.f32 0.0, %v947
  %v949 = vpop.f32.mrb[0].mxu0
  %v950 = vpop.f32.mrb[0].mxu0
  %v951 = vadd.f32 0.0, %v950
  %v952 = vpop.f32.mrb[0].mxu0
  %953 = vmatprep.mubr.bf16.mxu0 %v686
  %954 = vmatmul.mubr.bf16.gmra.mrb[0].mxu0 %v685
  %v955 = vpop.f32.mrb[0].mxu0
  %v956 = vadd.f32 0.0, %v955
  %v957 = vpop.f32.mrb[0].mxu0
  %v958 = vpop.f32.mrb[0].mxu0
  %v959 = vadd.f32 0.0, %v958
  %v960 = vpop.f32.mrb[0].mxu0
  %961 = vdwg.mxu0
  %962 = vmatprep.subr.bf16.mxu0 0
  %963 = vmatpush1.bf16.msra.mxu0 %v849
  %964 = vmatprep.subr.bf16.mxu0 0
  %965 = vmatpush1.bf16.msra.mxu0 %v850
  %966 = vmatprep.subr.bf16.mxu0 0
  %967 = vmatpush1.bf16.msra.mxu0 %v851
  %968 = vmatprep.subr.bf16.mxu0 0
  %969 = vmatpush1.bf16.msra.mxu0 %v852
  %970 = vmatprep.subr.bf16.mxu0 0
  %971 = vmatpush1.bf16.msra.mxu0 %v853
  %972 = vmatprep.subr.bf16.mxu0 0
  %973 = vmatpush1.bf16.msra.mxu0 %v854
  %974 = vmatprep.subr.bf16.mxu0 0
  %975 = vmatpush1.bf16.msra.mxu0 %v855
  %976 = vmatprep.subr.bf16.mxu0 0
  %977 = vmatpush1.bf16.msra.mxu0 %v856
  %978 = vmatprep.subr.bf16.mxu0 0
  %979 = vmatpush1.bf16.msra.mxu0 %v857
  %980 = vmatprep.subr.bf16.mxu0 0
  %981 = vmatpush1.bf16.msra.mxu0 %v858
  %982 = vmatprep.subr.bf16.mxu0 0
  %983 = vmatpush1.bf16.msra.mxu0 %v859
  %984 = vmatprep.subr.bf16.mxu0 0
  %985 = vmatpush1.bf16.msra.mxu0 %v860
  %986 = vmatprep.subr.bf16.mxu0 0
  %987 = vmatpush1.bf16.msra.mxu0 %v861
  %988 = vmatprep.subr.bf16.mxu0 0
  %989 = vmatpush1.bf16.msra.mxu0 %v862
  %990 = vmatprep.subr.bf16.mxu0 0
  %991 = vmatpush1.bf16.msra.mxu0 %v863
  %992 = vmatprep.subr.bf16.mxu0 0
  %993 = vmatpush1.bf16.msra.mxu0 %v864
  %994 = vmatprep.mubr.bf16.mxu0 %v676
  %995 = vmatmul.mubr.bf16.gmra.mrb[0].mxu0 %v675
  %v996 = vpop.f32.mrb[0].mxu0
  %v997 = vadd.f32 %v932, %v996
  %v998 = vpop.f32.mrb[0].mxu0
  %v999 = vpop.f32.mrb[0].mxu0
  %v1000 = vadd.f32 %v935, %v999
  %v1001 = vpop.f32.mrb[0].mxu0
  %1002 = vmatprep.mubr.bf16.mxu0 %v680
  %1003 = vmatmul.mubr.bf16.gmra.mrb[0].mxu0 %v679
  %v1004 = vpop.f32.mrb[0].mxu0
  %v1005 = vadd.f32 %v940, %v1004
  %v1006 = vpop.f32.mrb[0].mxu0
  %v1007 = vpop.f32.mrb[0].mxu0
  %v1008 = vadd.f32 %v943, %v1007
  %v1009 = vpop.f32.mrb[0].mxu0
  %1010 = vmatprep.mubr.bf16.mxu0 %v684
  %1011 = vmatmul.mubr.bf16.gmra.mrb[0].mxu0 %v683
  %v1012 = vpop.f32.mrb[0].mxu0
  %v1013 = vadd.f32 %v948, %v1012
  %v1014 = vpop.f32.mrb[0].mxu0
  %v1015 = vpop.f32.mrb[0].mxu0
  %v1016 = vadd.f32 %v951, %v1015
  %v1017 = vpop.f32.mrb[0].mxu0
  %1018 = vmatprep.mubr.bf16.mxu0 %v688
  %1019 = vmatmul.mubr.bf16.gmra.mrb[0].mxu0 %v687
  %v1020 = vpop.f32.mrb[0].mxu0
  %v1021 = vadd.f32 %v956, %v1020
  %v1022 = vpop.f32.mrb[0].mxu0
  %v1023 = vpop.f32.mrb[0].mxu0
  %v1024 = vadd.f32 %v959, %v1023
  %v1025 = vpop.f32.mrb[0].mxu0
  %1026 = vdwg.mxu0
  %v1027 = vpack.c.bf16 %v598, %v595
  %v1028 = vpack.c.bf16 %v606, %v603
  %v1029 = vpack.c.bf16 %v614, %v611
  %v1030 = vpack.c.bf16 %v622, %v619
  %v1031 = vpack.c.bf16 %v1000, %v997
  %v1032 = vpack.c.bf16 %v1008, %v1005
  %v1033 = vpack.c.bf16 %v1016, %v1013
  %v1034 = vpack.c.bf16 %v1024, %v1021
  %v1035 = vld [vmem:[%s2] sm:$0xf]
  %v1036 = vld [vmem:[%s2 + $0x4] sm:$0xf]
  %v1037 = vld [vmem:[%s2 + $0x8] sm:$0xf]
  %v1038 = vld [vmem:[%s2 + $0xc] sm:$0xf]
  %v1039 = vld [vmem:[%s2 + $0x10] sm:$0xf]
  %v1040 = vld [vmem:[%s2 + $0x14] sm:$0xf]
  %v1041 = vld [vmem:[%s2 + $0x18] sm:$0xf]
  %v1042 = vld [vmem:[%s2 + $0x1c] sm:$0xf]
  %v1043 = vld [vmem:[%s2 + $0x20] sm:$0xf]
  %v1044 = vld [vmem:[%s2 + $0x24] sm:$0xf]
  %v1045 = vld [vmem:[%s2 + $0x28] sm:$0xf]
  %v1046 = vld [vmem:[%s2 + $0x2c] sm:$0xf]
  %v1047 = vld [vmem:[%s2 + $0x30] sm:$0xf]
  %v1048 = vld [vmem:[%s2 + $0x34] sm:$0xf]
  %v1049 = vld [vmem:[%s2 + $0x38] sm:$0xf]
  %v1050 = vld [vmem:[%s2 + $0x3c] sm:$0xf]
  %v1051 = vld [vmem:[%s3] sm:$0xf]
  %v1052 = vld [vmem:[%s3 + $0x4] sm:$0xf]
  %v1053 = vld [vmem:[%s3 + $0x8] sm:$0xf]
  %v1054 = vld [vmem:[%s3 + $0xc] sm:$0xf]
  %v1055 = vld [vmem:[%s3 + $0x10] sm:$0xf]
  %v1056 = vld [vmem:[%s3 + $0x14] sm:$0xf]
  %v1057 = vld [vmem:[%s3 + $0x18] sm:$0xf]
  %v1058 = vld [vmem:[%s3 + $0x1c] sm:$0xf]
  %v1059 = vld [vmem:[%s3 + $0x20] sm:$0xf]
  %v1060 = vld [vmem:[%s3 + $0x24] sm:$0x7]
  %v1061 = vld [vmem:[%s4] sm:$0xf]
  %v1062 = vld [vmem:[%s4 + $0x4] sm:$0xf]
  %v1063 = vld [vmem:[%s4 + $0x8] sm:$0xf]
  %v1064 = vld [vmem:[%s4 + $0xc] sm:$0xf]
  %v1065 = vld [vmem:[%s4 + $0x10] sm:$0xf]
  %v1066 = vld [vmem:[%s4 + $0x14] sm:$0xf]
  %v1067 = vld [vmem:[%s4 + $0x18] sm:$0xf]
  %v1068 = vld [vmem:[%s4 + $0x1c] sm:$0xf]
  %v1077 = vunpack.c.l.b16 %v1061
  %v1078 = vunpack.c.l.b16 %v1062
  %v1079 = vunpack.c.l.b16 %v1063
  %v1080 = vunpack.c.l.b16 %v1064
  %v1081 = vunpack.c.l.b16 %v1065
  %v1082 = vunpack.c.l.b16 %v1066
  %v1083 = vunpack.c.l.b16 %v1067
  %v1084 = vunpack.c.l.b16 %v1068
  %v1085 = vpack.c.b16 %v1078, %v1077
  %v1086 = vpack.c.b16 %v1080, %v1079
  %v1087 = vpack.c.b16 %v1082, %v1081
  %v1088 = vpack.c.b16 %v1084, %v1083
  %vm1093 = vcmask 523264
  %v1095 = vsel %vm1093, %v1027, 0
  %v1098 = vsel %vm1093, %v1028, 0
  %v1101 = vsel %vm1093, %v1029, 0
  %v1104 = vsel %vm1093, %v1030, 0
  %v1107 = vsel %vm1093, %v1031, 0
  %v1110 = vsel %vm1093, %v1032, 0
  %v1113 = vsel %vm1093, %v1033, 0
  %v1116 = vsel %vm1093, %v1034, 0
  %1118 = vmatprep.subr.bf16.mxu0 0
  %1119 = vmatpush1.bf16.msra.mxu0 %v1085
  %1120 = vmatprep.subr.bf16.mxu0 0
  %1121 = vmatpush1.bf16.msra.mxu0 %v1086
  %1122 = vmatprep.subr.bf16.mxu0 0
  %1123 = vmatpush1.bf16.msra.mxu0 %v1087
  %1124 = vmatprep.subr.bf16.mxu0 0
  %1125 = vmatpush1.bf16.msra.mxu0 %v1088
  %1126 = vmatprep.subr.bf16.mxu0 0
  %1127 = vmatpush1.bf16.msra.mxu0 0
  %1128 = vmatprep.subr.bf16.mxu0 0
  %1129 = vmatpush1.bf16.msra.mxu0 0
  %1130 = vmatprep.subr.bf16.mxu0 0
  %1131 = vmatpush1.bf16.msra.mxu0 0
  %1132 = vmatprep.subr.bf16.mxu0 0
  %1133 = vmatpush1.bf16.msra.mxu0 0
  %1134 = vmatprep.subr.bf16.mxu0 0
  %1135 = vmatpush1.bf16.msra.mxu0 0
  %1136 = vmatprep.subr.bf16.mxu0 0
  %1137 = vmatpush1.bf16.msra.mxu0 0
  %1138 = vmatprep.subr.bf16.mxu0 0
  %1139 = vmatpush1.bf16.msra.mxu0 0
  %1140 = vmatprep.subr.bf16.mxu0 0
  %1141 = vmatpush1.bf16.msra.mxu0 0
  %1142 = vmatprep.subr.bf16.mxu0 0
  %1143 = vmatpush1.bf16.msra.mxu0 0
  %1144 = vmatprep.subr.bf16.mxu0 0
  %1145 = vmatpush1.bf16.msra.mxu0 0
  %1146 = vmatprep.subr.bf16.mxu0 0
  %1147 = vmatpush1.bf16.msra.mxu0 0
  %1148 = vmatprep.subr.bf16.mxu0 0
  %1149 = vmatpush1.bf16.msra.mxu0 0
  %1150 = vmatprep.mubr.bf16.mxu0 0
  %1151 = vmatmul.mubr.bf16.gmra.mrb[0].mxu0 %v1095
  %v1152 = vpop.f32.mrb[0].mxu0
  %v1153 = vadd.f32 0.0, %v1152
  %v1154 = vpop.f32.mrb[0].mxu0
  %v1155 = vpop.f32.mrb[0].mxu0
  %v1156 = vadd.f32 0.0, %v1155
  %v1157 = vpop.f32.mrb[0].mxu0
  %1158 = vmatprep.mubr.bf16.mxu0 0
  %1159 = vmatmul.mubr.bf16.gmra.mrb[0].mxu0 %v1098
  %v1160 = vpop.f32.mrb[0].mxu0
  %v1161 = vadd.f32 0.0, %v1160
  %v1162 = vpop.f32.mrb[0].mxu0
  %v1163 = vpop.f32.mrb[0].mxu0
  %v1164 = vadd.f32 0.0, %v1163
  %v1165 = vpop.f32.mrb[0].mxu0
  %1166 = vmatprep.mubr.bf16.mxu0 0
  %1167 = vmatmul.mubr.bf16.gmra.mrb[0].mxu0 %v1101
  %v1168 = vpop.f32.mrb[0].mxu0
  %v1169 = vadd.f32 0.0, %v1168
  %v1170 = vpop.f32.mrb[0].mxu0
  %v1171 = vpop.f32.mrb[0].mxu0
  %v1172 = vadd.f32 0.0, %v1171
  %v1173 = vpop.f32.mrb[0].mxu0
  %1174 = vmatprep.mubr.bf16.mxu0 0
  %1175 = vmatmul.mubr.bf16.gmra.mrb[0].mxu0 %v1104
  %v1176 = vpop.f32.mrb[0].mxu0
  %v1177 = vadd.f32 0.0, %v1176
  %v1178 = vpop.f32.mrb[0].mxu0
  %v1179 = vpop.f32.mrb[0].mxu0
  %v1180 = vadd.f32 0.0, %v1179
  %v1181 = vpop.f32.mrb[0].mxu0
  %1182 = vmatprep.mubr.bf16.mxu0 0
  %1183 = vmatmul.mubr.bf16.gmra.mrb[0].mxu0 %v1107
  %v1184 = vpop.f32.mrb[0].mxu0
  %v1185 = vadd.f32 0.0, %v1184
  %v1186 = vpop.f32.mrb[0].mxu0
  %v1187 = vpop.f32.mrb[0].mxu0
  %v1188 = vadd.f32 0.0, %v1187
  %v1189 = vpop.f32.mrb[0].mxu0
  %1190 = vmatprep.mubr.bf16.mxu0 0
  %1191 = vmatmul.mubr.bf16.gmra.mrb[0].mxu0 %v1110
  %v1192 = vpop.f32.mrb[0].mxu0
  %v1193 = vadd.f32 0.0, %v1192
  %v1194 = vpop.f32.mrb[0].mxu0
  %v1195 = vpop.f32.mrb[0].mxu0
  %v1196 = vadd.f32 0.0, %v1195
  %v1197 = vpop.f32.mrb[0].mxu0
  %1198 = vmatprep.mubr.bf16.mxu0 0
  %1199 = vmatmul.mubr.bf16.gmra.mrb[0].mxu0 %v1113
  %v1200 = vpop.f32.mrb[0].mxu0
  %v1201 = vadd.f32 0.0, %v1200
  %v1202 = vpop.f32.mrb[0].mxu0
  %v1203 = vpop.f32.mrb[0].mxu0
  %v1204 = vadd.f32 0.0, %v1203
  %v1205 = vpop.f32.mrb[0].mxu0
  %1206 = vmatprep.mubr.bf16.mxu0 0
  %1207 = vmatmul.mubr.bf16.gmra.mrb[0].mxu0 %v1116
  %v1208 = vpop.f32.mrb[0].mxu0
  %v1209 = vadd.f32 0.0, %v1208
  %v1210 = vpop.f32.mrb[0].mxu0
  %v1211 = vpop.f32.mrb[0].mxu0
  %v1212 = vadd.f32 0.0, %v1211
  %v1213 = vpop.f32.mrb[0].mxu0
  %1214 = vdwg.mxu0
  %v1231 = vunpack.c.l.b16 %v1035
  %v1232 = vunpack.c.l.b16 %v1036
  %v1233 = vunpack.c.l.b16 %v1037
  %v1234 = vunpack.c.l.b16 %v1038
  %v1235 = vunpack.c.l.b16 %v1039
  %v1236 = vunpack.c.l.b16 %v1040
  %v1237 = vunpack.c.l.b16 %v1041
  %v1238 = vunpack.c.l.b16 %v1042
  %v1239 = vunpack.c.l.b16 %v1043
  %v1240 = vunpack.c.l.b16 %v1044
  %v1241 = vunpack.c.l.b16 %v1045
  %v1242 = vunpack.c.l.b16 %v1046
  %v1243 = vunpack.c.l.b16 %v1047
  %v1244 = vunpack.c.l.b16 %v1048
  %v1245 = vunpack.c.l.b16 %v1049
  %v1246 = vunpack.c.l.b16 %v1050
  %v1247 = vpack.c.b16 %v1232, %v1231
  %v1248 = vpack.c.b16 %v1234, %v1233
  %v1249 = vpack.c.b16 %v1236, %v1235
  %v1250 = vpack.c.b16 %v1238, %v1237
  %v1251 = vpack.c.b16 %v1240, %v1239
  %v1252 = vpack.c.b16 %v1242, %v1241
  %v1253 = vpack.c.b16 %v1244, %v1243
  %v1254 = vpack.c.b16 %v1246, %v1245
  %v1265 = vunpack.c.l.b16 %v1051
  %v1266 = vunpack.c.l.b16 %v1052
  %v1267 = vunpack.c.l.b16 %v1053
  %v1268 = vunpack.c.l.b16 %v1054
  %v1269 = vunpack.c.l.b16 %v1055
  %v1270 = vunpack.c.l.b16 %v1056
  %v1271 = vunpack.c.l.b16 %v1057
  %v1272 = vunpack.c.l.b16 %v1058
  %v1273 = vunpack.c.l.b16 %v1059
  %v1274 = vunpack.c.l.b16 %v1060
  %v1275 = vpack.c.b16 %v1266, %v1265
  %v1276 = vpack.c.b16 %v1268, %v1267
  %v1277 = vpack.c.b16 %v1270, %v1269
  %v1278 = vpack.c.b16 %v1272, %v1271
  %v1279 = vpack.c.b16 %v1274, %v1273
  %vm1284 = vcmask 637952
  %v1286 = vsel %vm1284, %v1247, 0
  %v1289 = vsel %vm1284, %v1248, 0
  %v1292 = vsel %vm1284, %v1249, 0
  %v1295 = vsel %vm1284, %v1250, 0
  %v1298 = vsel %vm1284, %v1251, 0
  %v1301 = vsel %vm1284, %v1252, 0
  %v1304 = vsel %vm1284, %v1253, 0
  %v1307 = vsel %vm1284, %v1254, 0
  %vm1309 = vcmask 1046528
  %v1311 = vsel %vm1309, %v1279, 0
  %1313 = vmatprep.subr.bf16.mxu0 0
  %1314 = vmatpush1.bf16.msra.mxu0 %v1275
  %1315 = vmatprep.subr.bf16.mxu0 0
  %1316 = vmatpush1.bf16.msra.mxu0 %v1276
  %1317 = vmatprep.subr.bf16.mxu0 0
  %1318 = vmatpush1.bf16.msra.mxu0 %v1277
  %1319 = vmatprep.subr.bf16.mxu0 0
  %1320 = vmatpush1.bf16.msra.mxu0 %v1278
  %1321 = vmatprep.subr.bf16.mxu0 0
  %1322 = vmatpush1.bf16.msra.mxu0 %v1311
  %1323 = vmatprep.subr.bf16.mxu0 0
  %1324 = vmatpush1.bf16.msra.mxu0 0
  %1325 = vmatprep.subr.bf16.mxu0 0
  %1326 = vmatpush1.bf16.msra.mxu0 0
  %1327 = vmatprep.subr.bf16.mxu0 0
  %1328 = vmatpush1.bf16.msra.mxu0 0
  %1329 = vmatprep.subr.bf16.mxu0 0
  %1330 = vmatpush1.bf16.msra.mxu0 0
  %1331 = vmatprep.subr.bf16.mxu0 0
  %1332 = vmatpush1.bf16.msra.mxu0 0
  %1333 = vmatprep.subr.bf16.mxu0 0
  %1334 = vmatpush1.bf16.msra.mxu0 0
  %1335 = vmatprep.subr.bf16.mxu0 0
  %1336 = vmatpush1.bf16.msra.mxu0 0
  %1337 = vmatprep.subr.bf16.mxu0 0
  %1338 = vmatpush1.bf16.msra.mxu0 0
  %1339 = vmatprep.subr.bf16.mxu0 0
  %1340 = vmatpush1.bf16.msra.mxu0 0
  %1341 = vmatprep.subr.bf16.mxu0 0
  %1342 = vmatpush1.bf16.msra.mxu0 0
  %1343 = vmatprep.subr.bf16.mxu0 0
  %1344 = vmatpush1.bf16.msra.mxu0 0
  %1345 = vmatprep.mubr.bf16.mxu0 0
  %1346 = vmatmul.mubr.bf16.gmra.mrb[0].mxu0 %v1286
  %v1347 = vpop.f32.mrb[0].mxu0
  %v1348 = vadd.f32 %v1153, %v1347
  %v1349 = vpop.f32.mrb[0].mxu0
  %v1350 = vpop.f32.mrb[0].mxu0
  %v1351 = vadd.f32 %v1156, %v1350
  %v1352 = vpop.f32.mrb[0].mxu0
  %1353 = vmatprep.mubr.bf16.mxu0 0
  %1354 = vmatmul.mubr.bf16.gmra.mrb[0].mxu0 %v1289
  %v1355 = vpop.f32.mrb[0].mxu0
  %v1356 = vadd.f32 %v1161, %v1355
  %v1357 = vpop.f32.mrb[0].mxu0
  %v1358 = vpop.f32.mrb[0].mxu0
  %v1359 = vadd.f32 %v1164, %v1358
  %v1360 = vpop.f32.mrb[0].mxu0
  %1361 = vmatprep.mubr.bf16.mxu0 0
  %1362 = vmatmul.mubr.bf16.gmra.mrb[0].mxu0 %v1292
  %v1363 = vpop.f32.mrb[0].mxu0
  %v1364 = vadd.f32 %v1169, %v1363
  %v1365 = vpop.f32.mrb[0].mxu0
  %v1366 = vpop.f32.mrb[0].mxu0
  %v1367 = vadd.f32 %v1172, %v1366
  %v1368 = vpop.f32.mrb[0].mxu0
  %1369 = vmatprep.mubr.bf16.mxu0 0
  %1370 = vmatmul.mubr.bf16.gmra.mrb[0].mxu0 %v1295
  %v1371 = vpop.f32.mrb[0].mxu0
  %v1372 = vadd.f32 %v1177, %v1371
  %v1373 = vpop.f32.mrb[0].mxu0
  %v1374 = vpop.f32.mrb[0].mxu0
  %v1375 = vadd.f32 %v1180, %v1374
  %v1376 = vpop.f32.mrb[0].mxu0
  %1377 = vmatprep.mubr.bf16.mxu0 0
  %1378 = vmatmul.mubr.bf16.gmra.mrb[0].mxu0 %v1298
  %v1379 = vpop.f32.mrb[0].mxu0
  %v1380 = vadd.f32 %v1185, %v1379
  %v1381 = vpop.f32.mrb[0].mxu0
  %v1382 = vpop.f32.mrb[0].mxu0
  %v1383 = vadd.f32 %v1188, %v1382
  %v1384 = vpop.f32.mrb[0].mxu0
  %1385 = vmatprep.mubr.bf16.mxu0 0
  %1386 = vmatmul.mubr.bf16.gmra.mrb[0].mxu0 %v1301
  %v1387 = vpop.f32.mrb[0].mxu0
  %v1388 = vadd.f32 %v1193, %v1387
  %v1389 = vpop.f32.mrb[0].mxu0
  %v1390 = vpop.f32.mrb[0].mxu0
  %v1391 = vadd.f32 %v1196, %v1390
  %v1392 = vpop.f32.mrb[0].mxu0
  %1393 = vmatprep.mubr.bf16.mxu0 0
  %1394 = vmatmul.mubr.bf16.gmra.mrb[0].mxu0 %v1304
  %v1395 = vpop.f32.mrb[0].mxu0
  %v1396 = vadd.f32 %v1201, %v1395
  %v1397 = vpop.f32.mrb[0].mxu0
  %v1398 = vpop.f32.mrb[0].mxu0
  %v1399 = vadd.f32 %v1204, %v1398
  %v1400 = vpop.f32.mrb[0].mxu0
  %1401 = vmatprep.mubr.bf16.mxu0 0
  %1402 = vmatmul.mubr.bf16.gmra.mrb[0].mxu0 %v1307
  %v1403 = vpop.f32.mrb[0].mxu0
  %v1404 = vadd.f32 %v1209, %v1403
  %v1405 = vpop.f32.mrb[0].mxu0
  %v1406 = vpop.f32.mrb[0].mxu0
  %v1407 = vadd.f32 %v1212, %v1406
  %v1408 = vpop.f32.mrb[0].mxu0
  %1409 = vdwg.mxu0
  %v1410 = vld [vmem:[%s5] sm:$0x1]
  %v1412 = vlaneseq
  %v1413 = vshrl.u32 %v1412, 7
  %v1414 = vsub.s32 0, %v1413
  %v1415 = vrot.slane %v1410, %v1414
  %v1417 = vadd.f32 %v1348, %v1415
  %v1418 = vadd.f32 %v1351, %v1415
  %v1419 = vadd.f32 %v1356, %v1415
  %v1420 = vadd.f32 %v1359, %v1415
  %v1421 = vadd.f32 %v1364, %v1415
  %v1422 = vadd.f32 %v1367, %v1415
  %v1423 = vadd.f32 %v1372, %v1415
  %v1424 = vadd.f32 %v1375, %v1415
  %v1425 = vadd.f32 %v1380, %v1415
  %v1426 = vadd.f32 %v1383, %v1415
  %v1427 = vadd.f32 %v1388, %v1415
  %v1428 = vadd.f32 %v1391, %v1415
  %v1429 = vadd.f32 %v1396, %v1415
  %v1430 = vadd.f32 %v1399, %v1415
  %v1431 = vadd.f32 %v1404, %v1415
  %v1432 = vadd.f32 %v1407, %v1415
  %v1433 = vld [vmem:[%s8] sm:$0xf]
  %v1434 = vld [vmem:[%s8 + $0x4] sm:$0xf]
  %v1435 = vld [vmem:[%s8 + $0x8] sm:$0xf]
  %v1436 = vld [vmem:[%s8 + $0xc] sm:$0xf]
  %v1437 = vld [vmem:[%s8 + $0x10] sm:$0xf]
  %v1438 = vld [vmem:[%s8 + $0x14] sm:$0xf]
  %v1439 = vld [vmem:[%s8 + $0x18] sm:$0xf]
  %v1440 = vld [vmem:[%s8 + $0x1c] sm:$0xf]
  %v1441 = vld [vmem:[%s8 + $0x20] sm:$0xf]
  %v1442 = vld [vmem:[%s8 + $0x24] sm:$0xf]
  %v1443 = vld [vmem:[%s8 + $0x28] sm:$0xf]
  %v1444 = vld [vmem:[%s8 + $0x2c] sm:$0xf]
  %v1445 = vld [vmem:[%s8 + $0x30] sm:$0xf]
  %v1446 = vld [vmem:[%s8 + $0x34] sm:$0xf]
  %v1447 = vld [vmem:[%s8 + $0x38] sm:$0xf]
  %v1448 = vld [vmem:[%s8 + $0x3c] sm:$0xf]
  %v1449 = vld [vmem:[%s9] sm:$0x1]
  %v1450 = vld [vmem:[%s10] sm:$0xf]
  %v1451 = vld [vmem:[%s10 + $0x4] sm:$0xf]
  %v1452 = vld [vmem:[%s10 + $0x8] sm:$0xf]
  %v1453 = vld [vmem:[%s10 + $0xc] sm:$0xf]
  %v1454 = vld [vmem:[%s10 + $0x10] sm:$0xf]
  %v1455 = vld [vmem:[%s10 + $0x14] sm:$0xf]
  %v1456 = vld [vmem:[%s10 + $0x18] sm:$0xf]
  %v1457 = vld [vmem:[%s10 + $0x1c] sm:$0xf]
  %v1458 = vld [vmem:[%s10 + $0x20] sm:$0xf]
  %v1459 = vld [vmem:[%s10 + $0x24] sm:$0xf]
  %v1460 = vld [vmem:[%s10 + $0x28] sm:$0xf]
  %v1461 = vld [vmem:[%s10 + $0x2c] sm:$0xf]
  %v1462 = vld [vmem:[%s10 + $0x30] sm:$0xf]
  %v1463 = vld [vmem:[%s10 + $0x34] sm:$0xf]
  %v1464 = vld [vmem:[%s10 + $0x38] sm:$0xf]
  %v1465 = vld [vmem:[%s10 + $0x3c] sm:$0xf]
  %v1466 = vld [vmem:[%s11] sm:$0x1]
  %v1467 = vmax.f32 %v1417, 0.0
  %v1468 = vmax.f32 %v1418, 0.0
  %v1469 = vmax.f32 %v1419, 0.0
  %v1470 = vmax.f32 %v1420, 0.0
  %v1471 = vmax.f32 %v1421, 0.0
  %v1472 = vmax.f32 %v1422, 0.0
  %v1473 = vmax.f32 %v1423, 0.0
  %v1474 = vmax.f32 %v1424, 0.0
  %v1475 = vmax.f32 %v1425, 0.0
  %v1476 = vmax.f32 %v1426, 0.0
  %v1477 = vmax.f32 %v1427, 0.0
  %v1478 = vmax.f32 %v1428, 0.0
  %v1479 = vmax.f32 %v1429, 0.0
  %v1480 = vmax.f32 %v1430, 0.0
  %v1481 = vmax.f32 %v1431, 0.0
  %v1482 = vmax.f32 %v1432, 0.0
  %v1483 = vpack.c.bf16 %v1468, %v1467
  %v1484 = vpack.c.bf16 %v1470, %v1469
  %v1485 = vpack.c.bf16 %v1472, %v1471
  %v1486 = vpack.c.bf16 %v1474, %v1473
  %v1487 = vpack.c.bf16 %v1476, %v1475
  %v1488 = vpack.c.bf16 %v1478, %v1477
  %v1489 = vpack.c.bf16 %v1480, %v1479
  %v1490 = vpack.c.bf16 %v1482, %v1481
  %v1492 = vlaneseq
  %v1493 = vshrl.u32 %v1492, 7
  %v1494 = vsub.s32 0, %v1493
  %v1495 = vrot.slane %v1449, %v1494
  %v1513 = vunpack.c.l.b16 %v1433
  %v1514 = vunpack.c.l.b16 %v1434
  %v1515 = vunpack.c.l.b16 %v1435
  %v1516 = vunpack.c.l.b16 %v1436
  %v1517 = vunpack.c.l.b16 %v1437
  %v1518 = vunpack.c.l.b16 %v1438
  %v1519 = vunpack.c.l.b16 %v1439
  %v1520 = vunpack.c.l.b16 %v1440
  %v1521 = vunpack.c.l.b16 %v1441
  %v1522 = vunpack.c.l.b16 %v1442
  %v1523 = vunpack.c.l.b16 %v1443
  %v1524 = vunpack.c.l.b16 %v1444
  %v1525 = vunpack.c.l.b16 %v1445
  %v1526 = vunpack.c.l.b16 %v1446
  %v1527 = vunpack.c.l.b16 %v1447
  %v1528 = vunpack.c.l.b16 %v1448
  %v1529 = vpack.c.b16 %v1514, %v1513
  %v1530 = vpack.c.b16 %v1516, %v1515
  %v1531 = vpack.c.b16 %v1518, %v1517
  %v1532 = vpack.c.b16 %v1520, %v1519
  %v1533 = vpack.c.b16 %v1522, %v1521
  %v1534 = vpack.c.b16 %v1524, %v1523
  %v1535 = vpack.c.b16 %v1526, %v1525
  %v1536 = vpack.c.b16 %v1528, %v1527
  %1545 = vmatprep.subr.bf16.mxu0 0
  %1546 = vmatpush1.bf16.msra.mxu0 %v1529
  %1547 = vmatprep.subr.bf16.mxu0 0
  %1548 = vmatpush1.bf16.msra.mxu0 %v1530
  %1549 = vmatprep.subr.bf16.mxu0 0
  %1550 = vmatpush1.bf16.msra.mxu0 %v1531
  %1551 = vmatprep.subr.bf16.mxu0 0
  %1552 = vmatpush1.bf16.msra.mxu0 %v1532
  %1553 = vmatprep.subr.bf16.mxu0 0
  %1554 = vmatpush1.bf16.msra.mxu0 %v1533
  %1555 = vmatprep.subr.bf16.mxu0 0
  %1556 = vmatpush1.bf16.msra.mxu0 %v1534
  %1557 = vmatprep.subr.bf16.mxu0 0
  %1558 = vmatpush1.bf16.msra.mxu0 %v1535
  %1559 = vmatprep.subr.bf16.mxu0 0
  %1560 = vmatpush1.bf16.msra.mxu0 %v1536
  %1561 = vmatprep.subr.bf16.mxu0 0
  %1562 = vmatpush1.bf16.msra.mxu0 0
  %1563 = vmatprep.subr.bf16.mxu0 0
  %1564 = vmatpush1.bf16.msra.mxu0 0
  %1565 = vmatprep.subr.bf16.mxu0 0
  %1566 = vmatpush1.bf16.msra.mxu0 0
  %1567 = vmatprep.subr.bf16.mxu0 0
  %1568 = vmatpush1.bf16.msra.mxu0 0
  %1569 = vmatprep.subr.bf16.mxu0 0
  %1570 = vmatpush1.bf16.msra.mxu0 0
  %1571 = vmatprep.subr.bf16.mxu0 0
  %1572 = vmatpush1.bf16.msra.mxu0 0
  %1573 = vmatprep.subr.bf16.mxu0 0
  %1574 = vmatpush1.bf16.msra.mxu0 0
  %1575 = vmatprep.subr.bf16.mxu0 0
  %1576 = vmatpush1.bf16.msra.mxu0 0
  %1577 = vmatprep.mubr.bf16.mxu0 0
  %1578 = vmatmul.mubr.bf16.gmra.mrb[0].mxu0 %v1483
  %v1579 = vpop.f32.mrb[0].mxu0
  %v1580 = vadd.f32 %v1495, %v1579
  %v1581 = vpop.f32.mrb[0].mxu0
  %v1582 = vpop.f32.mrb[0].mxu0
  %v1583 = vadd.f32 %v1495, %v1582
  %v1584 = vpop.f32.mrb[0].mxu0
  %1585 = vmatprep.mubr.bf16.mxu0 0
  %1586 = vmatmul.mubr.bf16.gmra.mrb[0].mxu0 %v1484
  %v1587 = vpop.f32.mrb[0].mxu0
  %v1588 = vadd.f32 %v1495, %v1587
  %v1589 = vpop.f32.mrb[0].mxu0
  %v1590 = vpop.f32.mrb[0].mxu0
  %v1591 = vadd.f32 %v1495, %v1590
  %v1592 = vpop.f32.mrb[0].mxu0
  %1593 = vmatprep.mubr.bf16.mxu0 0
  %1594 = vmatmul.mubr.bf16.gmra.mrb[0].mxu0 %v1485
  %v1595 = vpop.f32.mrb[0].mxu0
  %v1596 = vadd.f32 %v1495, %v1595
  %v1597 = vpop.f32.mrb[0].mxu0
  %v1598 = vpop.f32.mrb[0].mxu0
  %v1599 = vadd.f32 %v1495, %v1598
  %v1600 = vpop.f32.mrb[0].mxu0
  %1601 = vmatprep.mubr.bf16.mxu0 0
  %1602 = vmatmul.mubr.bf16.gmra.mrb[0].mxu0 %v1486
  %v1603 = vpop.f32.mrb[0].mxu0
  %v1604 = vadd.f32 %v1495, %v1603
  %v1605 = vpop.f32.mrb[0].mxu0
  %v1606 = vpop.f32.mrb[0].mxu0
  %v1607 = vadd.f32 %v1495, %v1606
  %v1608 = vpop.f32.mrb[0].mxu0
  %1609 = vmatprep.mubr.bf16.mxu0 0
  %1610 = vmatmul.mubr.bf16.gmra.mrb[0].mxu0 %v1487
  %v1611 = vpop.f32.mrb[0].mxu0
  %v1612 = vadd.f32 %v1495, %v1611
  %v1613 = vpop.f32.mrb[0].mxu0
  %v1614 = vpop.f32.mrb[0].mxu0
  %v1615 = vadd.f32 %v1495, %v1614
  %v1616 = vpop.f32.mrb[0].mxu0
  %1617 = vmatprep.mubr.bf16.mxu0 0
  %1618 = vmatmul.mubr.bf16.gmra.mrb[0].mxu0 %v1488
  %v1619 = vpop.f32.mrb[0].mxu0
  %v1620 = vadd.f32 %v1495, %v1619
  %v1621 = vpop.f32.mrb[0].mxu0
  %v1622 = vpop.f32.mrb[0].mxu0
  %v1623 = vadd.f32 %v1495, %v1622
  %v1624 = vpop.f32.mrb[0].mxu0
  %1625 = vmatprep.mubr.bf16.mxu0 0
  %1626 = vmatmul.mubr.bf16.gmra.mrb[0].mxu0 %v1489
  %v1627 = vpop.f32.mrb[0].mxu0
  %v1628 = vadd.f32 %v1495, %v1627
  %v1629 = vpop.f32.mrb[0].mxu0
  %v1630 = vpop.f32.mrb[0].mxu0
  %v1631 = vadd.f32 %v1495, %v1630
  %v1632 = vpop.f32.mrb[0].mxu0
  %1633 = vmatprep.mubr.bf16.mxu0 0
  %1634 = vmatmul.mubr.bf16.gmra.mrb[0].mxu0 %v1490
  %v1635 = vpop.f32.mrb[0].mxu0
  %v1636 = vadd.f32 %v1495, %v1635
  %v1637 = vpop.f32.mrb[0].mxu0
  %v1638 = vpop.f32.mrb[0].mxu0
  %v1639 = vadd.f32 %v1495, %v1638
  %v1640 = vpop.f32.mrb[0].mxu0
  %1641 = vdwg.mxu0
  %v1642 = vmax.f32 %v1580, 0.0
  %v1643 = vmax.f32 %v1583, 0.0
  %v1644 = vmax.f32 %v1588, 0.0
  %v1645 = vmax.f32 %v1591, 0.0
  %v1646 = vmax.f32 %v1596, 0.0
  %v1647 = vmax.f32 %v1599, 0.0
  %v1648 = vmax.f32 %v1604, 0.0
  %v1649 = vmax.f32 %v1607, 0.0
  %v1650 = vmax.f32 %v1612, 0.0
  %v1651 = vmax.f32 %v1615, 0.0
  %v1652 = vmax.f32 %v1620, 0.0
  %v1653 = vmax.f32 %v1623, 0.0
  %v1654 = vmax.f32 %v1628, 0.0
  %v1655 = vmax.f32 %v1631, 0.0
  %v1656 = vmax.f32 %v1636, 0.0
  %v1657 = vmax.f32 %v1639, 0.0
  %v1658 = vpack.c.bf16 %v1643, %v1642
  %v1659 = vpack.c.bf16 %v1645, %v1644
  %v1660 = vpack.c.bf16 %v1647, %v1646
  %v1661 = vpack.c.bf16 %v1649, %v1648
  %v1662 = vpack.c.bf16 %v1651, %v1650
  %v1663 = vpack.c.bf16 %v1653, %v1652
  %v1664 = vpack.c.bf16 %v1655, %v1654
  %v1665 = vpack.c.bf16 %v1657, %v1656
  %v1667 = vlaneseq
  %v1668 = vshrl.u32 %v1667, 7
  %v1669 = vsub.s32 0, %v1668
  %v1670 = vrot.slane %v1466, %v1669
  %v1688 = vunpack.c.l.b16 %v1450
  %v1689 = vunpack.c.l.b16 %v1451
  %v1690 = vunpack.c.l.b16 %v1452
  %v1691 = vunpack.c.l.b16 %v1453
  %v1692 = vunpack.c.l.b16 %v1454
  %v1693 = vunpack.c.l.b16 %v1455
  %v1694 = vunpack.c.l.b16 %v1456
  %v1695 = vunpack.c.l.b16 %v1457
  %v1696 = vunpack.c.l.b16 %v1458
  %v1697 = vunpack.c.l.b16 %v1459
  %v1698 = vunpack.c.l.b16 %v1460
  %v1699 = vunpack.c.l.b16 %v1461
  %v1700 = vunpack.c.l.b16 %v1462
  %v1701 = vunpack.c.l.b16 %v1463
  %v1702 = vunpack.c.l.b16 %v1464
  %v1703 = vunpack.c.l.b16 %v1465
  %v1704 = vpack.c.b16 %v1689, %v1688
  %v1705 = vpack.c.b16 %v1691, %v1690
  %v1706 = vpack.c.b16 %v1693, %v1692
  %v1707 = vpack.c.b16 %v1695, %v1694
  %v1708 = vpack.c.b16 %v1697, %v1696
  %v1709 = vpack.c.b16 %v1699, %v1698
  %v1710 = vpack.c.b16 %v1701, %v1700
  %v1711 = vpack.c.b16 %v1703, %v1702
  %1720 = vmatprep.subr.bf16.mxu0 0
  %1721 = vmatpush1.bf16.msra.mxu0 %v1704
  %1722 = vmatprep.subr.bf16.mxu0 0
  %1723 = vmatpush1.bf16.msra.mxu0 %v1705
  %1724 = vmatprep.subr.bf16.mxu0 0
  %1725 = vmatpush1.bf16.msra.mxu0 %v1706
  %1726 = vmatprep.subr.bf16.mxu0 0
  %1727 = vmatpush1.bf16.msra.mxu0 %v1707
  %1728 = vmatprep.subr.bf16.mxu0 0
  %1729 = vmatpush1.bf16.msra.mxu0 %v1708
  %1730 = vmatprep.subr.bf16.mxu0 0
  %1731 = vmatpush1.bf16.msra.mxu0 %v1709
  %1732 = vmatprep.subr.bf16.mxu0 0
  %1733 = vmatpush1.bf16.msra.mxu0 %v1710
  %1734 = vmatprep.subr.bf16.mxu0 0
  %1735 = vmatpush1.bf16.msra.mxu0 %v1711
  %1736 = vmatprep.subr.bf16.mxu0 0
  %1737 = vmatpush1.bf16.msra.mxu0 0
  %1738 = vmatprep.subr.bf16.mxu0 0
  %1739 = vmatpush1.bf16.msra.mxu0 0
  %1740 = vmatprep.subr.bf16.mxu0 0
  %1741 = vmatpush1.bf16.msra.mxu0 0
  %1742 = vmatprep.subr.bf16.mxu0 0
  %1743 = vmatpush1.bf16.msra.mxu0 0
  %1744 = vmatprep.subr.bf16.mxu0 0
  %1745 = vmatpush1.bf16.msra.mxu0 0
  %1746 = vmatprep.subr.bf16.mxu0 0
  %1747 = vmatpush1.bf16.msra.mxu0 0
  %1748 = vmatprep.subr.bf16.mxu0 0
  %1749 = vmatpush1.bf16.msra.mxu0 0
  %1750 = vmatprep.subr.bf16.mxu0 0
  %1751 = vmatpush1.bf16.msra.mxu0 0
  %1752 = vmatprep.mubr.bf16.mxu0 0
  %1753 = vmatmul.mubr.bf16.gmra.mrb[0].mxu0 %v1658
  %v1754 = vpop.f32.mrb[0].mxu0
  %v1755 = vadd.f32 %v1670, %v1754
  %v1756 = vpop.f32.mrb[0].mxu0
  %v1757 = vpop.f32.mrb[0].mxu0
  %v1758 = vadd.f32 %v1670, %v1757
  %v1759 = vpop.f32.mrb[0].mxu0
  %1760 = vmatprep.mubr.bf16.mxu0 0
  %1761 = vmatmul.mubr.bf16.gmra.mrb[0].mxu0 %v1659
  %v1762 = vpop.f32.mrb[0].mxu0
  %v1763 = vadd.f32 %v1670, %v1762
  %v1764 = vpop.f32.mrb[0].mxu0
  %v1765 = vpop.f32.mrb[0].mxu0
  %v1766 = vadd.f32 %v1670, %v1765
  %v1767 = vpop.f32.mrb[0].mxu0
  %1768 = vmatprep.mubr.bf16.mxu0 0
  %1769 = vmatmul.mubr.bf16.gmra.mrb[0].mxu0 %v1660
  %v1770 = vpop.f32.mrb[0].mxu0
  %v1771 = vadd.f32 %v1670, %v1770
  %v1772 = vpop.f32.mrb[0].mxu0
  %v1773 = vpop.f32.mrb[0].mxu0
  %v1774 = vadd.f32 %v1670, %v1773
  %v1775 = vpop.f32.mrb[0].mxu0
  %1776 = vmatprep.mubr.bf16.mxu0 0
  %1777 = vmatmul.mubr.bf16.gmra.mrb[0].mxu0 %v1661
  %v1778 = vpop.f32.mrb[0].mxu0
  %v1779 = vadd.f32 %v1670, %v1778
  %v1780 = vpop.f32.mrb[0].mxu0
  %v1781 = vpop.f32.mrb[0].mxu0
  %v1782 = vadd.f32 %v1670, %v1781
  %v1783 = vpop.f32.mrb[0].mxu0
  %1784 = vmatprep.mubr.bf16.mxu0 0
  %1785 = vmatmul.mubr.bf16.gmra.mrb[0].mxu0 %v1662
  %v1786 = vpop.f32.mrb[0].mxu0
  %v1787 = vadd.f32 %v1670, %v1786
  %v1788 = vpop.f32.mrb[0].mxu0
  %v1789 = vpop.f32.mrb[0].mxu0
  %v1790 = vadd.f32 %v1670, %v1789
  %v1791 = vpop.f32.mrb[0].mxu0
  %1792 = vmatprep.mubr.bf16.mxu0 0
  %1793 = vmatmul.mubr.bf16.gmra.mrb[0].mxu0 %v1663
  %v1794 = vpop.f32.mrb[0].mxu0
  %v1795 = vadd.f32 %v1670, %v1794
  %v1796 = vpop.f32.mrb[0].mxu0
  %v1797 = vpop.f32.mrb[0].mxu0
  %v1798 = vadd.f32 %v1670, %v1797
  %v1799 = vpop.f32.mrb[0].mxu0
  %1800 = vmatprep.mubr.bf16.mxu0 0
  %1801 = vmatmul.mubr.bf16.gmra.mrb[0].mxu0 %v1664
  %v1802 = vpop.f32.mrb[0].mxu0
  %v1803 = vadd.f32 %v1670, %v1802
  %v1804 = vpop.f32.mrb[0].mxu0
  %v1805 = vpop.f32.mrb[0].mxu0
  %v1806 = vadd.f32 %v1670, %v1805
  %v1807 = vpop.f32.mrb[0].mxu0
  %1808 = vmatprep.mubr.bf16.mxu0 0
  %1809 = vmatmul.mubr.bf16.gmra.mrb[0].mxu0 %v1665
  %v1810 = vpop.f32.mrb[0].mxu0
  %v1811 = vadd.f32 %v1670, %v1810
  %v1812 = vpop.f32.mrb[0].mxu0
  %v1813 = vpop.f32.mrb[0].mxu0
  %v1814 = vadd.f32 %v1670, %v1813
  %v1815 = vpop.f32.mrb[0].mxu0
  %1816 = vdwg.mxu0
  %v1817 = vadd.f32 %v1417, %v1755
  %v1818 = vadd.f32 %v1418, %v1758
  %v1819 = vadd.f32 %v1419, %v1763
  %v1820 = vadd.f32 %v1420, %v1766
  %v1821 = vadd.f32 %v1421, %v1771
  %v1822 = vadd.f32 %v1422, %v1774
  %v1823 = vadd.f32 %v1423, %v1779
  %v1824 = vadd.f32 %v1424, %v1782
  %v1825 = vadd.f32 %v1425, %v1787
  %v1826 = vadd.f32 %v1426, %v1790
  %v1827 = vadd.f32 %v1427, %v1795
  %v1828 = vadd.f32 %v1428, %v1798
  %v1829 = vadd.f32 %v1429, %v1803
  %v1830 = vadd.f32 %v1430, %v1806
  %v1831 = vadd.f32 %v1431, %v1811
  %v1832 = vadd.f32 %v1432, %v1814
  %v1833 = vld [vmem:[%s6] sm:$0xf]
  %v1834 = vld [vmem:[%s6 + $0x4] sm:$0xf]
  %v1835 = vld [vmem:[%s6 + $0x8] sm:$0xf]
  %v1836 = vld [vmem:[%s6 + $0xc] sm:$0xf]
  %v1837 = vld [vmem:[%s6 + $0x10] sm:$0xf]
  %v1838 = vld [vmem:[%s6 + $0x14] sm:$0xf]
  %v1839 = vld [vmem:[%s6 + $0x18] sm:$0xf]
  %v1840 = vld [vmem:[%s6 + $0x1c] sm:$0xf]
  %v1849 = vunpack.c.l.b16 %v1833
  %v1850 = vunpack.c.l.b16 %v1834
  %v1851 = vunpack.c.l.b16 %v1835
  %v1852 = vunpack.c.l.b16 %v1836
  %v1853 = vunpack.c.l.b16 %v1837
  %v1854 = vunpack.c.l.b16 %v1838
  %v1855 = vunpack.c.l.b16 %v1839
  %v1856 = vunpack.c.l.b16 %v1840
  %v1857 = vpack.c.b16 %v1850, %v1849
  %v1858 = vpack.c.b16 %v1852, %v1851
  %v1859 = vpack.c.b16 %v1854, %v1853
  %v1860 = vpack.c.b16 %v1856, %v1855
  %1865 = vmatprep.subr.bf16.mxu0 0
  %1866 = vmatpush1.bf16.msra.mxu0 %v1857
  %1867 = vmatprep.subr.bf16.mxu0 0
  %1868 = vmatpush1.bf16.msra.mxu0 %v1858
  %1869 = vmatprep.subr.bf16.mxu0 0
  %1870 = vmatpush1.bf16.msra.mxu0 %v1859
  %1871 = vmatprep.subr.bf16.mxu0 0
  %1872 = vmatpush1.bf16.msra.mxu0 %v1860
  %1873 = vmatprep.subr.bf16.mxu0 0
  %1874 = vmatpush1.bf16.msra.mxu0 0
  %1875 = vmatprep.subr.bf16.mxu0 0
  %1876 = vmatpush1.bf16.msra.mxu0 0
  %1877 = vmatprep.subr.bf16.mxu0 0
  %1878 = vmatpush1.bf16.msra.mxu0 0
  %1879 = vmatprep.subr.bf16.mxu0 0
  %1880 = vmatpush1.bf16.msra.mxu0 0
  %1881 = vmatprep.subr.bf16.mxu0 0
  %1882 = vmatpush1.bf16.msra.mxu0 0
  %1883 = vmatprep.subr.bf16.mxu0 0
  %1884 = vmatpush1.bf16.msra.mxu0 0
  %1885 = vmatprep.subr.bf16.mxu0 0
  %1886 = vmatpush1.bf16.msra.mxu0 0
  %1887 = vmatprep.subr.bf16.mxu0 0
  %1888 = vmatpush1.bf16.msra.mxu0 0
  %1889 = vmatprep.subr.bf16.mxu0 0
  %1890 = vmatpush1.bf16.msra.mxu0 0
  %1891 = vmatprep.subr.bf16.mxu0 0
  %1892 = vmatpush1.bf16.msra.mxu0 0
  %1893 = vmatprep.subr.bf16.mxu0 0
  %1894 = vmatpush1.bf16.msra.mxu0 0
  %1895 = vmatprep.subr.bf16.mxu0 0
  %1896 = vmatpush1.bf16.msra.mxu0 0
  %1897 = vmatprep.mubr.bf16.mxu0 0
  %1898 = vmatmul.mubr.bf16.gmra.mrb[0].mxu0 %v1095
  %v1899 = vpop.f32.mrb[0].mxu0
  %v1900 = vadd.f32 0.0, %v1899
  %v1901 = vpop.f32.mrb[0].mxu0
  %v1902 = vpop.f32.mrb[0].mxu0
  %v1903 = vadd.f32 0.0, %v1902
  %v1904 = vpop.f32.mrb[0].mxu0
  %1905 = vmatprep.mubr.bf16.mxu0 0
  %1906 = vmatmul.mubr.bf16.gmra.mrb[0].mxu0 %v1098
  %v1907 = vpop.f32.mrb[0].mxu0
  %v1908 = vadd.f32 0.0, %v1907
  %v1909 = vpop.f32.mrb[0].mxu0
  %v1910 = vpop.f32.mrb[0].mxu0
  %v1911 = vadd.f32 0.0, %v1910
  %v1912 = vpop.f32.mrb[0].mxu0
  %1913 = vmatprep.mubr.bf16.mxu0 0
  %1914 = vmatmul.mubr.bf16.gmra.mrb[0].mxu0 %v1101
  %v1915 = vpop.f32.mrb[0].mxu0
  %v1916 = vadd.f32 0.0, %v1915
  %v1917 = vpop.f32.mrb[0].mxu0
  %v1918 = vpop.f32.mrb[0].mxu0
  %v1919 = vadd.f32 0.0, %v1918
  %v1920 = vpop.f32.mrb[0].mxu0
  %1921 = vmatprep.mubr.bf16.mxu0 0
  %1922 = vmatmul.mubr.bf16.gmra.mrb[0].mxu0 %v1104
  %v1923 = vpop.f32.mrb[0].mxu0
  %v1924 = vadd.f32 0.0, %v1923
  %v1925 = vpop.f32.mrb[0].mxu0
  %v1926 = vpop.f32.mrb[0].mxu0
  %v1927 = vadd.f32 0.0, %v1926
  %v1928 = vpop.f32.mrb[0].mxu0
  %1929 = vmatprep.mubr.bf16.mxu0 0
  %1930 = vmatmul.mubr.bf16.gmra.mrb[0].mxu0 %v1107
  %v1931 = vpop.f32.mrb[0].mxu0
  %v1932 = vadd.f32 0.0, %v1931
  %v1933 = vpop.f32.mrb[0].mxu0
  %v1934 = vpop.f32.mrb[0].mxu0
  %v1935 = vadd.f32 0.0, %v1934
  %v1936 = vpop.f32.mrb[0].mxu0
  %1937 = vmatprep.mubr.bf16.mxu0 0
  %1938 = vmatmul.mubr.bf16.gmra.mrb[0].mxu0 %v1110
  %v1939 = vpop.f32.mrb[0].mxu0
  %v1940 = vadd.f32 0.0, %v1939
  %v1941 = vpop.f32.mrb[0].mxu0
  %v1942 = vpop.f32.mrb[0].mxu0
  %v1943 = vadd.f32 0.0, %v1942
  %v1944 = vpop.f32.mrb[0].mxu0
  %1945 = vmatprep.mubr.bf16.mxu0 0
  %1946 = vmatmul.mubr.bf16.gmra.mrb[0].mxu0 %v1113
  %v1947 = vpop.f32.mrb[0].mxu0
  %v1948 = vadd.f32 0.0, %v1947
  %v1949 = vpop.f32.mrb[0].mxu0
  %v1950 = vpop.f32.mrb[0].mxu0
  %v1951 = vadd.f32 0.0, %v1950
  %v1952 = vpop.f32.mrb[0].mxu0
  %1953 = vmatprep.mubr.bf16.mxu0 0
  %1954 = vmatmul.mubr.bf16.gmra.mrb[0].mxu0 %v1116
  %v1955 = vpop.f32.mrb[0].mxu0
  %v1956 = vadd.f32 0.0, %v1955
  %v1957 = vpop.f32.mrb[0].mxu0
  %v1958 = vpop.f32.mrb[0].mxu0
  %v1959 = vadd.f32 0.0, %v1958
  %v1960 = vpop.f32.mrb[0].mxu0
  %1961 = vdwg.mxu0
  %v1962 = vadd.f32 %v1817, %v1900
  %v1963 = vadd.f32 %v1818, %v1903
  %v1964 = vadd.f32 %v1819, %v1908
  %v1965 = vadd.f32 %v1820, %v1911
  %v1966 = vadd.f32 %v1821, %v1916
  %v1967 = vadd.f32 %v1822, %v1919
  %v1968 = vadd.f32 %v1823, %v1924
  %v1969 = vadd.f32 %v1824, %v1927
  %v1970 = vadd.f32 %v1825, %v1932
  %v1971 = vadd.f32 %v1826, %v1935
  %v1972 = vadd.f32 %v1827, %v1940
  %v1973 = vadd.f32 %v1828, %v1943
  %v1974 = vadd.f32 %v1829, %v1948
  %v1975 = vadd.f32 %v1830, %v1951
  %v1976 = vadd.f32 %v1831, %v1956
  %v1977 = vadd.f32 %v1832, %v1959
  %v1978 = vld [vmem:[%s7] sm:$0x1]
  %v1980 = vlaneseq
  %v1981 = vshrl.u32 %v1980, 7
  %v1982 = vsub.s32 0, %v1981
  %v1983 = vrot.slane %v1978, %v1982
  %v1985 = vadd.f32 %v1962, %v1983
  %v1986 = vadd.f32 %v1963, %v1983
  %v1987 = vadd.f32 %v1964, %v1983
  %v1988 = vadd.f32 %v1965, %v1983
  %v1989 = vadd.f32 %v1966, %v1983
  %v1990 = vadd.f32 %v1967, %v1983
  %v1991 = vadd.f32 %v1968, %v1983
  %v1992 = vadd.f32 %v1969, %v1983
  %v1993 = vadd.f32 %v1970, %v1983
  %v1994 = vadd.f32 %v1971, %v1983
  %v1995 = vadd.f32 %v1972, %v1983
  %v1996 = vadd.f32 %v1973, %v1983
  %v1997 = vadd.f32 %v1974, %v1983
  %v1998 = vadd.f32 %v1975, %v1983
  %v1999 = vadd.f32 %v1976, %v1983
  %v2000 = vadd.f32 %v1977, %v1983
  %s2001 = scalar_lea.vmem %s8, 64
  %v2002 = vld [vmem:[%s2001] sm:$0xf]
  %v2003 = vld [vmem:[%s2001 + $0x4] sm:$0xf]
  %v2004 = vld [vmem:[%s2001 + $0x8] sm:$0xf]
  %v2005 = vld [vmem:[%s2001 + $0xc] sm:$0xf]
  %v2006 = vld [vmem:[%s2001 + $0x10] sm:$0xf]
  %v2007 = vld [vmem:[%s2001 + $0x14] sm:$0xf]
  %v2008 = vld [vmem:[%s2001 + $0x18] sm:$0xf]
  %v2009 = vld [vmem:[%s2001 + $0x1c] sm:$0xf]
  %v2010 = vld [vmem:[%s2001 + $0x20] sm:$0xf]
  %v2011 = vld [vmem:[%s2001 + $0x24] sm:$0xf]
  %v2012 = vld [vmem:[%s2001 + $0x28] sm:$0xf]
  %v2013 = vld [vmem:[%s2001 + $0x2c] sm:$0xf]
  %v2014 = vld [vmem:[%s2001 + $0x30] sm:$0xf]
  %v2015 = vld [vmem:[%s2001 + $0x34] sm:$0xf]
  %v2016 = vld [vmem:[%s2001 + $0x38] sm:$0xf]
  %v2017 = vld [vmem:[%s2001 + $0x3c] sm:$0xf]
  %s2018 = scalar_lea.vmem %s9, 1
  %v2019 = vld [vmem:[%s2018] sm:$0x1]
  %s2020 = scalar_lea.vmem %s10, 64
  %v2021 = vld [vmem:[%s2020] sm:$0xf]
  %v2022 = vld [vmem:[%s2020 + $0x4] sm:$0xf]
  %v2023 = vld [vmem:[%s2020 + $0x8] sm:$0xf]
  %v2024 = vld [vmem:[%s2020 + $0xc] sm:$0xf]
  %v2025 = vld [vmem:[%s2020 + $0x10] sm:$0xf]
  %v2026 = vld [vmem:[%s2020 + $0x14] sm:$0xf]
  %v2027 = vld [vmem:[%s2020 + $0x18] sm:$0xf]
  %v2028 = vld [vmem:[%s2020 + $0x1c] sm:$0xf]
  %v2029 = vld [vmem:[%s2020 + $0x20] sm:$0xf]
  %v2030 = vld [vmem:[%s2020 + $0x24] sm:$0xf]
  %v2031 = vld [vmem:[%s2020 + $0x28] sm:$0xf]
  %v2032 = vld [vmem:[%s2020 + $0x2c] sm:$0xf]
  %v2033 = vld [vmem:[%s2020 + $0x30] sm:$0xf]
  %v2034 = vld [vmem:[%s2020 + $0x34] sm:$0xf]
  %v2035 = vld [vmem:[%s2020 + $0x38] sm:$0xf]
  %v2036 = vld [vmem:[%s2020 + $0x3c] sm:$0xf]
  %s2037 = scalar_lea.vmem %s11, 1
  %v2038 = vld [vmem:[%s2037] sm:$0x1]
  %v2039 = vmax.f32 %v1985, 0.0
  %v2040 = vmax.f32 %v1986, 0.0
  %v2041 = vmax.f32 %v1987, 0.0
  %v2042 = vmax.f32 %v1988, 0.0
  %v2043 = vmax.f32 %v1989, 0.0
  %v2044 = vmax.f32 %v1990, 0.0
  %v2045 = vmax.f32 %v1991, 0.0
  %v2046 = vmax.f32 %v1992, 0.0
  %v2047 = vmax.f32 %v1993, 0.0
  %v2048 = vmax.f32 %v1994, 0.0
  %v2049 = vmax.f32 %v1995, 0.0
  %v2050 = vmax.f32 %v1996, 0.0
  %v2051 = vmax.f32 %v1997, 0.0
  %v2052 = vmax.f32 %v1998, 0.0
  %v2053 = vmax.f32 %v1999, 0.0
  %v2054 = vmax.f32 %v2000, 0.0
  %v2055 = vpack.c.bf16 %v2040, %v2039
  %v2056 = vpack.c.bf16 %v2042, %v2041
  %v2057 = vpack.c.bf16 %v2044, %v2043
  %v2058 = vpack.c.bf16 %v2046, %v2045
  %v2059 = vpack.c.bf16 %v2048, %v2047
  %v2060 = vpack.c.bf16 %v2050, %v2049
  %v2061 = vpack.c.bf16 %v2052, %v2051
  %v2062 = vpack.c.bf16 %v2054, %v2053
  %v2064 = vlaneseq
  %v2065 = vshrl.u32 %v2064, 7
  %v2066 = vsub.s32 0, %v2065
  %v2067 = vrot.slane %v2019, %v2066
  %v2085 = vunpack.c.l.b16 %v2002
  %v2086 = vunpack.c.l.b16 %v2003
  %v2087 = vunpack.c.l.b16 %v2004
  %v2088 = vunpack.c.l.b16 %v2005
  %v2089 = vunpack.c.l.b16 %v2006
  %v2090 = vunpack.c.l.b16 %v2007
  %v2091 = vunpack.c.l.b16 %v2008
  %v2092 = vunpack.c.l.b16 %v2009
  %v2093 = vunpack.c.l.b16 %v2010
  %v2094 = vunpack.c.l.b16 %v2011
  %v2095 = vunpack.c.l.b16 %v2012
  %v2096 = vunpack.c.l.b16 %v2013
  %v2097 = vunpack.c.l.b16 %v2014
  %v2098 = vunpack.c.l.b16 %v2015
  %v2099 = vunpack.c.l.b16 %v2016
  %v2100 = vunpack.c.l.b16 %v2017
  %v2101 = vpack.c.b16 %v2086, %v2085
  %v2102 = vpack.c.b16 %v2088, %v2087
  %v2103 = vpack.c.b16 %v2090, %v2089
  %v2104 = vpack.c.b16 %v2092, %v2091
  %v2105 = vpack.c.b16 %v2094, %v2093
  %v2106 = vpack.c.b16 %v2096, %v2095
  %v2107 = vpack.c.b16 %v2098, %v2097
  %v2108 = vpack.c.b16 %v2100, %v2099
  %2117 = vmatprep.subr.bf16.mxu0 0
  %2118 = vmatpush1.bf16.msra.mxu0 %v2101
  %2119 = vmatprep.subr.bf16.mxu0 0
  %2120 = vmatpush1.bf16.msra.mxu0 %v2102
  %2121 = vmatprep.subr.bf16.mxu0 0
  %2122 = vmatpush1.bf16.msra.mxu0 %v2103
  %2123 = vmatprep.subr.bf16.mxu0 0
  %2124 = vmatpush1.bf16.msra.mxu0 %v2104
  %2125 = vmatprep.subr.bf16.mxu0 0
  %2126 = vmatpush1.bf16.msra.mxu0 %v2105
  %2127 = vmatprep.subr.bf16.mxu0 0
  %2128 = vmatpush1.bf16.msra.mxu0 %v2106
  %2129 = vmatprep.subr.bf16.mxu0 0
  %2130 = vmatpush1.bf16.msra.mxu0 %v2107
  %2131 = vmatprep.subr.bf16.mxu0 0
  %2132 = vmatpush1.bf16.msra.mxu0 %v2108
  %2133 = vmatprep.subr.bf16.mxu0 0
  %2134 = vmatpush1.bf16.msra.mxu0 0
  %2135 = vmatprep.subr.bf16.mxu0 0
  %2136 = vmatpush1.bf16.msra.mxu0 0
  %2137 = vmatprep.subr.bf16.mxu0 0
  %2138 = vmatpush1.bf16.msra.mxu0 0
  %2139 = vmatprep.subr.bf16.mxu0 0
  %2140 = vmatpush1.bf16.msra.mxu0 0
  %2141 = vmatprep.subr.bf16.mxu0 0
  %2142 = vmatpush1.bf16.msra.mxu0 0
  %2143 = vmatprep.subr.bf16.mxu0 0
  %2144 = vmatpush1.bf16.msra.mxu0 0
  %2145 = vmatprep.subr.bf16.mxu0 0
  %2146 = vmatpush1.bf16.msra.mxu0 0
  %2147 = vmatprep.subr.bf16.mxu0 0
  %2148 = vmatpush1.bf16.msra.mxu0 0
  %2149 = vmatprep.mubr.bf16.mxu0 0
  %2150 = vmatmul.mubr.bf16.gmra.mrb[0].mxu0 %v2055
  %v2151 = vpop.f32.mrb[0].mxu0
  %v2152 = vadd.f32 %v2067, %v2151
  %v2153 = vpop.f32.mrb[0].mxu0
  %v2154 = vpop.f32.mrb[0].mxu0
  %v2155 = vadd.f32 %v2067, %v2154
  %v2156 = vpop.f32.mrb[0].mxu0
  %2157 = vmatprep.mubr.bf16.mxu0 0
  %2158 = vmatmul.mubr.bf16.gmra.mrb[0].mxu0 %v2056
  %v2159 = vpop.f32.mrb[0].mxu0
  %v2160 = vadd.f32 %v2067, %v2159
  %v2161 = vpop.f32.mrb[0].mxu0
  %v2162 = vpop.f32.mrb[0].mxu0
  %v2163 = vadd.f32 %v2067, %v2162
  %v2164 = vpop.f32.mrb[0].mxu0
  %2165 = vmatprep.mubr.bf16.mxu0 0
  %2166 = vmatmul.mubr.bf16.gmra.mrb[0].mxu0 %v2057
  %v2167 = vpop.f32.mrb[0].mxu0
  %v2168 = vadd.f32 %v2067, %v2167
  %v2169 = vpop.f32.mrb[0].mxu0
  %v2170 = vpop.f32.mrb[0].mxu0
  %v2171 = vadd.f32 %v2067, %v2170
  %v2172 = vpop.f32.mrb[0].mxu0
  %2173 = vmatprep.mubr.bf16.mxu0 0
  %2174 = vmatmul.mubr.bf16.gmra.mrb[0].mxu0 %v2058
  %v2175 = vpop.f32.mrb[0].mxu0
  %v2176 = vadd.f32 %v2067, %v2175
  %v2177 = vpop.f32.mrb[0].mxu0
  %v2178 = vpop.f32.mrb[0].mxu0
  %v2179 = vadd.f32 %v2067, %v2178
  %v2180 = vpop.f32.mrb[0].mxu0
  %2181 = vmatprep.mubr.bf16.mxu0 0
  %2182 = vmatmul.mubr.bf16.gmra.mrb[0].mxu0 %v2059
  %v2183 = vpop.f32.mrb[0].mxu0
  %v2184 = vadd.f32 %v2067, %v2183
  %v2185 = vpop.f32.mrb[0].mxu0
  %v2186 = vpop.f32.mrb[0].mxu0
  %v2187 = vadd.f32 %v2067, %v2186
  %v2188 = vpop.f32.mrb[0].mxu0
  %2189 = vmatprep.mubr.bf16.mxu0 0
  %2190 = vmatmul.mubr.bf16.gmra.mrb[0].mxu0 %v2060
  %v2191 = vpop.f32.mrb[0].mxu0
  %v2192 = vadd.f32 %v2067, %v2191
  %v2193 = vpop.f32.mrb[0].mxu0
  %v2194 = vpop.f32.mrb[0].mxu0
  %v2195 = vadd.f32 %v2067, %v2194
  %v2196 = vpop.f32.mrb[0].mxu0
  %2197 = vmatprep.mubr.bf16.mxu0 0
  %2198 = vmatmul.mubr.bf16.gmra.mrb[0].mxu0 %v2061
  %v2199 = vpop.f32.mrb[0].mxu0
  %v2200 = vadd.f32 %v2067, %v2199
  %v2201 = vpop.f32.mrb[0].mxu0
  %v2202 = vpop.f32.mrb[0].mxu0
  %v2203 = vadd.f32 %v2067, %v2202
  %v2204 = vpop.f32.mrb[0].mxu0
  %2205 = vmatprep.mubr.bf16.mxu0 0
  %2206 = vmatmul.mubr.bf16.gmra.mrb[0].mxu0 %v2062
  %v2207 = vpop.f32.mrb[0].mxu0
  %v2208 = vadd.f32 %v2067, %v2207
  %v2209 = vpop.f32.mrb[0].mxu0
  %v2210 = vpop.f32.mrb[0].mxu0
  %v2211 = vadd.f32 %v2067, %v2210
  %v2212 = vpop.f32.mrb[0].mxu0
  %2213 = vdwg.mxu0
  %v2214 = vmax.f32 %v2152, 0.0
  %v2215 = vmax.f32 %v2155, 0.0
  %v2216 = vmax.f32 %v2160, 0.0
  %v2217 = vmax.f32 %v2163, 0.0
  %v2218 = vmax.f32 %v2168, 0.0
  %v2219 = vmax.f32 %v2171, 0.0
  %v2220 = vmax.f32 %v2176, 0.0
  %v2221 = vmax.f32 %v2179, 0.0
  %v2222 = vmax.f32 %v2184, 0.0
  %v2223 = vmax.f32 %v2187, 0.0
  %v2224 = vmax.f32 %v2192, 0.0
  %v2225 = vmax.f32 %v2195, 0.0
  %v2226 = vmax.f32 %v2200, 0.0
  %v2227 = vmax.f32 %v2203, 0.0
  %v2228 = vmax.f32 %v2208, 0.0
  %v2229 = vmax.f32 %v2211, 0.0
  %v2230 = vpack.c.bf16 %v2215, %v2214
  %v2231 = vpack.c.bf16 %v2217, %v2216
  %v2232 = vpack.c.bf16 %v2219, %v2218
  %v2233 = vpack.c.bf16 %v2221, %v2220
  %v2234 = vpack.c.bf16 %v2223, %v2222
  %v2235 = vpack.c.bf16 %v2225, %v2224
  %v2236 = vpack.c.bf16 %v2227, %v2226
  %v2237 = vpack.c.bf16 %v2229, %v2228
  %v2239 = vlaneseq
  %v2240 = vshrl.u32 %v2239, 7
  %v2241 = vsub.s32 0, %v2240
  %v2242 = vrot.slane %v2038, %v2241
  %v2260 = vunpack.c.l.b16 %v2021
  %v2261 = vunpack.c.l.b16 %v2022
  %v2262 = vunpack.c.l.b16 %v2023
  %v2263 = vunpack.c.l.b16 %v2024
  %v2264 = vunpack.c.l.b16 %v2025
  %v2265 = vunpack.c.l.b16 %v2026
  %v2266 = vunpack.c.l.b16 %v2027
  %v2267 = vunpack.c.l.b16 %v2028
  %v2268 = vunpack.c.l.b16 %v2029
  %v2269 = vunpack.c.l.b16 %v2030
  %v2270 = vunpack.c.l.b16 %v2031
  %v2271 = vunpack.c.l.b16 %v2032
  %v2272 = vunpack.c.l.b16 %v2033
  %v2273 = vunpack.c.l.b16 %v2034
  %v2274 = vunpack.c.l.b16 %v2035
  %v2275 = vunpack.c.l.b16 %v2036
  %v2276 = vpack.c.b16 %v2261, %v2260
  %v2277 = vpack.c.b16 %v2263, %v2262
  %v2278 = vpack.c.b16 %v2265, %v2264
  %v2279 = vpack.c.b16 %v2267, %v2266
  %v2280 = vpack.c.b16 %v2269, %v2268
  %v2281 = vpack.c.b16 %v2271, %v2270
  %v2282 = vpack.c.b16 %v2273, %v2272
  %v2283 = vpack.c.b16 %v2275, %v2274
  %2292 = vmatprep.subr.bf16.mxu0 0
  %2293 = vmatpush1.bf16.msra.mxu0 %v2276
  %2294 = vmatprep.subr.bf16.mxu0 0
  %2295 = vmatpush1.bf16.msra.mxu0 %v2277
  %2296 = vmatprep.subr.bf16.mxu0 0
  %2297 = vmatpush1.bf16.msra.mxu0 %v2278
  %2298 = vmatprep.subr.bf16.mxu0 0
  %2299 = vmatpush1.bf16.msra.mxu0 %v2279
  %2300 = vmatprep.subr.bf16.mxu0 0
  %2301 = vmatpush1.bf16.msra.mxu0 %v2280
  %2302 = vmatprep.subr.bf16.mxu0 0
  %2303 = vmatpush1.bf16.msra.mxu0 %v2281
  %2304 = vmatprep.subr.bf16.mxu0 0
  %2305 = vmatpush1.bf16.msra.mxu0 %v2282
  %2306 = vmatprep.subr.bf16.mxu0 0
  %2307 = vmatpush1.bf16.msra.mxu0 %v2283
  %2308 = vmatprep.subr.bf16.mxu0 0
  %2309 = vmatpush1.bf16.msra.mxu0 0
  %2310 = vmatprep.subr.bf16.mxu0 0
  %2311 = vmatpush1.bf16.msra.mxu0 0
  %2312 = vmatprep.subr.bf16.mxu0 0
  %2313 = vmatpush1.bf16.msra.mxu0 0
  %2314 = vmatprep.subr.bf16.mxu0 0
  %2315 = vmatpush1.bf16.msra.mxu0 0
  %2316 = vmatprep.subr.bf16.mxu0 0
  %2317 = vmatpush1.bf16.msra.mxu0 0
  %2318 = vmatprep.subr.bf16.mxu0 0
  %2319 = vmatpush1.bf16.msra.mxu0 0
  %2320 = vmatprep.subr.bf16.mxu0 0
  %2321 = vmatpush1.bf16.msra.mxu0 0
  %2322 = vmatprep.subr.bf16.mxu0 0
  %2323 = vmatpush1.bf16.msra.mxu0 0
  %2324 = vmatprep.mubr.bf16.mxu0 0
  %2325 = vmatmul.mubr.bf16.gmra.mrb[0].mxu0 %v2230
  %v2326 = vpop.f32.mrb[0].mxu0
  %v2327 = vadd.f32 %v2242, %v2326
  %v2328 = vpop.f32.mrb[0].mxu0
  %v2329 = vpop.f32.mrb[0].mxu0
  %v2330 = vadd.f32 %v2242, %v2329
  %v2331 = vpop.f32.mrb[0].mxu0
  %2332 = vmatprep.mubr.bf16.mxu0 0
  %2333 = vmatmul.mubr.bf16.gmra.mrb[0].mxu0 %v2231
  %v2334 = vpop.f32.mrb[0].mxu0
  %v2335 = vadd.f32 %v2242, %v2334
  %v2336 = vpop.f32.mrb[0].mxu0
  %v2337 = vpop.f32.mrb[0].mxu0
  %v2338 = vadd.f32 %v2242, %v2337
  %v2339 = vpop.f32.mrb[0].mxu0
  %2340 = vmatprep.mubr.bf16.mxu0 0
  %2341 = vmatmul.mubr.bf16.gmra.mrb[0].mxu0 %v2232
  %v2342 = vpop.f32.mrb[0].mxu0
  %v2343 = vadd.f32 %v2242, %v2342
  %v2344 = vpop.f32.mrb[0].mxu0
  %v2345 = vpop.f32.mrb[0].mxu0
  %v2346 = vadd.f32 %v2242, %v2345
  %v2347 = vpop.f32.mrb[0].mxu0
  %2348 = vmatprep.mubr.bf16.mxu0 0
  %2349 = vmatmul.mubr.bf16.gmra.mrb[0].mxu0 %v2233
  %v2350 = vpop.f32.mrb[0].mxu0
  %v2351 = vadd.f32 %v2242, %v2350
  %v2352 = vpop.f32.mrb[0].mxu0
  %v2353 = vpop.f32.mrb[0].mxu0
  %v2354 = vadd.f32 %v2242, %v2353
  %v2355 = vpop.f32.mrb[0].mxu0
  %2356 = vmatprep.mubr.bf16.mxu0 0
  %2357 = vmatmul.mubr.bf16.gmra.mrb[0].mxu0 %v2234
  %v2358 = vpop.f32.mrb[0].mxu0
  %v2359 = vadd.f32 %v2242, %v2358
  %v2360 = vpop.f32.mrb[0].mxu0
  %v2361 = vpop.f32.mrb[0].mxu0
  %v2362 = vadd.f32 %v2242, %v2361
  %v2363 = vpop.f32.mrb[0].mxu0
  %2364 = vmatprep.mubr.bf16.mxu0 0
  %2365 = vmatmul.mubr.bf16.gmra.mrb[0].mxu0 %v2235
  %v2366 = vpop.f32.mrb[0].mxu0
  %v2367 = vadd.f32 %v2242, %v2366
  %v2368 = vpop.f32.mrb[0].mxu0
  %v2369 = vpop.f32.mrb[0].mxu0
  %v2370 = vadd.f32 %v2242, %v2369
  %v2371 = vpop.f32.mrb[0].mxu0
  %2372 = vmatprep.mubr.bf16.mxu0 0
  %2373 = vmatmul.mubr.bf16.gmra.mrb[0].mxu0 %v2236
  %v2374 = vpop.f32.mrb[0].mxu0
  %v2375 = vadd.f32 %v2242, %v2374
  %v2376 = vpop.f32.mrb[0].mxu0
  %v2377 = vpop.f32.mrb[0].mxu0
  %v2378 = vadd.f32 %v2242, %v2377
  %v2379 = vpop.f32.mrb[0].mxu0
  %2380 = vmatprep.mubr.bf16.mxu0 0
  %2381 = vmatmul.mubr.bf16.gmra.mrb[0].mxu0 %v2237
  %v2382 = vpop.f32.mrb[0].mxu0
  %v2383 = vadd.f32 %v2242, %v2382
  %v2384 = vpop.f32.mrb[0].mxu0
  %v2385 = vpop.f32.mrb[0].mxu0
  %v2386 = vadd.f32 %v2242, %v2385
  %v2387 = vpop.f32.mrb[0].mxu0
  %2388 = vdwg.mxu0
  %v2389 = vadd.f32 %v1985, %v2327
  %v2390 = vadd.f32 %v1986, %v2330
  %v2391 = vadd.f32 %v1987, %v2335
  %v2392 = vadd.f32 %v1988, %v2338
  %v2393 = vadd.f32 %v1989, %v2343
  %v2394 = vadd.f32 %v1990, %v2346
  %v2395 = vadd.f32 %v1991, %v2351
  %v2396 = vadd.f32 %v1992, %v2354
  %v2397 = vadd.f32 %v1993, %v2359
  %v2398 = vadd.f32 %v1994, %v2362
  %v2399 = vadd.f32 %v1995, %v2367
  %v2400 = vadd.f32 %v1996, %v2370
  %v2401 = vadd.f32 %v1997, %v2375
  %v2402 = vadd.f32 %v1998, %v2378
  %v2403 = vadd.f32 %v1999, %v2383
  %v2404 = vadd.f32 %v2000, %v2386
  %2405 = vrot.lane.b32.xlu0 %v2389, 64
  %v2406 = vpop.permute.xlu0 %2405
  %2407 = vrot.lane.b32.xlu0 %v2390, 64
  %v2408 = vpop.permute.xlu0 %2407
  %2409 = vrot.lane.b32.xlu0 %v2391, 64
  %v2410 = vpop.permute.xlu0 %2409
  %2411 = vrot.lane.b32.xlu0 %v2392, 64
  %v2412 = vpop.permute.xlu0 %2411
  %2413 = vrot.lane.b32.xlu0 %v2393, 64
  %v2414 = vpop.permute.xlu0 %2413
  %2415 = vrot.lane.b32.xlu0 %v2394, 64
  %v2416 = vpop.permute.xlu0 %2415
  %2417 = vrot.lane.b32.xlu0 %v2395, 64
  %v2418 = vpop.permute.xlu0 %2417
  %2419 = vrot.lane.b32.xlu0 %v2396, 64
  %v2420 = vpop.permute.xlu0 %2419
  %2421 = vrot.lane.b32.xlu0 %v2397, 64
  %v2422 = vpop.permute.xlu0 %2421
  %2423 = vrot.lane.b32.xlu0 %v2398, 64
  %v2424 = vpop.permute.xlu0 %2423
  %2425 = vrot.lane.b32.xlu0 %v2399, 64
  %v2426 = vpop.permute.xlu0 %2425
  %2427 = vrot.lane.b32.xlu0 %v2400, 64
  %v2428 = vpop.permute.xlu0 %2427
  %2429 = vrot.lane.b32.xlu0 %v2401, 64
  %v2430 = vpop.permute.xlu0 %2429
  %2431 = vrot.lane.b32.xlu0 %v2402, 64
  %v2432 = vpop.permute.xlu0 %2431
  %2433 = vrot.lane.b32.xlu0 %v2403, 64
  %v2434 = vpop.permute.xlu0 %2433
  %2435 = vrot.lane.b32.xlu0 %v2404, 64
  %v2436 = vpop.permute.xlu0 %2435
  %v2437 = vadd.f32 %v2389, %v2406
  %v2438 = vadd.f32 %v2390, %v2408
  %v2439 = vadd.f32 %v2391, %v2410
  %v2440 = vadd.f32 %v2392, %v2412
  %v2441 = vadd.f32 %v2393, %v2414
  %v2442 = vadd.f32 %v2394, %v2416
  %v2443 = vadd.f32 %v2395, %v2418
  %v2444 = vadd.f32 %v2396, %v2420
  %v2445 = vadd.f32 %v2397, %v2422
  %v2446 = vadd.f32 %v2398, %v2424
  %v2447 = vadd.f32 %v2399, %v2426
  %v2448 = vadd.f32 %v2400, %v2428
  %v2449 = vadd.f32 %v2401, %v2430
  %v2450 = vadd.f32 %v2402, %v2432
  %v2451 = vadd.f32 %v2403, %v2434
  %v2452 = vadd.f32 %v2404, %v2436
  %v2453 = vmul.f32 %v2437, 0.5
  %v2454 = vmul.f32 %v2438, 0.5
  %v2455 = vmul.f32 %v2439, 0.5
  %v2456 = vmul.f32 %v2440, 0.5
  %v2457 = vmul.f32 %v2441, 0.5
  %v2458 = vmul.f32 %v2442, 0.5
  %v2459 = vmul.f32 %v2443, 0.5
  %v2460 = vmul.f32 %v2444, 0.5
  %v2461 = vmul.f32 %v2445, 0.5
  %v2462 = vmul.f32 %v2446, 0.5
  %v2463 = vmul.f32 %v2447, 0.5
  %v2464 = vmul.f32 %v2448, 0.5
  %v2465 = vmul.f32 %v2449, 0.5
  %v2466 = vmul.f32 %v2450, 0.5
  %v2467 = vmul.f32 %v2451, 0.5
  %v2468 = vmul.f32 %v2452, 0.5
  %v2469 = vld [vmem:[%s12] sm:$0xf]
  %v2470 = vld [vmem:[%s12 + $0x4] sm:$0xf]
  %v2471 = vld [vmem:[%s12 + $0x8] sm:$0xf]
  %v2472 = vld [vmem:[%s12 + $0xc] sm:$0xf]
  %v2473 = vld [vmem:[%s12 + $0x10] sm:$0xf]
  %v2474 = vld [vmem:[%s12 + $0x14] sm:$0xf]
  %v2475 = vld [vmem:[%s12 + $0x18] sm:$0xf]
  %v2476 = vld [vmem:[%s12 + $0x1c] sm:$0xf]
  %v2477 = vld [vmem:[%s13] sm:$0x1]
  %v2478 = vld [vmem:[%s14] sm:$0xf]
  %v2479 = vld [vmem:[%s14 + $0x4] sm:$0xf]
  %v2480 = vld [vmem:[%s14 + $0x8] sm:$0xf]
  %v2481 = vld [vmem:[%s14 + $0xc] sm:$0xf]
  %v2482 = vld [vmem:[%s14 + $0x10] sm:$0xf]
  %v2483 = vld [vmem:[%s14 + $0x14] sm:$0xf]
  %v2484 = vld [vmem:[%s14 + $0x18] sm:$0xf]
  %v2485 = vld [vmem:[%s14 + $0x1c] sm:$0xf]
  %v2486 = vld [vmem:[%s15] sm:$0x1]
  %v2487 = vmax.f32 %v2453, 0.0
  %v2488 = vmax.f32 %v2454, 0.0
  %v2489 = vmax.f32 %v2455, 0.0
  %v2490 = vmax.f32 %v2456, 0.0
  %v2491 = vmax.f32 %v2457, 0.0
  %v2492 = vmax.f32 %v2458, 0.0
  %v2493 = vmax.f32 %v2459, 0.0
  %v2494 = vmax.f32 %v2460, 0.0
  %v2495 = vmax.f32 %v2461, 0.0
  %v2496 = vmax.f32 %v2462, 0.0
  %v2497 = vmax.f32 %v2463, 0.0
  %v2498 = vmax.f32 %v2464, 0.0
  %v2499 = vmax.f32 %v2465, 0.0
  %v2500 = vmax.f32 %v2466, 0.0
  %v2501 = vmax.f32 %v2467, 0.0
  %v2502 = vmax.f32 %v2468, 0.0
  %v2503 = vpack.c.bf16 %v2488, %v2487
  %v2504 = vpack.c.bf16 %v2490, %v2489
  %v2505 = vpack.c.bf16 %v2492, %v2491
  %v2506 = vpack.c.bf16 %v2494, %v2493
  %v2507 = vpack.c.bf16 %v2496, %v2495
  %v2508 = vpack.c.bf16 %v2498, %v2497
  %v2509 = vpack.c.bf16 %v2500, %v2499
  %v2510 = vpack.c.bf16 %v2502, %v2501
  %v2512 = vlaneseq
  %v2513 = vshrl.u32 %v2512, 7
  %v2514 = vsub.s32 0, %v2513
  %v2515 = vrot.slane %v2477, %v2514
  %v2525 = vunpack.c.l.b16 %v2469
  %v2526 = vunpack.c.l.b16 %v2470
  %v2527 = vunpack.c.l.b16 %v2471
  %v2528 = vunpack.c.l.b16 %v2472
  %v2529 = vunpack.c.l.b16 %v2473
  %v2530 = vunpack.c.l.b16 %v2474
  %v2531 = vunpack.c.l.b16 %v2475
  %v2532 = vunpack.c.l.b16 %v2476
  %v2533 = vpack.c.b16 %v2526, %v2525
  %v2534 = vpack.c.b16 %v2528, %v2527
  %v2535 = vpack.c.b16 %v2530, %v2529
  %v2536 = vpack.c.b16 %v2532, %v2531
  %v2542 = vsel %vm1093, %v2503, 0
  %v2545 = vsel %vm1093, %v2504, 0
  %v2548 = vsel %vm1093, %v2505, 0
  %v2551 = vsel %vm1093, %v2506, 0
  %v2554 = vsel %vm1093, %v2507, 0
  %v2557 = vsel %vm1093, %v2508, 0
  %v2560 = vsel %vm1093, %v2509, 0
  %v2563 = vsel %vm1093, %v2510, 0
  %2565 = vmatprep.subr.bf16.mxu0 0
  %2566 = vmatpush1.bf16.msra.mxu0 %v2533
  %2567 = vmatprep.subr.bf16.mxu0 0
  %2568 = vmatpush1.bf16.msra.mxu0 %v2534
  %2569 = vmatprep.subr.bf16.mxu0 0
  %2570 = vmatpush1.bf16.msra.mxu0 %v2535
  %2571 = vmatprep.subr.bf16.mxu0 0
  %2572 = vmatpush1.bf16.msra.mxu0 %v2536
  %2573 = vmatprep.subr.bf16.mxu0 0
  %2574 = vmatpush1.bf16.msra.mxu0 0
  %2575 = vmatprep.subr.bf16.mxu0 0
  %2576 = vmatpush1.bf16.msra.mxu0 0
  %2577 = vmatprep.subr.bf16.mxu0 0
  %2578 = vmatpush1.bf16.msra.mxu0 0
  %2579 = vmatprep.subr.bf16.mxu0 0
  %2580 = vmatpush1.bf16.msra.mxu0 0
  %2581 = vmatprep.subr.bf16.mxu0 0
  %2582 = vmatpush1.bf16.msra.mxu0 0
  %2583 = vmatprep.subr.bf16.mxu0 0
  %2584 = vmatpush1.bf16.msra.mxu0 0
  %2585 = vmatprep.subr.bf16.mxu0 0
  %2586 = vmatpush1.bf16.msra.mxu0 0
  %2587 = vmatprep.subr.bf16.mxu0 0
  %2588 = vmatpush1.bf16.msra.mxu0 0
  %2589 = vmatprep.subr.bf16.mxu0 0
  %2590 = vmatpush1.bf16.msra.mxu0 0
  %2591 = vmatprep.subr.bf16.mxu0 0
  %2592 = vmatpush1.bf16.msra.mxu0 0
  %2593 = vmatprep.subr.bf16.mxu0 0
  %2594 = vmatpush1.bf16.msra.mxu0 0
  %2595 = vmatprep.subr.bf16.mxu0 0
  %2596 = vmatpush1.bf16.msra.mxu0 0
  %2597 = vmatprep.mubr.bf16.mxu0 0
  %2598 = vmatmul.mubr.bf16.gmra.mrb[0].mxu0 %v2542
  %v2599 = vpop.f32.mrb[0].mxu0
  %v2600 = vadd.f32 %v2515, %v2599
  %v2601 = vpop.f32.mrb[0].mxu0
  %v2602 = vpop.f32.mrb[0].mxu0
  %v2603 = vadd.f32 %v2515, %v2602
  %v2604 = vpop.f32.mrb[0].mxu0
  %2605 = vmatprep.mubr.bf16.mxu0 0
  %2606 = vmatmul.mubr.bf16.gmra.mrb[0].mxu0 %v2545
  %v2607 = vpop.f32.mrb[0].mxu0
  %v2608 = vadd.f32 %v2515, %v2607
  %v2609 = vpop.f32.mrb[0].mxu0
  %v2610 = vpop.f32.mrb[0].mxu0
  %v2611 = vadd.f32 %v2515, %v2610
  %v2612 = vpop.f32.mrb[0].mxu0
  %2613 = vmatprep.mubr.bf16.mxu0 0
  %2614 = vmatmul.mubr.bf16.gmra.mrb[0].mxu0 %v2548
  %v2615 = vpop.f32.mrb[0].mxu0
  %v2616 = vadd.f32 %v2515, %v2615
  %v2617 = vpop.f32.mrb[0].mxu0
  %v2618 = vpop.f32.mrb[0].mxu0
  %v2619 = vadd.f32 %v2515, %v2618
  %v2620 = vpop.f32.mrb[0].mxu0
  %2621 = vmatprep.mubr.bf16.mxu0 0
  %2622 = vmatmul.mubr.bf16.gmra.mrb[0].mxu0 %v2551
  %v2623 = vpop.f32.mrb[0].mxu0
  %v2624 = vadd.f32 %v2515, %v2623
  %v2625 = vpop.f32.mrb[0].mxu0
  %v2626 = vpop.f32.mrb[0].mxu0
  %v2627 = vadd.f32 %v2515, %v2626
  %v2628 = vpop.f32.mrb[0].mxu0
  %2629 = vmatprep.mubr.bf16.mxu0 0
  %2630 = vmatmul.mubr.bf16.gmra.mrb[0].mxu0 %v2554
  %v2631 = vpop.f32.mrb[0].mxu0
  %v2632 = vadd.f32 %v2515, %v2631
  %v2633 = vpop.f32.mrb[0].mxu0
  %v2634 = vpop.f32.mrb[0].mxu0
  %v2635 = vadd.f32 %v2515, %v2634
  %v2636 = vpop.f32.mrb[0].mxu0
  %2637 = vmatprep.mubr.bf16.mxu0 0
  %2638 = vmatmul.mubr.bf16.gmra.mrb[0].mxu0 %v2557
  %v2639 = vpop.f32.mrb[0].mxu0
  %v2640 = vadd.f32 %v2515, %v2639
  %v2641 = vpop.f32.mrb[0].mxu0
  %v2642 = vpop.f32.mrb[0].mxu0
  %v2643 = vadd.f32 %v2515, %v2642
  %v2644 = vpop.f32.mrb[0].mxu0
  %2645 = vmatprep.mubr.bf16.mxu0 0
  %2646 = vmatmul.mubr.bf16.gmra.mrb[0].mxu0 %v2560
  %v2647 = vpop.f32.mrb[0].mxu0
  %v2648 = vadd.f32 %v2515, %v2647
  %v2649 = vpop.f32.mrb[0].mxu0
  %v2650 = vpop.f32.mrb[0].mxu0
  %v2651 = vadd.f32 %v2515, %v2650
  %v2652 = vpop.f32.mrb[0].mxu0
  %2653 = vmatprep.mubr.bf16.mxu0 0
  %2654 = vmatmul.mubr.bf16.gmra.mrb[0].mxu0 %v2563
  %v2655 = vpop.f32.mrb[0].mxu0
  %v2656 = vadd.f32 %v2515, %v2655
  %v2657 = vpop.f32.mrb[0].mxu0
  %v2658 = vpop.f32.mrb[0].mxu0
  %v2659 = vadd.f32 %v2515, %v2658
  %v2660 = vpop.f32.mrb[0].mxu0
  %2661 = vdwg.mxu0
  %v2662 = vmax.f32 %v2600, 0.0
  %v2663 = vmax.f32 %v2603, 0.0
  %v2664 = vmax.f32 %v2608, 0.0
  %v2665 = vmax.f32 %v2611, 0.0
  %v2666 = vmax.f32 %v2616, 0.0
  %v2667 = vmax.f32 %v2619, 0.0
  %v2668 = vmax.f32 %v2624, 0.0
  %v2669 = vmax.f32 %v2627, 0.0
  %v2670 = vmax.f32 %v2632, 0.0
  %v2671 = vmax.f32 %v2635, 0.0
  %v2672 = vmax.f32 %v2640, 0.0
  %v2673 = vmax.f32 %v2643, 0.0
  %v2674 = vmax.f32 %v2648, 0.0
  %v2675 = vmax.f32 %v2651, 0.0
  %v2676 = vmax.f32 %v2656, 0.0
  %v2677 = vmax.f32 %v2659, 0.0
  %v2678 = vpack.c.bf16 %v2663, %v2662
  %v2679 = vpack.c.bf16 %v2665, %v2664
  %v2680 = vpack.c.bf16 %v2667, %v2666
  %v2681 = vpack.c.bf16 %v2669, %v2668
  %v2682 = vpack.c.bf16 %v2671, %v2670
  %v2683 = vpack.c.bf16 %v2673, %v2672
  %v2684 = vpack.c.bf16 %v2675, %v2674
  %v2685 = vpack.c.bf16 %v2677, %v2676
  %v2687 = vlaneseq
  %v2688 = vshrl.u32 %v2687, 7
  %v2689 = vsub.s32 0, %v2688
  %v2690 = vrot.slane %v2486, %v2689
  %v2700 = vunpack.c.l.b16 %v2478
  %v2701 = vunpack.c.l.b16 %v2479
  %v2702 = vunpack.c.l.b16 %v2480
  %v2703 = vunpack.c.l.b16 %v2481
  %v2704 = vunpack.c.l.b16 %v2482
  %v2705 = vunpack.c.l.b16 %v2483
  %v2706 = vunpack.c.l.b16 %v2484
  %v2707 = vunpack.c.l.b16 %v2485
  %v2708 = vpack.c.b16 %v2701, %v2700
  %v2709 = vpack.c.b16 %v2703, %v2702
  %v2710 = vpack.c.b16 %v2705, %v2704
  %v2711 = vpack.c.b16 %v2707, %v2706
  %v2717 = vsel %vm1093, %v2678, 0
  %v2720 = vsel %vm1093, %v2679, 0
  %v2723 = vsel %vm1093, %v2680, 0
  %v2726 = vsel %vm1093, %v2681, 0
  %v2729 = vsel %vm1093, %v2682, 0
  %v2732 = vsel %vm1093, %v2683, 0
  %v2735 = vsel %vm1093, %v2684, 0
  %v2738 = vsel %vm1093, %v2685, 0
  %2740 = vmatprep.subr.bf16.mxu0 0
  %2741 = vmatpush1.bf16.msra.mxu0 %v2708
  %2742 = vmatprep.subr.bf16.mxu0 0
  %2743 = vmatpush1.bf16.msra.mxu0 %v2709
  %2744 = vmatprep.subr.bf16.mxu0 0
  %2745 = vmatpush1.bf16.msra.mxu0 %v2710
  %2746 = vmatprep.subr.bf16.mxu0 0
  %2747 = vmatpush1.bf16.msra.mxu0 %v2711
  %2748 = vmatprep.subr.bf16.mxu0 0
  %2749 = vmatpush1.bf16.msra.mxu0 0
  %2750 = vmatprep.subr.bf16.mxu0 0
  %2751 = vmatpush1.bf16.msra.mxu0 0
  %2752 = vmatprep.subr.bf16.mxu0 0
  %2753 = vmatpush1.bf16.msra.mxu0 0
  %2754 = vmatprep.subr.bf16.mxu0 0
  %2755 = vmatpush1.bf16.msra.mxu0 0
  %2756 = vmatprep.subr.bf16.mxu0 0
  %2757 = vmatpush1.bf16.msra.mxu0 0
  %2758 = vmatprep.subr.bf16.mxu0 0
  %2759 = vmatpush1.bf16.msra.mxu0 0
  %2760 = vmatprep.subr.bf16.mxu0 0
  %2761 = vmatpush1.bf16.msra.mxu0 0
  %2762 = vmatprep.subr.bf16.mxu0 0
  %2763 = vmatpush1.bf16.msra.mxu0 0
  %2764 = vmatprep.subr.bf16.mxu0 0
  %2765 = vmatpush1.bf16.msra.mxu0 0
  %2766 = vmatprep.subr.bf16.mxu0 0
  %2767 = vmatpush1.bf16.msra.mxu0 0
  %2768 = vmatprep.subr.bf16.mxu0 0
  %2769 = vmatpush1.bf16.msra.mxu0 0
  %2770 = vmatprep.subr.bf16.mxu0 0
  %2771 = vmatpush1.bf16.msra.mxu0 0
  %2772 = vmatprep.mubr.bf16.mxu0 0
  %2773 = vmatmul.mubr.bf16.gmra.mrb[0].mxu0 %v2717
  %v2774 = vpop.f32.mrb[0].mxu0
  %v2775 = vadd.f32 %v2690, %v2774
  %v2776 = vpop.f32.mrb[0].mxu0
  %v2777 = vpop.f32.mrb[0].mxu0
  %v2778 = vadd.f32 %v2690, %v2777
  %v2779 = vpop.f32.mrb[0].mxu0
  %2780 = vmatprep.mubr.bf16.mxu0 0
  %2781 = vmatmul.mubr.bf16.gmra.mrb[0].mxu0 %v2720
  %v2782 = vpop.f32.mrb[0].mxu0
  %v2783 = vadd.f32 %v2690, %v2782
  %v2784 = vpop.f32.mrb[0].mxu0
  %v2785 = vpop.f32.mrb[0].mxu0
  %v2786 = vadd.f32 %v2690, %v2785
  %v2787 = vpop.f32.mrb[0].mxu0
  %2788 = vmatprep.mubr.bf16.mxu0 0
  %2789 = vmatmul.mubr.bf16.gmra.mrb[0].mxu0 %v2723
  %v2790 = vpop.f32.mrb[0].mxu0
  %v2791 = vadd.f32 %v2690, %v2790
  %v2792 = vpop.f32.mrb[0].mxu0
  %v2793 = vpop.f32.mrb[0].mxu0
  %v2794 = vadd.f32 %v2690, %v2793
  %v2795 = vpop.f32.mrb[0].mxu0
  %2796 = vmatprep.mubr.bf16.mxu0 0
  %2797 = vmatmul.mubr.bf16.gmra.mrb[0].mxu0 %v2726
  %v2798 = vpop.f32.mrb[0].mxu0
  %v2799 = vadd.f32 %v2690, %v2798
  %v2800 = vpop.f32.mrb[0].mxu0
  %v2801 = vpop.f32.mrb[0].mxu0
  %v2802 = vadd.f32 %v2690, %v2801
  %v2803 = vpop.f32.mrb[0].mxu0
  %2804 = vmatprep.mubr.bf16.mxu0 0
  %2805 = vmatmul.mubr.bf16.gmra.mrb[0].mxu0 %v2729
  %v2806 = vpop.f32.mrb[0].mxu0
  %v2807 = vadd.f32 %v2690, %v2806
  %v2808 = vpop.f32.mrb[0].mxu0
  %v2809 = vpop.f32.mrb[0].mxu0
  %v2810 = vadd.f32 %v2690, %v2809
  %v2811 = vpop.f32.mrb[0].mxu0
  %2812 = vmatprep.mubr.bf16.mxu0 0
  %2813 = vmatmul.mubr.bf16.gmra.mrb[0].mxu0 %v2732
  %v2814 = vpop.f32.mrb[0].mxu0
  %v2815 = vadd.f32 %v2690, %v2814
  %v2816 = vpop.f32.mrb[0].mxu0
  %v2817 = vpop.f32.mrb[0].mxu0
  %v2818 = vadd.f32 %v2690, %v2817
  %v2819 = vpop.f32.mrb[0].mxu0
  %2820 = vmatprep.mubr.bf16.mxu0 0
  %2821 = vmatmul.mubr.bf16.gmra.mrb[0].mxu0 %v2735
  %v2822 = vpop.f32.mrb[0].mxu0
  %v2823 = vadd.f32 %v2690, %v2822
  %v2824 = vpop.f32.mrb[0].mxu0
  %v2825 = vpop.f32.mrb[0].mxu0
  %v2826 = vadd.f32 %v2690, %v2825
  %v2827 = vpop.f32.mrb[0].mxu0
  %2828 = vmatprep.mubr.bf16.mxu0 0
  %2829 = vmatmul.mubr.bf16.gmra.mrb[0].mxu0 %v2738
  %v2830 = vpop.f32.mrb[0].mxu0
  %v2831 = vadd.f32 %v2690, %v2830
  %v2832 = vpop.f32.mrb[0].mxu0
  %v2833 = vpop.f32.mrb[0].mxu0
  %v2834 = vadd.f32 %v2690, %v2833
  %v2835 = vpop.f32.mrb[0].mxu0
  %2836 = vdwg.mxu0
  %v2837 = vadd.f32 %v2453, %v2775
  %v2838 = vadd.f32 %v2454, %v2778
  %v2839 = vadd.f32 %v2455, %v2783
  %v2840 = vadd.f32 %v2456, %v2786
  %v2841 = vadd.f32 %v2457, %v2791
  %v2842 = vadd.f32 %v2458, %v2794
  %v2843 = vadd.f32 %v2459, %v2799
  %v2844 = vadd.f32 %v2460, %v2802
  %v2845 = vadd.f32 %v2461, %v2807
  %v2846 = vadd.f32 %v2462, %v2810
  %v2847 = vadd.f32 %v2463, %v2815
  %v2848 = vadd.f32 %v2464, %v2818
  %v2849 = vadd.f32 %v2465, %v2823
  %v2850 = vadd.f32 %v2466, %v2826
  %v2851 = vadd.f32 %v2467, %v2831
  %v2852 = vadd.f32 %v2468, %v2834
  %v2853 = vmax.f32 %v2837, 0.0
  %v2854 = vmax.f32 %v2838, 0.0
  %v2855 = vmax.f32 %v2839, 0.0
  %v2856 = vmax.f32 %v2840, 0.0
  %v2857 = vmax.f32 %v2841, 0.0
  %v2858 = vmax.f32 %v2842, 0.0
  %v2859 = vmax.f32 %v2843, 0.0
  %v2860 = vmax.f32 %v2844, 0.0
  %v2861 = vmax.f32 %v2845, 0.0
  %v2862 = vmax.f32 %v2846, 0.0
  %v2863 = vmax.f32 %v2847, 0.0
  %v2864 = vmax.f32 %v2848, 0.0
  %v2865 = vmax.f32 %v2849, 0.0
  %v2866 = vmax.f32 %v2850, 0.0
  %v2867 = vmax.f32 %v2851, 0.0
  %v2868 = vmax.f32 %v2852, 0.0
  %v2869 = vpack.c.bf16 %v2854, %v2853
  %v2870 = vpack.c.bf16 %v2856, %v2855
  %v2871 = vpack.c.bf16 %v2858, %v2857
  %v2872 = vpack.c.bf16 %v2860, %v2859
  %v2873 = vpack.c.bf16 %v2862, %v2861
  %v2874 = vpack.c.bf16 %v2864, %v2863
  %v2875 = vpack.c.bf16 %v2866, %v2865
  %v2876 = vpack.c.bf16 %v2868, %v2867
  %v2877 = vld [vmem:[%s16] sm:$0xf]
  %v2878 = vld [vmem:[%s16 + $0x4] sm:$0xf]
  %v2879 = vld [vmem:[%s16 + $0x8] sm:$0xf]
  %v2880 = vld [vmem:[%s16 + $0xc] sm:$0xf]
  %v2881 = vld [vmem:[%s16 + $0x10] sm:$0xf]
  %v2882 = vld [vmem:[%s16 + $0x14] sm:$0xf]
  %v2883 = vld [vmem:[%s16 + $0x18] sm:$0xf]
  %v2884 = vld [vmem:[%s16 + $0x1c] sm:$0xf]
  %v2885 = vld [vmem:[%s17] sm:$0x1]
  %v2887 = vlaneseq
  %v2888 = vshrl.u32 %v2887, 7
  %v2889 = vsub.s32 0, %v2888
  %v2890 = vrot.slane %v2885, %v2889
  %v2900 = vunpack.c.l.b16 %v2877
  %v2901 = vunpack.c.l.b16 %v2878
  %v2902 = vunpack.c.l.b16 %v2879
  %v2903 = vunpack.c.l.b16 %v2880
  %v2904 = vunpack.c.l.b16 %v2881
  %v2905 = vunpack.c.l.b16 %v2882
  %v2906 = vunpack.c.l.b16 %v2883
  %v2907 = vunpack.c.l.b16 %v2884
  %v2908 = vpack.c.b16 %v2901, %v2900
  %v2909 = vpack.c.b16 %v2903, %v2902
  %v2910 = vpack.c.b16 %v2905, %v2904
  %v2911 = vpack.c.b16 %v2907, %v2906
  %v2917 = vsel %vm1093, %v2869, 0
  %v2920 = vsel %vm1093, %v2870, 0
  %v2923 = vsel %vm1093, %v2871, 0
  %v2926 = vsel %vm1093, %v2872, 0
  %v2929 = vsel %vm1093, %v2873, 0
  %v2932 = vsel %vm1093, %v2874, 0
  %v2935 = vsel %vm1093, %v2875, 0
  %v2938 = vsel %vm1093, %v2876, 0
  %2940 = vmatprep.subr.bf16.mxu0 0
  %2941 = vmatpush1.bf16.msra.mxu0 %v2908
  %2942 = vmatprep.subr.bf16.mxu0 0
  %2943 = vmatpush1.bf16.msra.mxu0 %v2909
  %2944 = vmatprep.subr.bf16.mxu0 0
  %2945 = vmatpush1.bf16.msra.mxu0 %v2910
  %2946 = vmatprep.subr.bf16.mxu0 0
  %2947 = vmatpush1.bf16.msra.mxu0 %v2911
  %2948 = vmatprep.subr.bf16.mxu0 0
  %2949 = vmatpush1.bf16.msra.mxu0 0
  %2950 = vmatprep.subr.bf16.mxu0 0
  %2951 = vmatpush1.bf16.msra.mxu0 0
  %2952 = vmatprep.subr.bf16.mxu0 0
  %2953 = vmatpush1.bf16.msra.mxu0 0
  %2954 = vmatprep.subr.bf16.mxu0 0
  %2955 = vmatpush1.bf16.msra.mxu0 0
  %2956 = vmatprep.subr.bf16.mxu0 0
  %2957 = vmatpush1.bf16.msra.mxu0 0
  %2958 = vmatprep.subr.bf16.mxu0 0
  %2959 = vmatpush1.bf16.msra.mxu0 0
  %2960 = vmatprep.subr.bf16.mxu0 0
  %2961 = vmatpush1.bf16.msra.mxu0 0
  %2962 = vmatprep.subr.bf16.mxu0 0
  %2963 = vmatpush1.bf16.msra.mxu0 0
  %2964 = vmatprep.subr.bf16.mxu0 0
  %2965 = vmatpush1.bf16.msra.mxu0 0
  %2966 = vmatprep.subr.bf16.mxu0 0
  %2967 = vmatpush1.bf16.msra.mxu0 0
  %2968 = vmatprep.subr.bf16.mxu0 0
  %2969 = vmatpush1.bf16.msra.mxu0 0
  %2970 = vmatprep.subr.bf16.mxu0 0
  %2971 = vmatpush1.bf16.msra.mxu0 0
  %2972 = vmatprep.mubr.bf16.mxu0 0
  %2973 = vmatmul.mubr.bf16.gmra.mrb[0].mxu0 %v2917
  %v2974 = vpop.f32.mrb[0].mxu0
  %v2975 = vadd.f32 %v2890, %v2974
  %v2976 = vpop.f32.mrb[0].mxu0
  %v2977 = vpop.f32.mrb[0].mxu0
  %v2978 = vadd.f32 %v2890, %v2977
  %v2979 = vpop.f32.mrb[0].mxu0
  %2980 = vmatprep.mubr.bf16.mxu0 0
  %2981 = vmatmul.mubr.bf16.gmra.mrb[0].mxu0 %v2920
  %v2982 = vpop.f32.mrb[0].mxu0
  %v2983 = vadd.f32 %v2890, %v2982
  %v2984 = vpop.f32.mrb[0].mxu0
  %v2985 = vpop.f32.mrb[0].mxu0
  %v2986 = vadd.f32 %v2890, %v2985
  %v2987 = vpop.f32.mrb[0].mxu0
  %2988 = vmatprep.mubr.bf16.mxu0 0
  %2989 = vmatmul.mubr.bf16.gmra.mrb[0].mxu0 %v2923
  %v2990 = vpop.f32.mrb[0].mxu0
  %v2991 = vadd.f32 %v2890, %v2990
  %v2992 = vpop.f32.mrb[0].mxu0
  %v2993 = vpop.f32.mrb[0].mxu0
  %v2994 = vadd.f32 %v2890, %v2993
  %v2995 = vpop.f32.mrb[0].mxu0
  %2996 = vmatprep.mubr.bf16.mxu0 0
  %2997 = vmatmul.mubr.bf16.gmra.mrb[0].mxu0 %v2926
  %v2998 = vpop.f32.mrb[0].mxu0
  %v2999 = vadd.f32 %v2890, %v2998
  %v3000 = vpop.f32.mrb[0].mxu0
  %v3001 = vpop.f32.mrb[0].mxu0
  %v3002 = vadd.f32 %v2890, %v3001
  %v3003 = vpop.f32.mrb[0].mxu0
  %3004 = vmatprep.mubr.bf16.mxu0 0
  %3005 = vmatmul.mubr.bf16.gmra.mrb[0].mxu0 %v2929
  %v3006 = vpop.f32.mrb[0].mxu0
  %v3007 = vadd.f32 %v2890, %v3006
  %v3008 = vpop.f32.mrb[0].mxu0
  %v3009 = vpop.f32.mrb[0].mxu0
  %v3010 = vadd.f32 %v2890, %v3009
  %v3011 = vpop.f32.mrb[0].mxu0
  %3012 = vmatprep.mubr.bf16.mxu0 0
  %3013 = vmatmul.mubr.bf16.gmra.mrb[0].mxu0 %v2932
  %v3014 = vpop.f32.mrb[0].mxu0
  %v3015 = vadd.f32 %v2890, %v3014
  %v3016 = vpop.f32.mrb[0].mxu0
  %v3017 = vpop.f32.mrb[0].mxu0
  %v3018 = vadd.f32 %v2890, %v3017
  %v3019 = vpop.f32.mrb[0].mxu0
  %3020 = vmatprep.mubr.bf16.mxu0 0
  %3021 = vmatmul.mubr.bf16.gmra.mrb[0].mxu0 %v2935
  %v3022 = vpop.f32.mrb[0].mxu0
  %v3023 = vadd.f32 %v2890, %v3022
  %v3024 = vpop.f32.mrb[0].mxu0
  %v3025 = vpop.f32.mrb[0].mxu0
  %v3026 = vadd.f32 %v2890, %v3025
  %v3027 = vpop.f32.mrb[0].mxu0
  %3028 = vmatprep.mubr.bf16.mxu0 0
  %3029 = vmatmul.mubr.bf16.gmra.mrb[0].mxu0 %v2938
  %v3030 = vpop.f32.mrb[0].mxu0
  %v3031 = vadd.f32 %v2890, %v3030
  %v3032 = vpop.f32.mrb[0].mxu0
  %v3033 = vpop.f32.mrb[0].mxu0
  %v3034 = vadd.f32 %v2890, %v3033
  %v3035 = vpop.f32.mrb[0].mxu0
  %3036 = vdwg.mxu0
  %v3037 = vld [vmem:[%s18] sm:$0x1]
  %v3038 = vlaneseq
  %v3039 = vshrl.u32 %v3038, 7
  %v3040 = vsub.s32 0, %v3039
  %v3041 = vrot.slane %v3037, %v3040
  %vm3042 = vcmp.gt.s32.totalorder %v3041, 0
  %v3043 = vxor.u32 %v2975, 2147483648
  %v3044 = vxor.u32 %v2978, 2147483648
  %v3045 = vxor.u32 %v2983, 2147483648
  %v3046 = vxor.u32 %v2986, 2147483648
  %v3047 = vxor.u32 %v2991, 2147483648
  %v3048 = vxor.u32 %v2994, 2147483648
  %v3049 = vxor.u32 %v2999, 2147483648
  %v3050 = vxor.u32 %v3002, 2147483648
  %v3051 = vxor.u32 %v3007, 2147483648
  %v3052 = vxor.u32 %v3010, 2147483648
  %v3053 = vxor.u32 %v3015, 2147483648
  %v3054 = vxor.u32 %v3018, 2147483648
  %v3055 = vxor.u32 %v3023, 2147483648
  %v3056 = vxor.u32 %v3026, 2147483648
  %v3057 = vxor.u32 %v3031, 2147483648
  %v3058 = vxor.u32 %v3034, 2147483648
  %v3059 = vmul.f32 %v3043, 1.442695
  %v3060 = vpow.pop %v3059
  %v3061 = vmul.f32 %v3044, 1.442695
  %v3062 = vpow.pop %v3061
  %v3063 = vmul.f32 %v3045, 1.442695
  %v3064 = vpow.pop %v3063
  %v3065 = vmul.f32 %v3046, 1.442695
  %v3066 = vpow.pop %v3065
  %v3067 = vmul.f32 %v3047, 1.442695
  %v3068 = vpow.pop %v3067
  %v3069 = vmul.f32 %v3048, 1.442695
  %v3070 = vpow.pop %v3069
  %v3071 = vmul.f32 %v3049, 1.442695
  %v3072 = vpow.pop %v3071
  %v3073 = vmul.f32 %v3050, 1.442695
  %v3074 = vpow.pop %v3073
  %v3075 = vmul.f32 %v3051, 1.442695
  %v3076 = vpow.pop %v3075
  %v3077 = vmul.f32 %v3052, 1.442695
  %v3078 = vpow.pop %v3077
  %v3079 = vmul.f32 %v3053, 1.442695
  %v3080 = vpow.pop %v3079
  %v3081 = vmul.f32 %v3054, 1.442695
  %v3082 = vpow.pop %v3081
  %v3083 = vmul.f32 %v3055, 1.442695
  %v3084 = vpow.pop %v3083
  %v3085 = vmul.f32 %v3056, 1.442695
  %v3086 = vpow.pop %v3085
  %v3087 = vmul.f32 %v3057, 1.442695
  %v3088 = vpow.pop %v3087
  %v3089 = vmul.f32 %v3058, 1.442695
  %v3090 = vpow.pop %v3089
  %v3091 = vadd.f32 %v3060, 1.0
  %v3092 = vadd.f32 %v3062, 1.0
  %v3093 = vadd.f32 %v3064, 1.0
  %v3094 = vadd.f32 %v3066, 1.0
  %v3095 = vadd.f32 %v3068, 1.0
  %v3096 = vadd.f32 %v3070, 1.0
  %v3097 = vadd.f32 %v3072, 1.0
  %v3098 = vadd.f32 %v3074, 1.0
  %v3099 = vadd.f32 %v3076, 1.0
  %v3100 = vadd.f32 %v3078, 1.0
  %v3101 = vadd.f32 %v3080, 1.0
  %v3102 = vadd.f32 %v3082, 1.0
  %v3103 = vadd.f32 %v3084, 1.0
  %v3104 = vadd.f32 %v3086, 1.0
  %v3105 = vadd.f32 %v3088, 1.0
  %v3106 = vadd.f32 %v3090, 1.0
  %v3107 = vrcp.pop %v3091
  %v3108 = vmul.f32 1.0, %v3107
  %v3109 = vrcp.pop %v3092
  %v3110 = vmul.f32 1.0, %v3109
  %v3111 = vrcp.pop %v3093
  %v3112 = vmul.f32 1.0, %v3111
  %v3113 = vrcp.pop %v3094
  %v3114 = vmul.f32 1.0, %v3113
  %v3115 = vrcp.pop %v3095
  %v3116 = vmul.f32 1.0, %v3115
  %v3117 = vrcp.pop %v3096
  %v3118 = vmul.f32 1.0, %v3117
  %v3119 = vrcp.pop %v3097
  %v3120 = vmul.f32 1.0, %v3119
  %v3121 = vrcp.pop %v3098
  %v3122 = vmul.f32 1.0, %v3121
  %v3123 = vrcp.pop %v3099
  %v3124 = vmul.f32 1.0, %v3123
  %v3125 = vrcp.pop %v3100
  %v3126 = vmul.f32 1.0, %v3125
  %v3127 = vrcp.pop %v3101
  %v3128 = vmul.f32 1.0, %v3127
  %v3129 = vrcp.pop %v3102
  %v3130 = vmul.f32 1.0, %v3129
  %v3131 = vrcp.pop %v3103
  %v3132 = vmul.f32 1.0, %v3131
  %v3133 = vrcp.pop %v3104
  %v3134 = vmul.f32 1.0, %v3133
  %v3135 = vrcp.pop %v3105
  %v3136 = vmul.f32 1.0, %v3135
  %v3137 = vrcp.pop %v3106
  %v3138 = vmul.f32 1.0, %v3137
  %v3139 = vmax.f32 %v2975, 0.0
  %v3140 = vmax.f32 %v2978, 0.0
  %v3141 = vmax.f32 %v2983, 0.0
  %v3142 = vmax.f32 %v2986, 0.0
  %v3143 = vmax.f32 %v2991, 0.0
  %v3144 = vmax.f32 %v2994, 0.0
  %v3145 = vmax.f32 %v2999, 0.0
  %v3146 = vmax.f32 %v3002, 0.0
  %v3147 = vmax.f32 %v3007, 0.0
  %v3148 = vmax.f32 %v3010, 0.0
  %v3149 = vmax.f32 %v3015, 0.0
  %v3150 = vmax.f32 %v3018, 0.0
  %v3151 = vmax.f32 %v3023, 0.0
  %v3152 = vmax.f32 %v3026, 0.0
  %v3153 = vmax.f32 %v3031, 0.0
  %v3154 = vmax.f32 %v3034, 0.0
  %v3155 = vsel %vm3042, %v3108, %v3139
  %v3156 = vsel %vm3042, %v3110, %v3140
  %v3157 = vsel %vm3042, %v3112, %v3141
  %v3158 = vsel %vm3042, %v3114, %v3142
  %v3159 = vsel %vm3042, %v3116, %v3143
  %v3160 = vsel %vm3042, %v3118, %v3144
  %v3161 = vsel %vm3042, %v3120, %v3145
  %v3162 = vsel %vm3042, %v3122, %v3146
  %v3163 = vsel %vm3042, %v3124, %v3147
  %v3164 = vsel %vm3042, %v3126, %v3148
  %v3165 = vsel %vm3042, %v3128, %v3149
  %v3166 = vsel %vm3042, %v3130, %v3150
  %v3167 = vsel %vm3042, %v3132, %v3151
  %v3168 = vsel %vm3042, %v3134, %v3152
  %v3169 = vsel %vm3042, %v3136, %v3153
  %v3170 = vsel %vm3042, %v3138, %v3154
  %3171 = vst [vmem:[%s19] sm:$0xff] %v3155
  %3172 = vst [vmem:[%s19 + $0x8] sm:$0xff] %v3156
  %3173 = vst [vmem:[%s19 + $0x10] sm:$0xff] %v3157
  %3174 = vst [vmem:[%s19 + $0x18] sm:$0xff] %v3158
  %3175 = vst [vmem:[%s19 + $0x20] sm:$0xff] %v3159
  %3176 = vst [vmem:[%s19 + $0x28] sm:$0xff] %v3160
  %3177 = vst [vmem:[%s19 + $0x30] sm:$0xff] %v3161
  %3178 = vst [vmem:[%s19 + $0x38] sm:$0xff] %v3162
  %3179 = vst [vmem:[%s19 + $0x40] sm:$0xff] %v3163
  %3180 = vst [vmem:[%s19 + $0x48] sm:$0xff] %v3164
  %3181 = vst [vmem:[%s19 + $0x50] sm:$0xff] %v3165
  %3182 = vst [vmem:[%s19 + $0x58] sm:$0xff] %v3166
  %3183 = vst [vmem:[%s19 + $0x60] sm:$0xff] %v3167
  %3184 = vst [vmem:[%s19 + $0x68] sm:$0xff] %v3168
  %3185 = vst [vmem:[%s19 + $0x70] sm:$0xff] %v3169
  %3186 = vst [vmem:[%s19 + $0x78] sm:$0xff] %v3170
  // Predicated region
  $region78: #{_lambda_.1} parent=0 // pred_check
    _
  $region79: #{_lambda_.1} parent=0 // pred_check_branch
    %3188 = sbr.rel (0) target = $region81
  $region80: #{_lambda_.1} parent=0 // pred_region
    _
  $region81: #{_lambda_.1} parent=0 // pred_fallthru
    _
  // Predicated region
  $region82: #{_lambda_.1} parent=0 // pred_check
    _
  $region83: #{_lambda_.1} parent=0 // pred_check_branch
    %3190 = sbr.rel (0) target = $region85
  $region84: #{_lambda_.1} parent=0 // pred_region
    _
  $region85: #{_lambda_.1} parent=0 // pred_fallthru
    _

</llo_original>
